<compile_context>
chip_gen: v7x
topology: tpu7x:2x2x1
jax: 0.10.0
libtpu: 0.0.40
codegen_flags: <defaults>
</compile_context>

<pallas_src>
import jax
import jax.numpy as jnp
from jax.experimental import pallas as pl
from jax.experimental.pallas import tpu as pltpu


def _vae_kernel(
    x_ref,
    we_ref, be_ref, wzh_ref, bzh_ref, eps_z_ref,
    wd_ref, bd_ref, wxh_ref, bxh_ref, eps_x_ref,
    xrec_ref, zpack_ref, xpack_ref,
):
    z_dim = eps_z_ref.shape[1]
    x_dim = eps_x_ref.shape[1]

    x = x_ref[...]                                            # (TB, x_dim) bf16

    # ----- encoder trunk: bf16 MXU inputs, f32 accumulate, f32 elementwise -----
    h = jnp.tanh(
        jnp.dot(x, we_ref[...], preferred_element_type=jnp.float32)
        + be_ref[...]
    )

    # ----- fused encoder heads: [z_mu | z_logvar] in one N=2*z_dim matmul -----
    zh = jnp.dot(h.astype(jnp.bfloat16), wzh_ref[...],
                 preferred_element_type=jnp.float32) + bzh_ref[...]
    z_mu = zh[:, :z_dim]
    z_std = jnp.exp(0.5 * zh[:, z_dim:])          # sqrt(exp(lv)) == exp(lv/2)

    # ----- sample latent: z = mu + std * eps_z (eps broadcast over batch) -----
    z = z_mu + z_std * eps_z_ref[...]

    # ----- decoder trunk -----
    hd = jnp.tanh(
        jnp.dot(z.astype(jnp.bfloat16), wd_ref[...],
                preferred_element_type=jnp.float32) + bd_ref[...]
    )

    # ----- fused decoder heads: [x_mu_lin | x_logvar] in one N=2*x_dim matmul -----
    xh = jnp.dot(hd.astype(jnp.bfloat16), wxh_ref[...],
                 preferred_element_type=jnp.float32) + bxh_ref[...]
    x_mu = jax.nn.sigmoid(xh[:, :x_dim])
    x_std = jnp.exp(0.5 * xh[:, x_dim:])

    # ----- sample reconstruction -----
    xrec_ref[...] = x_mu + x_std * eps_x_ref[...]

    # Direct slice stores (no concatenate slab). z_dim / x_dim are 128-multiples
    # in the test config, so each store is a full unmasked 128-lane vst.
    zpack_ref[:, :z_dim] = z_mu
    zpack_ref[:, z_dim:] = z_std * z_std           # z_sigma_sq
    xpack_ref[:, :x_dim] = x_mu
    xpack_ref[:, x_dim:] = x_std * x_std           # x_sigma_sq


def _pick_tile(batch, tb):
    """Largest multiple-of-8 divisor of `batch` that is <= tb."""
    tb = max(8, min(tb, batch))
    tb -= tb % 8
    while tb >= 8:
        if batch % tb == 0:
            return tb
        tb -= 8
    # TODO(synk): batch not a multiple of 8 -> pad the batch instead of using a
    # single full-batch tile.
    return batch


def _vmem_bytes(tb, x_dim, z_dim, hidden):
    """Rough per-step VMEM footprint (streamed tiles double-buffered)."""
    bf16, f32 = 2, 4
    streamed = tb * x_dim * bf16                       # x tile (bf16)
    streamed += tb * (x_dim + 2 * z_dim + 2 * x_dim) * f32   # 3 output tiles
    streamed *= 2                                      # double-buffered streams
    resident = (x_dim * hidden + hidden * 2 * z_dim
                + z_dim * hidden + hidden * 2 * x_dim) * bf16
    resident += (2 * hidden + 3 * z_dim + 3 * x_dim) * f32   # biases + eps
    working = tb * (2 * hidden + 2 * z_dim + 2 * x_dim) * f32  # live intermediates
    return streamed + resident + working


def vae_forward(x, params, eps_z, eps_x, *, tb=256):
    """Fused VAE forward. Returns (x_, z_mu, z_sigma_sq, x_mu, x_sigma_sq)."""
    B, x_dim = x.shape
    hidden = params["we"].shape[1]
    z_dim = params["wzh"].shape[1] // 2

    # Per-chip VMEM capacity: v5e/v6e 128 MiB, v7x 64 MiB.
    try:
        vmem_cap = int(pltpu.get_tpu_info().vmem_capacity_bytes)
    except Exception:
        vmem_cap = 64 * 1024 * 1024        # smallest across supported chips

    # Clamp the tile so the double-buffered footprint fits comfortably in VMEM,
    # then snap to a multiple-of-8 divisor of B.
    budget = int(0.6 * vmem_cap)
    while tb > 8 and _vmem_bytes(tb, x_dim, z_dim, hidden) > budget:
        tb //= 2
    tb = _pick_tile(B, tb)

    vmem_limit = int(min(0.9 * vmem_cap,
                         max(32 * 1024 * 1024,
                             2 * _vmem_bytes(tb, x_dim, z_dim, hidden))))

    x_bf16 = x.astype(jnp.bfloat16)        # halve input DMA bytes per tile
    inputs = (
        x_bf16,
        params["we"], params["be"], params["wzh"], params["bzh"], eps_z,
        params["wd"], params["bd"], params["wxh"], params["bxh"], eps_x,
    )

    out_shape = (
        jax.ShapeDtypeStruct((B, x_dim), jnp.float32),        # x_
        jax.ShapeDtypeStruct((B, 2 * z_dim), jnp.float32),    # [z_mu | z_sigma_sq]
        jax.ShapeDtypeStruct((B, 2 * x_dim), jnp.float32),    # [x_mu | x_sigma_sq]
    )

    def build(single_buffer_residents):
        def tiled(width):                   # batch-tiled arrays (x and outputs)
            return pl.BlockSpec((tb, width), lambda i: (i, 0))

        def resident(shape):                # weights / biases / eps: VMEM-resident
            n = len(shape)
            kwargs = {}
            if single_buffer_residents:
                # constant index_map -> no need to double-buffer
                kwargs["pipeline_mode"] = pl.Buffered(1)
            return pl.BlockSpec(shape, lambda i, _n=n: (0,) * _n, **kwargs)

        in_specs = [tiled(x_dim)] + [resident(a.shape) for a in inputs[1:]]
        out_specs = (tiled(x_dim), tiled(2 * z_dim), tiled(2 * x_dim))

        return pl.pallas_call(
            _vae_kernel,
            out_shape=out_shape,
            grid=(B // tb,),
            in_specs=in_specs,
            out_specs=out_specs,
            compiler_params=pltpu.CompilerParams(
                dimension_semantics=("parallel",),   # megacore sharding on v7x
                vmem_limit_bytes=vmem_limit,
            ),
        )

    try:
        x_rec, z_pack, x_pack = build(True)(*inputs)
    except Exception:
        # Fallback if single-buffered pipeline_mode isn't supported by this
        # jax version; identical numerics, just default double-buffering.
        x_rec, z_pack, x_pack = build(False)(*inputs)

    z_mu, z_sigma_sq = z_pack[:, :z_dim], z_pack[:, z_dim:]
    x_mu, x_sigma_sq = x_pack[:, :x_dim], x_pack[:, x_dim:]
    return x_rec, z_mu, z_sigma_sq, x_mu, x_sigma_sq


def init_params(key, x_dim, hidden, z_dim):
    ks = jax.random.split(key, 12)
    wscale, bscale = 0.1, 0.01

    def rnd(k, shape, s):
        return (s * jax.random.normal(k, shape)).astype(jnp.float32)

    wmu = rnd(ks[1], (hidden, z_dim), wscale)
    wlv = rnd(ks[2], (hidden, z_dim), wscale)
    wxmu = rnd(ks[4], (hidden, x_dim), wscale)
    wxlv = rnd(ks[5], (hidden, x_dim), wscale)

    return {
        # encoder (weights stored bf16 for the MXU path; biases stay f32)
        "we": rnd(ks[0], (x_dim, hidden), wscale).astype(jnp.bfloat16),
        "be": rnd(ks[6], (1, hidden), bscale),
        "wzh": jnp.concatenate([wmu, wlv], axis=1).astype(jnp.bfloat16),
        "bzh": jnp.concatenate(
            [rnd(ks[7], (1, z_dim), bscale), rnd(ks[8], (1, z_dim), bscale)],
            axis=1),
        # decoder
        "wd": rnd(ks[3], (z_dim, hidden), wscale).astype(jnp.bfloat16),
        "bd": rnd(ks[9], (1, hidden), bscale),
        "wxh": jnp.concatenate([wxmu, wxlv], axis=1).astype(jnp.bfloat16),
        "bxh": jnp.concatenate(
            [rnd(ks[10], (1, x_dim), bscale), rnd(ks[11], (1, x_dim), bscale)],
            axis=1),
    }


def reference_forward(x, params, eps_z, eps_x):
    """Pure-JAX reference mirroring the kernel's numerics (bf16 matmul inputs,
    f32 accumulation / elementwise)."""
    def mm(a, w_bf16):
        return jnp.dot(a.astype(jnp.bfloat16), w_bf16,
                       preferred_element_type=jnp.float32)

    z_dim = params["wzh"].shape[1] // 2
    x_dim = params["wxh"].shape[1] // 2

    h = jnp.tanh(mm(x, params["we"]) + params["be"])
    zh = mm(h, params["wzh"]) + params["bzh"]
    z_mu = zh[:, :z_dim]
    z_std = jnp.exp(0.5 * zh[:, z_dim:])
    z_sigma_sq = z_std * z_std
    z = z_mu + z_std * eps_z

    hd = jnp.tanh(mm(z, params["wd"]) + params["bd"])
    xh = mm(hd, params["wxh"]) + params["bxh"]
    x_mu = jax.nn.sigmoid(xh[:, :x_dim])
    x_std = jnp.exp(0.5 * xh[:, x_dim:])
    x_sigma_sq = x_std * x_std
    x_rec = x_mu + x_std * eps_x
    return x_rec, z_mu, z_sigma_sq, x_mu, x_sigma_sq


if __name__ == "__main__":
    # Feature dims padded to 128 (lane-dense); B=512 with tb=128 exercises a
    # 4-step batch-tiled grid (>=2 steps per TC on v7x).
    B, X_DIM, HIDDEN, Z_DIM = 512, 128, 128, 128

    key = jax.random.PRNGKey(0)
    k_x, k_p, k_ez, k_ex = jax.random.split(key, 4)

    x = jax.random.normal(k_x, (B, X_DIM), dtype=jnp.float32)
    params = init_params(k_p, X_DIM, HIDDEN, Z_DIM)

    # epsilon matches torch.randn(z_dim) / torch.randn(x_dim): one row
    # broadcast across the batch (kept (1, dim) for 2-D TPU layout).
    # TODO(synk): epsilon is sampled host-side and passed in (deterministic),
    # rather than with the in-kernel PRNG, to mirror torch.randn semantics.
    eps_z = jax.random.normal(k_ez, (1, Z_DIM), dtype=jnp.float32)
    eps_x = jax.random.normal(k_ex, (1, X_DIM), dtype=jnp.float32)

    outs = vae_forward(x, params, eps_z, eps_x, tb=128)
    outs = jax.block_until_ready(outs)

    refs = reference_forward(x, params, eps_z, eps_x)
    for got, want in zip(outs, refs):
        assert got.shape == want.shape and got.dtype == want.dtype
        assert jnp.allclose(got, want, atol=1e-2, rtol=1e-2), "mismatch vs reference"

    print("KERNEL_OK")
</pallas_src>

<mosaic_0001>
module attributes {stable_mosaic.version = 11 : i64} {
  func.func @_vae_kernel(%arg0: i32, %arg1: memref<128x128xbf16, #tpu.memory_space<vmem>>, %arg2: memref<128x128xbf16, #tpu.memory_space<vmem>>, %arg3: memref<1x128xf32, #tpu.memory_space<vmem>>, %arg4: memref<128x256xbf16, #tpu.memory_space<vmem>>, %arg5: memref<1x256xf32, #tpu.memory_space<vmem>>, %arg6: memref<1x128xf32, #tpu.memory_space<vmem>>, %arg7: memref<128x128xbf16, #tpu.memory_space<vmem>>, %arg8: memref<1x128xf32, #tpu.memory_space<vmem>>, %arg9: memref<128x256xbf16, #tpu.memory_space<vmem>>, %arg10: memref<1x256xf32, #tpu.memory_space<vmem>>, %arg11: memref<1x128xf32, #tpu.memory_space<vmem>>, %arg12: memref<128x128xf32, #tpu.memory_space<vmem>>, %arg13: memref<128x256xf32, #tpu.memory_space<vmem>>, %arg14: memref<128x256xf32, #tpu.memory_space<vmem>>) attributes {dimension_semantics = [#tpu.dimension_semantics<parallel>], iteration_bounds = array<i64: 4>, scalar_prefetch = 0 : i64, scratch_operands = 0 : i64, tpu.core_type = #tpu.core_type<tc>, window_params = [{transform_indices = @transform_0, window_bounds = array<i64: 128, 128>}, {pipeline_mode = #tpu.pipeline_mode<synchronous>, transform_indices = @transform_1, window_bounds = array<i64: 128, 128>}, {pipeline_mode = #tpu.pipeline_mode<synchronous>, transform_indices = @transform_2, window_bounds = array<i64: 1, 128>}, {pipeline_mode = #tpu.pipeline_mode<synchronous>, transform_indices = @transform_3, window_bounds = array<i64: 128, 256>}, {pipeline_mode = #tpu.pipeline_mode<synchronous>, transform_indices = @transform_4, window_bounds = array<i64: 1, 256>}, {pipeline_mode = #tpu.pipeline_mode<synchronous>, transform_indices = @transform_5, window_bounds = array<i64: 1, 128>}, {pipeline_mode = #tpu.pipeline_mode<synchronous>, transform_indices = @transform_6, window_bounds = array<i64: 128, 128>}, {pipeline_mode = #tpu.pipeline_mode<synchronous>, transform_indices = @transform_7, window_bounds = array<i64: 1, 128>}, {pipeline_mode = #tpu.pipeline_mode<synchronous>, transform_indices = @transform_8, window_bounds = array<i64: 128, 256>}, {pipeline_mode = #tpu.pipeline_mode<synchronous>, transform_indices = @transform_9, window_bounds = array<i64: 1, 256>}, {pipeline_mode = #tpu.pipeline_mode<synchronous>, transform_indices = @transform_10, window_bounds = array<i64: 1, 128>}, {transform_indices = @transform_11, window_bounds = array<i64: 128, 128>}, {transform_indices = @transform_12, window_bounds = array<i64: 128, 256>}, {transform_indices = @transform_13, window_bounds = array<i64: 128, 256>}]} {
    %c0 = arith.constant 0 : index
    %c0_0 = arith.constant 0 : index
    %0 = vector.load %arg1[%c0, %c0_0] : memref<128x128xbf16, #tpu.memory_space<vmem>>, vector<128x128xbf16>
    %c0_1 = arith.constant 0 : index
    %c0_2 = arith.constant 0 : index
    %1 = vector.load %arg2[%c0_1, %c0_2] : memref<128x128xbf16, #tpu.memory_space<vmem>>, vector<128x128xbf16>
    %cst = arith.constant dense<0.000000e+00> : vector<128x128xf32>
    %2 = tpu.matmul %0, %1, %cst {dimension_numbers = #tpu.dot_dimension_numbers<[1], [0], [0], [1], [0, 0, 1, 1], [], []>} : vector<128x128xbf16>, vector<128x128xbf16>, vector<128x128xf32> -> vector<128x128xf32>
    %c0_3 = arith.constant 0 : index
    %c0_4 = arith.constant 0 : index
    %3 = vector.load %arg3[%c0_3, %c0_4] : memref<1x128xf32, #tpu.memory_space<vmem>>, vector<1x128xf32>
    %4 = vector.broadcast %3 : vector<1x128xf32> to vector<128x128xf32>
    %5 = arith.addf %2, %4 : vector<128x128xf32>
    %6 = math.tanh %5 : vector<128x128xf32>
    %7 = arith.truncf %6 : vector<128x128xf32> to vector<128x128xbf16>
    %c0_5 = arith.constant 0 : index
    %c0_6 = arith.constant 0 : index
    %8 = vector.load %arg4[%c0_5, %c0_6] : memref<128x256xbf16, #tpu.memory_space<vmem>>, vector<128x256xbf16>
    %cst_7 = arith.constant dense<0.000000e+00> : vector<128x256xf32>
    %9 = tpu.matmul %7, %8, %cst_7 {dimension_numbers = #tpu.dot_dimension_numbers<[1], [0], [0], [1], [0, 0, 1, 1], [], []>} : vector<128x128xbf16>, vector<128x256xbf16>, vector<128x256xf32> -> vector<128x256xf32>
    %c0_8 = arith.constant 0 : index
    %c0_9 = arith.constant 0 : index
    %10 = vector.load %arg5[%c0_8, %c0_9] : memref<1x256xf32, #tpu.memory_space<vmem>>, vector<1x256xf32>
    %11 = vector.broadcast %10 : vector<1x256xf32> to vector<128x256xf32>
    %12 = arith.addf %9, %11 : vector<128x256xf32>
    %13 = vector.extract_strided_slice %12 {offsets = [0, 0], sizes = [128, 128], strides = [1, 1]} : vector<128x256xf32> to vector<128x128xf32>
    %14 = vector.extract_strided_slice %12 {offsets = [0, 128], sizes = [128, 128], strides = [1, 1]} : vector<128x256xf32> to vector<128x128xf32>
    %cst_10 = arith.constant 5.000000e-01 : f32
    %15 = vector.broadcast %cst_10 : f32 to vector<128x128xf32>
    %16 = arith.mulf %15, %14 : vector<128x128xf32>
    %17 = math.exp %16 : vector<128x128xf32>
    %c0_11 = arith.constant 0 : index
    %c0_12 = arith.constant 0 : index
    %18 = vector.load %arg6[%c0_11, %c0_12] : memref<1x128xf32, #tpu.memory_space<vmem>>, vector<1x128xf32>
    %19 = vector.broadcast %18 : vector<1x128xf32> to vector<128x128xf32>
    %20 = arith.mulf %17, %19 : vector<128x128xf32>
    %21 = arith.addf %13, %20 : vector<128x128xf32>
    %22 = arith.truncf %21 : vector<128x128xf32> to vector<128x128xbf16>
    %c0_13 = arith.constant 0 : index
    %c0_14 = arith.constant 0 : index
    %23 = vector.load %arg7[%c0_13, %c0_14] : memref<128x128xbf16, #tpu.memory_space<vmem>>, vector<128x128xbf16>
    %cst_15 = arith.constant dense<0.000000e+00> : vector<128x128xf32>
    %24 = tpu.matmul %22, %23, %cst_15 {dimension_numbers = #tpu.dot_dimension_numbers<[1], [0], [0], [1], [0, 0, 1, 1], [], []>} : vector<128x128xbf16>, vector<128x128xbf16>, vector<128x128xf32> -> vector<128x128xf32>
    %c0_16 = arith.constant 0 : index
    %c0_17 = arith.constant 0 : index
    %25 = vector.load %arg8[%c0_16, %c0_17] : memref<1x128xf32, #tpu.memory_space<vmem>>, vector<1x128xf32>
    %26 = vector.broadcast %25 : vector<1x128xf32> to vector<128x128xf32>
    %27 = arith.addf %24, %26 : vector<128x128xf32>
    %28 = math.tanh %27 : vector<128x128xf32>
    %29 = arith.truncf %28 : vector<128x128xf32> to vector<128x128xbf16>
    %c0_18 = arith.constant 0 : index
    %c0_19 = arith.constant 0 : index
    %30 = vector.load %arg9[%c0_18, %c0_19] : memref<128x256xbf16, #tpu.memory_space<vmem>>, vector<128x256xbf16>
    %cst_20 = arith.constant dense<0.000000e+00> : vector<128x256xf32>
    %31 = tpu.matmul %29, %30, %cst_20 {dimension_numbers = #tpu.dot_dimension_numbers<[1], [0], [0], [1], [0, 0, 1, 1], [], []>} : vector<128x128xbf16>, vector<128x256xbf16>, vector<128x256xf32> -> vector<128x256xf32>
    %c0_21 = arith.constant 0 : index
    %c0_22 = arith.constant 0 : index
    %32 = vector.load %arg10[%c0_21, %c0_22] : memref<1x256xf32, #tpu.memory_space<vmem>>, vector<1x256xf32>
    %33 = vector.broadcast %32 : vector<1x256xf32> to vector<128x256xf32>
    %34 = arith.addf %31, %33 : vector<128x256xf32>
    %35 = vector.extract_strided_slice %34 {offsets = [0, 0], sizes = [128, 128], strides = [1, 1]} : vector<128x256xf32> to vector<128x128xf32>
    %36 = arith.negf %35 : vector<128x128xf32>
    %37 = math.exp %36 : vector<128x128xf32>
    %cst_23 = arith.constant 1.000000e+00 : f32
    %38 = vector.broadcast %cst_23 : f32 to vector<128x128xf32>
    %39 = arith.addf %38, %37 : vector<128x128xf32>
    %40 = arith.divf %38, %39 : vector<128x128xf32>
    %41 = vector.extract_strided_slice %34 {offsets = [0, 128], sizes = [128, 128], strides = [1, 1]} : vector<128x256xf32> to vector<128x128xf32>
    %cst_24 = arith.constant 5.000000e-01 : f32
    %42 = vector.broadcast %cst_24 : f32 to vector<128x128xf32>
    %43 = arith.mulf %42, %41 : vector<128x128xf32>
    %44 = math.exp %43 : vector<128x128xf32>
    %c0_25 = arith.constant 0 : index
    %c0_26 = arith.constant 0 : index
    %45 = vector.load %arg11[%c0_25, %c0_26] : memref<1x128xf32, #tpu.memory_space<vmem>>, vector<1x128xf32>
    %46 = vector.broadcast %45 : vector<1x128xf32> to vector<128x128xf32>
    %47 = arith.mulf %44, %46 : vector<128x128xf32>
    %48 = arith.addf %40, %47 : vector<128x128xf32>
    %c0_27 = arith.constant 0 : index
    %c0_28 = arith.constant 0 : index
    %49 = vector.load %arg12[%c0_27, %c0_28] : memref<128x128xf32, #tpu.memory_space<vmem>>, vector<128x128xf32>
    tpu.vector_store %arg12[%c0_27, %c0_28], %48 {strides = array<i32>} : memref<128x128xf32, #tpu.memory_space<vmem>>, vector<128x128xf32>,
    %c0_29 = arith.constant 0 : index
    %c0_30 = arith.constant 0 : index
    %50 = vector.load %arg13[%c0_29, %c0_30] : memref<128x256xf32, #tpu.memory_space<vmem>>, vector<128x128xf32>
    tpu.vector_store %arg13[%c0_29, %c0_30], %13 {strides = array<i32>} : memref<128x256xf32, #tpu.memory_space<vmem>>, vector<128x128xf32>,
    %51 = arith.mulf %17, %17 : vector<128x128xf32>
    %c0_31 = arith.constant 0 : index
    %c128 = arith.constant 128 : index
    %52 = vector.load %arg13[%c0_31, %c128] : memref<128x256xf32, #tpu.memory_space<vmem>>, vector<128x128xf32>
    tpu.vector_store %arg13[%c0_31, %c128], %51 {strides = array<i32>} : memref<128x256xf32, #tpu.memory_space<vmem>>, vector<128x128xf32>,
    %c0_32 = arith.constant 0 : index
    %c0_33 = arith.constant 0 : index
    %53 = vector.load %arg14[%c0_32, %c0_33] : memref<128x256xf32, #tpu.memory_space<vmem>>, vector<128x128xf32>
    tpu.vector_store %arg14[%c0_32, %c0_33], %40 {strides = array<i32>} : memref<128x256xf32, #tpu.memory_space<vmem>>, vector<128x128xf32>,
    %54 = arith.mulf %44, %44 : vector<128x128xf32>
    %c0_34 = arith.constant 0 : index
    %c128_35 = arith.constant 128 : index
    %55 = vector.load %arg14[%c0_34, %c128_35] : memref<128x256xf32, #tpu.memory_space<vmem>>, vector<128x128xf32>
    tpu.vector_store %arg14[%c0_34, %c128_35], %54 {strides = array<i32>} : memref<128x256xf32, #tpu.memory_space<vmem>>, vector<128x128xf32>,
    return
  }
  func.func @transform_0(%arg0: i32) -> (i32, i32) {
    %c0_i32 = arith.constant 0 : i32
    %c0_i32_0 = arith.constant 0 : i32
    return %arg0, %c0_i32 : i32, i32
  }
  func.func @transform_1(%arg0: i32) -> (i32, i32) {
    %c0_i32 = arith.constant 0 : i32
    %c0_i32_0 = arith.constant 0 : i32
    %c0_i32_1 = arith.constant 0 : i32
    return %c0_i32, %c0_i32_0 : i32, i32
  }
  func.func @transform_2(%arg0: i32) -> (i32, i32) {
    %c0_i32 = arith.constant 0 : i32
    %c0_i32_0 = arith.constant 0 : i32
    %c0_i32_1 = arith.constant 0 : i32
    return %c0_i32, %c0_i32_0 : i32, i32
  }
  func.func @transform_3(%arg0: i32) -> (i32, i32) {
    %c0_i32 = arith.constant 0 : i32
    %c0_i32_0 = arith.constant 0 : i32
    %c0_i32_1 = arith.constant 0 : i32
    return %c0_i32, %c0_i32_0 : i32, i32
  }
  func.func @transform_4(%arg0: i32) -> (i32, i32) {
    %c0_i32 = arith.constant 0 : i32
    %c0_i32_0 = arith.constant 0 : i32
    %c0_i32_1 = arith.constant 0 : i32
    return %c0_i32, %c0_i32_0 : i32, i32
  }
  func.func @transform_5(%arg0: i32) -> (i32, i32) {
    %c0_i32 = arith.constant 0 : i32
    %c0_i32_0 = arith.constant 0 : i32
    %c0_i32_1 = arith.constant 0 : i32
    return %c0_i32, %c0_i32_0 : i32, i32
  }
  func.func @transform_6(%arg0: i32) -> (i32, i32) {
    %c0_i32 = arith.constant 0 : i32
    %c0_i32_0 = arith.constant 0 : i32
    %c0_i32_1 = arith.constant 0 : i32
    return %c0_i32, %c0_i32_0 : i32, i32
  }
  func.func @transform_7(%arg0: i32) -> (i32, i32) {
    %c0_i32 = arith.constant 0 : i32
    %c0_i32_0 = arith.constant 0 : i32
    %c0_i32_1 = arith.constant 0 : i32
    return %c0_i32, %c0_i32_0 : i32, i32
  }
  func.func @transform_8(%arg0: i32) -> (i32, i32) {
    %c0_i32 = arith.constant 0 : i32
    %c0_i32_0 = arith.constant 0 : i32
    %c0_i32_1 = arith.constant 0 : i32
    return %c0_i32, %c0_i32_0 : i32, i32
  }
  func.func @transform_9(%arg0: i32) -> (i32, i32) {
    %c0_i32 = arith.constant 0 : i32
    %c0_i32_0 = arith.constant 0 : i32
    %c0_i32_1 = arith.constant 0 : i32
    return %c0_i32, %c0_i32_0 : i32, i32
  }
  func.func @transform_10(%arg0: i32) -> (i32, i32) {
    %c0_i32 = arith.constant 0 : i32
    %c0_i32_0 = arith.constant 0 : i32
    %c0_i32_1 = arith.constant 0 : i32
    return %c0_i32, %c0_i32_0 : i32, i32
  }
  func.func @transform_11(%arg0: i32) -> (i32, i32) {
    %c0_i32 = arith.constant 0 : i32
    %c0_i32_0 = arith.constant 0 : i32
    return %arg0, %c0_i32 : i32, i32
  }
  func.func @transform_12(%arg0: i32) -> (i32, i32) {
    %c0_i32 = arith.constant 0 : i32
    %c0_i32_0 = arith.constant 0 : i32
    return %arg0, %c0_i32 : i32, i32
  }
  func.func @transform_13(%arg0: i32) -> (i32, i32) {
    %c0_i32 = arith.constant 0 : i32
    %c0_i32_0 = arith.constant 0 : i32
    return %arg0, %c0_i32 : i32, i32
  }
}

module attributes {stable_mosaic.version = 11 : i64} {
  func.func @_vae_kernel(%arg0: i32, %arg1: memref<128x128xbf16, #tpu.memory_space<vmem>>, %arg2: memref<128x128xbf16, #tpu.memory_space<vmem>>, %arg3: memref<1x128xf32, #tpu.memory_space<vmem>>, %arg4: memref<128x256xbf16, #tpu.memory_space<vmem>>, %arg5: memref<1x256xf32, #tpu.memory_space<vmem>>, %arg6: memref<1x128xf32, #tpu.memory_space<vmem>>, %arg7: memref<128x128xbf16, #tpu.memory_space<vmem>>, %arg8: memref<1x128xf32, #tpu.memory_space<vmem>>, %arg9: memref<128x256xbf16, #tpu.memory_space<vmem>>, %arg10: memref<1x256xf32, #tpu.memory_space<vmem>>, %arg11: memref<1x128xf32, #tpu.memory_space<vmem>>, %arg12: memref<128x128xf32, #tpu.memory_space<vmem>>, %arg13: memref<128x256xf32, #tpu.memory_space<vmem>>, %arg14: memref<128x256xf32, #tpu.memory_space<vmem>>) attributes {dimension_semantics = [#tpu.dimension_semantics<parallel>], iteration_bounds = array<i64: 4>, scalar_prefetch = 0 : i64, scratch_operands = 0 : i64, tpu.core_type = #tpu.core_type<tc>, window_params = [{transform_indices = @transform_0, window_bounds = array<i64: 128, 128>}, {pipeline_mode = #tpu.pipeline_mode<synchronous>, transform_indices = @transform_1, window_bounds = array<i64: 128, 128>}, {pipeline_mode = #tpu.pipeline_mode<synchronous>, transform_indices = @transform_2, window_bounds = array<i64: 1, 128>}, {pipeline_mode = #tpu.pipeline_mode<synchronous>, transform_indices = @transform_3, window_bounds = array<i64: 128, 256>}, {pipeline_mode = #tpu.pipeline_mode<synchronous>, transform_indices = @transform_4, window_bounds = array<i64: 1, 256>}, {pipeline_mode = #tpu.pipeline_mode<synchronous>, transform_indices = @transform_5, window_bounds = array<i64: 1, 128>}, {pipeline_mode = #tpu.pipeline_mode<synchronous>, transform_indices = @transform_6, window_bounds = array<i64: 128, 128>}, {pipeline_mode = #tpu.pipeline_mode<synchronous>, transform_indices = @transform_7, window_bounds = array<i64: 1, 128>}, {pipeline_mode = #tpu.pipeline_mode<synchronous>, transform_indices = @transform_8, window_bounds = array<i64: 128, 256>}, {pipeline_mode = #tpu.pipeline_mode<synchronous>, transform_indices = @transform_9, window_bounds = array<i64: 1, 256>}, {pipeline_mode = #tpu.pipeline_mode<synchronous>, transform_indices = @transform_10, window_bounds = array<i64: 1, 128>}, {transform_indices = @transform_11, window_bounds = array<i64: 128, 128>}, {transform_indices = @transform_12, window_bounds = array<i64: 128, 256>}, {transform_indices = @transform_13, window_bounds = array<i64: 128, 256>}]} {
    %c0 = arith.constant 0 : index
    %c0_0 = arith.constant 0 : index
    %0 = vector.load %arg1[%c0, %c0_0] : memref<128x128xbf16, #tpu.memory_space<vmem>>, vector<128x128xbf16>
    %c0_1 = arith.constant 0 : index
    %c0_2 = arith.constant 0 : index
    %1 = vector.load %arg2[%c0_1, %c0_2] : memref<128x128xbf16, #tpu.memory_space<vmem>>, vector<128x128xbf16>
    %cst = arith.constant dense<0.000000e+00> : vector<128x128xf32>
    %2 = tpu.matmul %0, %1, %cst {dimension_numbers = #tpu.dot_dimension_numbers<[1], [0], [0], [1], [0, 0, 1, 1], [], []>} : vector<128x128xbf16>, vector<128x128xbf16>, vector<128x128xf32> -> vector<128x128xf32>
    %c0_3 = arith.constant 0 : index
    %c0_4 = arith.constant 0 : index
    %3 = vector.load %arg3[%c0_3, %c0_4] : memref<1x128xf32, #tpu.memory_space<vmem>>, vector<1x128xf32>
    %4 = vector.broadcast %3 : vector<1x128xf32> to vector<128x128xf32>
    %5 = arith.addf %2, %4 : vector<128x128xf32>
    %6 = math.tanh %5 : vector<128x128xf32>
    %7 = arith.truncf %6 : vector<128x128xf32> to vector<128x128xbf16>
    %c0_5 = arith.constant 0 : index
    %c0_6 = arith.constant 0 : index
    %8 = vector.load %arg4[%c0_5, %c0_6] : memref<128x256xbf16, #tpu.memory_space<vmem>>, vector<128x256xbf16>
    %cst_7 = arith.constant dense<0.000000e+00> : vector<128x256xf32>
    %9 = tpu.matmul %7, %8, %cst_7 {dimension_numbers = #tpu.dot_dimension_numbers<[1], [0], [0], [1], [0, 0, 1, 1], [], []>} : vector<128x128xbf16>, vector<128x256xbf16>, vector<128x256xf32> -> vector<128x256xf32>
    %c0_8 = arith.constant 0 : index
    %c0_9 = arith.constant 0 : index
    %10 = vector.load %arg5[%c0_8, %c0_9] : memref<1x256xf32, #tpu.memory_space<vmem>>, vector<1x256xf32>
    %11 = vector.broadcast %10 : vector<1x256xf32> to vector<128x256xf32>
    %12 = arith.addf %9, %11 : vector<128x256xf32>
    %13 = vector.extract_strided_slice %12 {offsets = [0, 0], sizes = [128, 128], strides = [1, 1]} : vector<128x256xf32> to vector<128x128xf32>
    %14 = vector.extract_strided_slice %12 {offsets = [0, 128], sizes = [128, 128], strides = [1, 1]} : vector<128x256xf32> to vector<128x128xf32>
    %cst_10 = arith.constant 5.000000e-01 : f32
    %15 = vector.broadcast %cst_10 : f32 to vector<128x128xf32>
    %16 = arith.mulf %15, %14 : vector<128x128xf32>
    %17 = math.exp %16 : vector<128x128xf32>
    %c0_11 = arith.constant 0 : index
    %c0_12 = arith.constant 0 : index
    %18 = vector.load %arg6[%c0_11, %c0_12] : memref<1x128xf32, #tpu.memory_space<vmem>>, vector<1x128xf32>
    %19 = vector.broadcast %18 : vector<1x128xf32> to vector<128x128xf32>
    %20 = arith.mulf %17, %19 : vector<128x128xf32>
    %21 = arith.addf %13, %20 : vector<128x128xf32>
    %22 = arith.truncf %21 : vector<128x128xf32> to vector<128x128xbf16>
    %c0_13 = arith.constant 0 : index
    %c0_14 = arith.constant 0 : index
    %23 = vector.load %arg7[%c0_13, %c0_14] : memref<128x128xbf16, #tpu.memory_space<vmem>>, vector<128x128xbf16>
    %cst_15 = arith.constant dense<0.000000e+00> : vector<128x128xf32>
    %24 = tpu.matmul %22, %23, %cst_15 {dimension_numbers = #tpu.dot_dimension_numbers<[1], [0], [0], [1], [0, 0, 1, 1], [], []>} : vector<128x128xbf16>, vector<128x128xbf16>, vector<128x128xf32> -> vector<128x128xf32>
    %c0_16 = arith.constant 0 : index
    %c0_17 = arith.constant 0 : index
    %25 = vector.load %arg8[%c0_16, %c0_17] : memref<1x128xf32, #tpu.memory_space<vmem>>, vector<1x128xf32>
    %26 = vector.broadcast %25 : vector<1x128xf32> to vector<128x128xf32>
    %27 = arith.addf %24, %26 : vector<128x128xf32>
    %28 = math.tanh %27 : vector<128x128xf32>
    %29 = arith.truncf %28 : vector<128x128xf32> to vector<128x128xbf16>
    %c0_18 = arith.constant 0 : index
    %c0_19 = arith.constant 0 : index
    %30 = vector.load %arg9[%c0_18, %c0_19] : memref<128x256xbf16, #tpu.memory_space<vmem>>, vector<128x256xbf16>
    %cst_20 = arith.constant dense<0.000000e+00> : vector<128x256xf32>
    %31 = tpu.matmul %29, %30, %cst_20 {dimension_numbers = #tpu.dot_dimension_numbers<[1], [0], [0], [1], [0, 0, 1, 1], [], []>} : vector<128x128xbf16>, vector<128x256xbf16>, vector<128x256xf32> -> vector<128x256xf32>
    %c0_21 = arith.constant 0 : index
    %c0_22 = arith.constant 0 : index
    %32 = vector.load %arg10[%c0_21, %c0_22] : memref<1x256xf32, #tpu.memory_space<vmem>>, vector<1x256xf32>
    %33 = vector.broadcast %32 : vector<1x256xf32> to vector<128x256xf32>
    %34 = arith.addf %31, %33 : vector<128x256xf32>
    %35 = vector.extract_strided_slice %34 {offsets = [0, 0], sizes = [128, 128], strides = [1, 1]} : vector<128x256xf32> to vector<128x128xf32>
    %36 = arith.negf %35 : vector<128x128xf32>
    %37 = math.exp %36 : vector<128x128xf32>
    %cst_23 = arith.constant 1.000000e+00 : f32
    %38 = vector.broadcast %cst_23 : f32 to vector<128x128xf32>
    %39 = arith.addf %38, %37 : vector<128x128xf32>
    %40 = arith.divf %38, %39 : vector<128x128xf32>
    %41 = vector.extract_strided_slice %34 {offsets = [0, 128], sizes = [128, 128], strides = [1, 1]} : vector<128x256xf32> to vector<128x128xf32>
    %cst_24 = arith.constant 5.000000e-01 : f32
    %42 = vector.broadcast %cst_24 : f32 to vector<128x128xf32>
    %43 = arith.mulf %42, %41 : vector<128x128xf32>
    %44 = math.exp %43 : vector<128x128xf32>
    %c0_25 = arith.constant 0 : index
    %c0_26 = arith.constant 0 : index
    %45 = vector.load %arg11[%c0_25, %c0_26] : memref<1x128xf32, #tpu.memory_space<vmem>>, vector<1x128xf32>
    %46 = vector.broadcast %45 : vector<1x128xf32> to vector<128x128xf32>
    %47 = arith.mulf %44, %46 : vector<128x128xf32>
    %48 = arith.addf %40, %47 : vector<128x128xf32>
    %c0_27 = arith.constant 0 : index
    %c0_28 = arith.constant 0 : index
    %49 = vector.load %arg12[%c0_27, %c0_28] : memref<128x128xf32, #tpu.memory_space<vmem>>, vector<128x128xf32>
    tpu.vector_store %arg12[%c0_27, %c0_28], %48 {strides = array<i32>} : memref<128x128xf32, #tpu.memory_space<vmem>>, vector<128x128xf32>,
    %c0_29 = arith.constant 0 : index
    %c0_30 = arith.constant 0 : index
    %50 = vector.load %arg13[%c0_29, %c0_30] : memref<128x256xf32, #tpu.memory_space<vmem>>, vector<128x128xf32>
    tpu.vector_store %arg13[%c0_29, %c0_30], %13 {strides = array<i32>} : memref<128x256xf32, #tpu.memory_space<vmem>>, vector<128x128xf32>,
    %51 = arith.mulf %17, %17 : vector<128x128xf32>
    %c0_31 = arith.constant 0 : index
    %c128 = arith.constant 128 : index
    %52 = vector.load %arg13[%c0_31, %c128] : memref<128x256xf32, #tpu.memory_space<vmem>>, vector<128x128xf32>
    tpu.vector_store %arg13[%c0_31, %c128], %51 {strides = array<i32>} : memref<128x256xf32, #tpu.memory_space<vmem>>, vector<128x128xf32>,
    %c0_32 = arith.constant 0 : index
    %c0_33 = arith.constant 0 : index
    %53 = vector.load %arg14[%c0_32, %c0_33] : memref<128x256xf32, #tpu.memory_space<vmem>>, vector<128x128xf32>
    tpu.vector_store %arg14[%c0_32, %c0_33], %40 {strides = array<i32>} : memref<128x256xf32, #tpu.memory_space<vmem>>, vector<128x128xf32>,
    %54 = arith.mulf %44, %44 : vector<128x128xf32>
    %c0_34 = arith.constant 0 : index
    %c128_35 = arith.constant 128 : index
    %55 = vector.load %arg14[%c0_34, %c128_35] : memref<128x256xf32, #tpu.memory_space<vmem>>, vector<128x128xf32>
    tpu.vector_store %arg14[%c0_34, %c128_35], %54 {strides = array<i32>} : memref<128x256xf32, #tpu.memory_space<vmem>>, vector<128x128xf32>,
    return
  }
  func.func @transform_0(%arg0: i32) -> (i32, i32) {
    %c0_i32 = arith.constant 0 : i32
    %c0_i32_0 = arith.constant 0 : i32
    return %arg0, %c0_i32 : i32, i32
  }
  func.func @transform_1(%arg0: i32) -> (i32, i32) {
    %c0_i32 = arith.constant 0 : i32
    %c0_i32_0 = arith.constant 0 : i32
    %c0_i32_1 = arith.constant 0 : i32
    return %c0_i32, %c0_i32_0 : i32, i32
  }
  func.func @transform_2(%arg0: i32) -> (i32, i32) {
    %c0_i32 = arith.constant 0 : i32
    %c0_i32_0 = arith.constant 0 : i32
    %c0_i32_1 = arith.constant 0 : i32
    return %c0_i32, %c0_i32_0 : i32, i32
  }
  func.func @transform_3(%arg0: i32) -> (i32, i32) {
    %c0_i32 = arith.constant 0 : i32
    %c0_i32_0 = arith.constant 0 : i32
    %c0_i32_1 = arith.constant 0 : i32
    return %c0_i32, %c0_i32_0 : i32, i32
  }
  func.func @transform_4(%arg0: i32) -> (i32, i32) {
    %c0_i32 = arith.constant 0 : i32
    %c0_i32_0 = arith.constant 0 : i32
    %c0_i32_1 = arith.constant 0 : i32
    return %c0_i32, %c0_i32_0 : i32, i32
  }
  func.func @transform_5(%arg0: i32) -> (i32, i32) {
    %c0_i32 = arith.constant 0 : i32
    %c0_i32_0 = arith.constant 0 : i32
    %c0_i32_1 = arith.constant 0 : i32
    return %c0_i32, %c0_i32_0 : i32, i32
  }
  func.func @transform_6(%arg0: i32) -> (i32, i32) {
    %c0_i32 = arith.constant 0 : i32
    %c0_i32_0 = arith.constant 0 : i32
    %c0_i32_1 = arith.constant 0 : i32
    return %c0_i32, %c0_i32_0 : i32, i32
  }
  func.func @transform_7(%arg0: i32) -> (i32, i32) {
    %c0_i32 = arith.constant 0 : i32
    %c0_i32_0 = arith.constant 0 : i32
    %c0_i32_1 = arith.constant 0 : i32
    return %c0_i32, %c0_i32_0 : i32, i32
  }
  func.func @transform_8(%arg0: i32) -> (i32, i32) {
    %c0_i32 = arith.constant 0 : i32
    %c0_i32_0 = arith.constant 0 : i32
    %c0_i32_1 = arith.constant 0 : i32
    return %c0_i32, %c0_i32_0 : i32, i32
  }
  func.func @transform_9(%arg0: i32) -> (i32, i32) {
    %c0_i32 = arith.constant 0 : i32
    %c0_i32_0 = arith.constant 0 : i32
    %c0_i32_1 = arith.constant 0 : i32
    return %c0_i32, %c0_i32_0 : i32, i32
  }
  func.func @transform_10(%arg0: i32) -> (i32, i32) {
    %c0_i32 = arith.constant 0 : i32
    %c0_i32_0 = arith.constant 0 : i32
    %c0_i32_1 = arith.constant 0 : i32
    return %c0_i32, %c0_i32_0 : i32, i32
  }
  func.func @transform_11(%arg0: i32) -> (i32, i32) {
    %c0_i32 = arith.constant 0 : i32
    %c0_i32_0 = arith.constant 0 : i32
    return %arg0, %c0_i32 : i32, i32
  }
  func.func @transform_12(%arg0: i32) -> (i32, i32) {
    %c0_i32 = arith.constant 0 : i32
    %c0_i32_0 = arith.constant 0 : i32
    return %arg0, %c0_i32 : i32, i32
  }
  func.func @transform_13(%arg0: i32) -> (i32, i32) {
    %c0_i32 = arith.constant 0 : i32
    %c0_i32_0 = arith.constant 0 : i32
    return %arg0, %c0_i32 : i32, i32
  }
}

</mosaic_0001>

<llo_original>
// kernel: tpu_custom_call.1
$region0: #{tpu_custom_call.1}
  #allocation0 [shape = 'u32[]', space=smem, size = 0x4, offset = 0x4, fixed_abs, tag = 'smem constant byte address 0x4 - core index']
  #allocation1 [shape = 'u32[144,128]{1,0:T(1,128)}', space=vmem, size = 0x12000, scoped, tag = 'internal scratch']
  %s0 = inlined_call_operand.hbm [shape: bf16[512,128], index: 0, kind: input, shape index: {}]
  %s1 = inlined_call_operand.hbm [shape: bf16[128,128], index: 1, kind: input, shape index: {}]
  %s2 = inlined_call_operand.vmem [shape: f32[1,128], index: 2, kind: input, shape index: {}]
  %s3 = inlined_call_operand.hbm [shape: bf16[128,256], index: 3, kind: input, shape index: {}]
  %s4 = inlined_call_operand.vmem [shape: f32[1,256], index: 4, kind: input, shape index: {}]
  %s5 = inlined_call_operand.vmem [shape: f32[1,128], index: 5, kind: input, shape index: {}]
  %s6 = inlined_call_operand.hbm [shape: bf16[128,128], index: 6, kind: input, shape index: {}]
  %s7 = inlined_call_operand.vmem [shape: f32[1,128], index: 7, kind: input, shape index: {}]
  %s8 = inlined_call_operand.hbm [shape: bf16[128,256], index: 8, kind: input, shape index: {}]
  %s9 = inlined_call_operand.vmem [shape: f32[1,256], index: 9, kind: input, shape index: {}]
  %s10 = inlined_call_operand.vmem [shape: f32[1,128], index: 10, kind: input, shape index: {}]
  %s11 = inlined_call_operand.hbm [shape: f32[512,128], index: 11, kind: output, shape index: {0}]
  %s12 = inlined_call_operand.hbm [shape: f32[512,256], index: 12, kind: output, shape index: {1}]
  %s13 = inlined_call_operand.hbm [shape: f32[512,256], index: 13, kind: output, shape index: {2}]
  %14 = xla_tuple %s11, %s12, %s13
  %s15 = sld [smem:[#allocation0]]
  $region113: #{tpu_custom_call.1} parent=0
    _
  %s17 = ssub.s32 1, %s15
  %s18 = scalar_select 0, %s17, %s15
  $region1: #{tpu_custom_call.1} parent=0
    #allocation2 [shape = 'u8[65536]{0}', space=vmem, size = 0x10000, scoped, tag = 'input window, operand 0']
    #allocation3 [shape = 's32[2]{0}', space=sflag, size = 0x8, scoped, tag = 'scoped memory for tpu_custom_call.1']
    #allocation4 [shape = 's32[2]{0}', space=sflag, size = 0x8, scoped, tag = 'scoped memory for tpu_custom_call.1']
    #allocation5 [shape = 'u8[32768]{0}', space=vmem, size = 0x8000, scoped, tag = 'input window, operand 1, single buffered']
    #allocation6 [shape = 's32[1]{0}', space=sflag, size = 0x4, scoped, tag = 'scoped memory for tpu_custom_call.1']
    #allocation7 [shape = 'u8[65536]{0}', space=vmem, size = 0x10000, scoped, tag = 'input window, operand 3, single buffered']
    #allocation8 [shape = 'u8[32768]{0}', space=vmem, size = 0x8000, scoped, tag = 'input window, operand 6, single buffered']
    #allocation9 [shape = 's32[1]{0}', space=sflag, size = 0x4, scoped, tag = 'scoped memory for tpu_custom_call.1']
    #allocation10 [shape = 'u8[65536]{0}', space=vmem, size = 0x10000, scoped, tag = 'input window, operand 8, single buffered']
    #allocation11 [shape = 'u8[131072]{0}', space=vmem, size = 0x20000, scoped, tag = 'output window, operand 0']
    #allocation12 [shape = 'u8[262144]{0}', space=vmem, size = 0x40000, scoped, tag = 'output window, operand 1']
    #allocation13 [shape = 's32[2]{0}', space=sflag, size = 0x8, scoped, tag = 'scoped memory for tpu_custom_call.1']
    #allocation14 [shape = 'u8[262144]{0}', space=vmem, size = 0x40000, scoped, tag = 'output window, operand 2']
    %19 = vsyncpa [#allocation3], 0
    %s20 = scalar_lea.sflag [#allocation3], 1
    %21 = vsyncpa %s20, 0
    %22 = vsyncpa [#allocation6], 0
    %23 = vsyncpa [#allocation9], 0
    %24 = vsyncpa [#allocation4], 0
    %s25 = scalar_lea.sflag [#allocation4], 1
    %26 = vsyncpa %s25, 0
    %27 = vsyncpa [#allocation13], 0
    %s28 = scalar_lea.sflag [#allocation13], 1
    %29 = vsyncpa %s28, 0
    loop: start=0, step=1, limit=6
    $region2: #{tpu_custom_call.1} parent=1 // loop_pre_header
      _
    $region3: #{tpu_custom_call.1} parent=1 // loop_header
      %s31 = sphi 0, %s35
      %p32 = scmp.ge.s32.totalorder %s31, 6
      %s41 = sphi 0, %s43
      %s44 = sphi 0, %s41
      %s45 = sphi 0, %s44
      %s61 = sphi 0, %s45
      %s65 = sphi 0, %s65
      %s67 = sphi 0, %s65
      %s68 = sphi 0, %s67
      %s82 = sphi 0, %s68
      %s86 = sphi 0, %s86
      %s88 = sphi 0, %s86
      %s89 = sphi 0, %s88
      %s103 = sphi 0, %s89
      %s107 = sphi 0, %s107
      %s109 = sphi 0, %s107
      %s110 = sphi 0, %s109
      %s124 = sphi 0, %s110
      %s128 = sphi 0, %s128
      %s130 = sphi 0, %s128
      %s131 = sphi 0, %s130
      %s145 = sphi 0, %s131
      %s149 = sphi 0, %s149
      %s151 = sphi 0, %s149
      %s152 = sphi 0, %s151
      %s166 = sphi 0, %s152
      %s170 = sphi 0, %s170
      %s172 = sphi 0, %s170
      %s173 = sphi 0, %s172
      %s187 = sphi 0, %s173
      %s191 = sphi 0, %s191
      %s193 = sphi 0, %s191
      %s194 = sphi 0, %s193
      %s208 = sphi 0, %s194
      %s212 = sphi 0, %s212
      %s214 = sphi 0, %s212
      %s215 = sphi 0, %s214
      %s229 = sphi 0, %s215
      %s233 = sphi 0, %s233
      %s235 = sphi 0, %s233
      %s236 = sphi 0, %s235
      %s250 = sphi 0, %s236
      %s254 = sphi 0, %s254
      %s256 = sphi 0, %s254
      %s257 = sphi 0, %s256
      %s271 = sphi 0, %s257
      %s277 = sphi 0, %s279
      %s280 = sphi 0, %s277
      %s281 = sphi 0, %s280
      %s297 = sphi 0, %s281
      %s303 = sphi 0, %s305
      %s306 = sphi 0, %s303
      %s307 = sphi 0, %s306
      %s323 = sphi 0, %s307
      %s329 = sphi 0, %s331
      %s332 = sphi 0, %s329
      %s333 = sphi 0, %s332
      %s349 = sphi 0, %s333
    $region4: #{tpu_custom_call.1} parent=1 // loop_header_branch
      %34 = sbr.rel (%p32) target = $region8
    $region5: #{tpu_custom_call.1} parent=1 // loop_body
      %s36 = ssub.s32 %s31, 1
      %s37 = ssub.s32 %s31, 2
      %s38 = sadd.s32 %s31, 1
      %s39 = ssub.s32 %s31, %s38
      %p40 = scmp.eq.s32.totalorder %s39, 0
      %s42 = sadd.s32 %s41, 1
      %s43 = scalar_select %p40, %s41, %s42
      %p46 = pneg %p40
      %p47 = scmp.eq.s32.totalorder %s31, 3
      %p48 = por %p46, %p47
      %p49 = scmp.ne.s32.totalorder %s41, %s44
      %p50 = scmp.eq.s32.totalorder %s31, 0
      %p51 = por %p49, %p50
      %p52 = scmp.ne.s32.totalorder %s41, %s44
      %p53 = scmp.eq.s32.totalorder %s36, 3
      %p54 = por %p52, %p53
      %p55 = scmp.ne.s32.totalorder %s44, %s45
      %p56 = scmp.eq.s32.totalorder %s36, 0
      %p57 = por %p55, %p56
      %p58 = scmp.ne.s32.totalorder %s44, %s45
      %p59 = scmp.eq.s32.totalorder %s37, 3
      %p60 = por %p58, %p59
      %p62 = scmp.ne.s32.totalorder %s45, %s61
      %p63 = scmp.eq.s32.totalorder %s37, 0
      %p64 = por %p62, %p63
      %s66 = sadd.s32 %s65, 1
      %p69 = scmp.eq.s32.totalorder %s31, 3
      %p70 = scmp.ne.s32.totalorder %s65, %s67
      %p71 = scmp.eq.s32.totalorder %s31, 0
      %p72 = por %p70, %p71
      %p73 = scmp.ne.s32.totalorder %s65, %s67
      %p74 = scmp.eq.s32.totalorder %s36, 3
      %p75 = por %p73, %p74
      %p76 = scmp.ne.s32.totalorder %s67, %s68
      %p77 = scmp.eq.s32.totalorder %s36, 0
      %p78 = por %p76, %p77
      %p79 = scmp.ne.s32.totalorder %s67, %s68
      %p80 = scmp.eq.s32.totalorder %s37, 3
      %p81 = por %p79, %p80
      %p83 = scmp.ne.s32.totalorder %s68, %s82
      %p84 = scmp.eq.s32.totalorder %s37, 0
      %p85 = por %p83, %p84
      %s87 = sadd.s32 %s86, 1
      %p90 = scmp.eq.s32.totalorder %s31, 3
      %p91 = scmp.ne.s32.totalorder %s86, %s88
      %p92 = scmp.eq.s32.totalorder %s31, 0
      %p93 = por %p91, %p92
      %p94 = scmp.ne.s32.totalorder %s86, %s88
      %p95 = scmp.eq.s32.totalorder %s36, 3
      %p96 = por %p94, %p95
      %p97 = scmp.ne.s32.totalorder %s88, %s89
      %p98 = scmp.eq.s32.totalorder %s36, 0
      %p99 = por %p97, %p98
      %p100 = scmp.ne.s32.totalorder %s88, %s89
      %p101 = scmp.eq.s32.totalorder %s37, 3
      %p102 = por %p100, %p101
      %p104 = scmp.ne.s32.totalorder %s89, %s103
      %p105 = scmp.eq.s32.totalorder %s37, 0
      %p106 = por %p104, %p105
      %s108 = sadd.s32 %s107, 1
      %p111 = scmp.eq.s32.totalorder %s31, 3
      %p112 = scmp.ne.s32.totalorder %s107, %s109
      %p113 = scmp.eq.s32.totalorder %s31, 0
      %p114 = por %p112, %p113
      %p115 = scmp.ne.s32.totalorder %s107, %s109
      %p116 = scmp.eq.s32.totalorder %s36, 3
      %p117 = por %p115, %p116
      %p118 = scmp.ne.s32.totalorder %s109, %s110
      %p119 = scmp.eq.s32.totalorder %s36, 0
      %p120 = por %p118, %p119
      %p121 = scmp.ne.s32.totalorder %s109, %s110
      %p122 = scmp.eq.s32.totalorder %s37, 3
      %p123 = por %p121, %p122
      %p125 = scmp.ne.s32.totalorder %s110, %s124
      %p126 = scmp.eq.s32.totalorder %s37, 0
      %p127 = por %p125, %p126
      %s129 = sadd.s32 %s128, 1
      %p132 = scmp.eq.s32.totalorder %s31, 3
      %p133 = scmp.ne.s32.totalorder %s128, %s130
      %p134 = scmp.eq.s32.totalorder %s31, 0
      %p135 = por %p133, %p134
      %p136 = scmp.ne.s32.totalorder %s128, %s130
      %p137 = scmp.eq.s32.totalorder %s36, 3
      %p138 = por %p136, %p137
      %p139 = scmp.ne.s32.totalorder %s130, %s131
      %p140 = scmp.eq.s32.totalorder %s36, 0
      %p141 = por %p139, %p140
      %p142 = scmp.ne.s32.totalorder %s130, %s131
      %p143 = scmp.eq.s32.totalorder %s37, 3
      %p144 = por %p142, %p143
      %p146 = scmp.ne.s32.totalorder %s131, %s145
      %p147 = scmp.eq.s32.totalorder %s37, 0
      %p148 = por %p146, %p147
      %s150 = sadd.s32 %s149, 1
      %p153 = scmp.eq.s32.totalorder %s31, 3
      %p154 = scmp.ne.s32.totalorder %s149, %s151
      %p155 = scmp.eq.s32.totalorder %s31, 0
      %p156 = por %p154, %p155
      %p157 = scmp.ne.s32.totalorder %s149, %s151
      %p158 = scmp.eq.s32.totalorder %s36, 3
      %p159 = por %p157, %p158
      %p160 = scmp.ne.s32.totalorder %s151, %s152
      %p161 = scmp.eq.s32.totalorder %s36, 0
      %p162 = por %p160, %p161
      %p163 = scmp.ne.s32.totalorder %s151, %s152
      %p164 = scmp.eq.s32.totalorder %s37, 3
      %p165 = por %p163, %p164
      %p167 = scmp.ne.s32.totalorder %s152, %s166
      %p168 = scmp.eq.s32.totalorder %s37, 0
      %p169 = por %p167, %p168
      %s171 = sadd.s32 %s170, 1
      %p174 = scmp.eq.s32.totalorder %s31, 3
      %p175 = scmp.ne.s32.totalorder %s170, %s172
      %p176 = scmp.eq.s32.totalorder %s31, 0
      %p177 = por %p175, %p176
      %p178 = scmp.ne.s32.totalorder %s170, %s172
      %p179 = scmp.eq.s32.totalorder %s36, 3
      %p180 = por %p178, %p179
      %p181 = scmp.ne.s32.totalorder %s172, %s173
      %p182 = scmp.eq.s32.totalorder %s36, 0
      %p183 = por %p181, %p182
      %p184 = scmp.ne.s32.totalorder %s172, %s173
      %p185 = scmp.eq.s32.totalorder %s37, 3
      %p186 = por %p184, %p185
      %p188 = scmp.ne.s32.totalorder %s173, %s187
      %p189 = scmp.eq.s32.totalorder %s37, 0
      %p190 = por %p188, %p189
      %s192 = sadd.s32 %s191, 1
      %p195 = scmp.eq.s32.totalorder %s31, 3
      %p196 = scmp.ne.s32.totalorder %s191, %s193
      %p197 = scmp.eq.s32.totalorder %s31, 0
      %p198 = por %p196, %p197
      %p199 = scmp.ne.s32.totalorder %s191, %s193
      %p200 = scmp.eq.s32.totalorder %s36, 3
      %p201 = por %p199, %p200
      %p202 = scmp.ne.s32.totalorder %s193, %s194
      %p203 = scmp.eq.s32.totalorder %s36, 0
      %p204 = por %p202, %p203
      %p205 = scmp.ne.s32.totalorder %s193, %s194
      %p206 = scmp.eq.s32.totalorder %s37, 3
      %p207 = por %p205, %p206
      %p209 = scmp.ne.s32.totalorder %s194, %s208
      %p210 = scmp.eq.s32.totalorder %s37, 0
      %p211 = por %p209, %p210
      %s213 = sadd.s32 %s212, 1
      %p216 = scmp.eq.s32.totalorder %s31, 3
      %p217 = scmp.ne.s32.totalorder %s212, %s214
      %p218 = scmp.eq.s32.totalorder %s31, 0
      %p219 = por %p217, %p218
      %p220 = scmp.ne.s32.totalorder %s212, %s214
      %p221 = scmp.eq.s32.totalorder %s36, 3
      %p222 = por %p220, %p221
      %p223 = scmp.ne.s32.totalorder %s214, %s215
      %p224 = scmp.eq.s32.totalorder %s36, 0
      %p225 = por %p223, %p224
      %p226 = scmp.ne.s32.totalorder %s214, %s215
      %p227 = scmp.eq.s32.totalorder %s37, 3
      %p228 = por %p226, %p227
      %p230 = scmp.ne.s32.totalorder %s215, %s229
      %p231 = scmp.eq.s32.totalorder %s37, 0
      %p232 = por %p230, %p231
      %s234 = sadd.s32 %s233, 1
      %p237 = scmp.eq.s32.totalorder %s31, 3
      %p238 = scmp.ne.s32.totalorder %s233, %s235
      %p239 = scmp.eq.s32.totalorder %s31, 0
      %p240 = por %p238, %p239
      %p241 = scmp.ne.s32.totalorder %s233, %s235
      %p242 = scmp.eq.s32.totalorder %s36, 3
      %p243 = por %p241, %p242
      %p244 = scmp.ne.s32.totalorder %s235, %s236
      %p245 = scmp.eq.s32.totalorder %s36, 0
      %p246 = por %p244, %p245
      %p247 = scmp.ne.s32.totalorder %s235, %s236
      %p248 = scmp.eq.s32.totalorder %s37, 3
      %p249 = por %p247, %p248
      %p251 = scmp.ne.s32.totalorder %s236, %s250
      %p252 = scmp.eq.s32.totalorder %s37, 0
      %p253 = por %p251, %p252
      %s255 = sadd.s32 %s254, 1
      %p258 = scmp.eq.s32.totalorder %s31, 3
      %p259 = scmp.ne.s32.totalorder %s254, %s256
      %p260 = scmp.eq.s32.totalorder %s31, 0
      %p261 = por %p259, %p260
      %p262 = scmp.ne.s32.totalorder %s254, %s256
      %p263 = scmp.eq.s32.totalorder %s36, 3
      %p264 = por %p262, %p263
      %p265 = scmp.ne.s32.totalorder %s256, %s257
      %p266 = scmp.eq.s32.totalorder %s36, 0
      %p267 = por %p265, %p266
      %p268 = scmp.ne.s32.totalorder %s256, %s257
      %p269 = scmp.eq.s32.totalorder %s37, 3
      %p270 = por %p268, %p269
      %p272 = scmp.ne.s32.totalorder %s257, %s271
      %p273 = scmp.eq.s32.totalorder %s37, 0
      %p274 = por %p272, %p273
      %s275 = ssub.s32 %s31, %s38
      %p276 = scmp.eq.s32.totalorder %s275, 0
      %s278 = sadd.s32 %s277, 1
      %s279 = scalar_select %p276, %s277, %s278
      %p282 = pneg %p276
      %p283 = scmp.eq.s32.totalorder %s31, 3
      %p284 = por %p282, %p283
      %p285 = scmp.ne.s32.totalorder %s277, %s280
      %p286 = scmp.eq.s32.totalorder %s31, 0
      %p287 = por %p285, %p286
      %p288 = scmp.ne.s32.totalorder %s277, %s280
      %p289 = scmp.eq.s32.totalorder %s36, 3
      %p290 = por %p288, %p289
      %p291 = scmp.ne.s32.totalorder %s280, %s281
      %p292 = scmp.eq.s32.totalorder %s36, 0
      %p293 = por %p291, %p292
      %p294 = scmp.ne.s32.totalorder %s280, %s281
      %p295 = scmp.eq.s32.totalorder %s37, 3
      %p296 = por %p294, %p295
      %p298 = scmp.ne.s32.totalorder %s281, %s297
      %p299 = scmp.eq.s32.totalorder %s37, 0
      %p300 = por %p298, %p299
      %s301 = ssub.s32 %s31, %s38
      %p302 = scmp.eq.s32.totalorder %s301, 0
      %s304 = sadd.s32 %s303, 1
      %s305 = scalar_select %p302, %s303, %s304
      %p308 = pneg %p302
      %p309 = scmp.eq.s32.totalorder %s31, 3
      %p310 = por %p308, %p309
      %p311 = scmp.ne.s32.totalorder %s303, %s306
      %p312 = scmp.eq.s32.totalorder %s31, 0
      %p313 = por %p311, %p312
      %p314 = scmp.ne.s32.totalorder %s303, %s306
      %p315 = scmp.eq.s32.totalorder %s36, 3
      %p316 = por %p314, %p315
      %p317 = scmp.ne.s32.totalorder %s306, %s307
      %p318 = scmp.eq.s32.totalorder %s36, 0
      %p319 = por %p317, %p318
      %p320 = scmp.ne.s32.totalorder %s306, %s307
      %p321 = scmp.eq.s32.totalorder %s37, 3
      %p322 = por %p320, %p321
      %p324 = scmp.ne.s32.totalorder %s307, %s323
      %p325 = scmp.eq.s32.totalorder %s37, 0
      %p326 = por %p324, %p325
      %s327 = ssub.s32 %s31, %s38
      %p328 = scmp.eq.s32.totalorder %s327, 0
      %s330 = sadd.s32 %s329, 1
      %s331 = scalar_select %p328, %s329, %s330
      %p334 = pneg %p328
      %p335 = scmp.eq.s32.totalorder %s31, 3
      %p336 = por %p334, %p335
      %p337 = scmp.ne.s32.totalorder %s329, %s332
      %p338 = scmp.eq.s32.totalorder %s31, 0
      %p339 = por %p337, %p338
      %p340 = scmp.ne.s32.totalorder %s329, %s332
      %p341 = scmp.eq.s32.totalorder %s36, 3
      %p342 = por %p340, %p341
      %p343 = scmp.ne.s32.totalorder %s332, %s333
      %p344 = scmp.eq.s32.totalorder %s36, 0
      %p345 = por %p343, %p344
      %p346 = scmp.ne.s32.totalorder %s332, %s333
      %p347 = scmp.eq.s32.totalorder %s37, 3
      %p348 = por %p346, %p347
      %p350 = scmp.ne.s32.totalorder %s333, %s349
      %p351 = scmp.eq.s32.totalorder %s37, 0
      %p352 = por %p350, %p351
      %p353 = scmp.le.s32.totalorder 1, %s31
      %p354 = scmp.lt.s32.totalorder %s31, 5
      %p355 = pnand %p353, %p354
      %p356 = pneg %p355
      // Predicated region
      $region9: #{tpu_custom_call.1} parent=5 // pred_check
        _
      $region10: #{tpu_custom_call.1} parent=5 // pred_check_branch
        %358 = sbr.rel (%p355) target = $region12
      $region11: #{tpu_custom_call.1} parent=5 // pred_region
        %s359 = ssub.s32 %s31, 1
        // Predicated region
        $region13: #{tpu_custom_call.1} parent=11 // pred_check
          %p360 = pneg %p78
        $region14: #{tpu_custom_call.1} parent=11 // pred_check_branch
          %362 = sbr.rel (%p360) target = $region16
        $region15: #{tpu_custom_call.1} parent=11 // pred_region
          %s364 = ssub.s32 1024, 1024
          %365 = vsyncadd [#allocation6], %s364
          %s366 = sshll.u32 [#allocation5], 4
          %s367 = int_to_ptr.vmem [resolvable:$true] %s366
          %372 = dma.hbm_to_vmem [thread:$0]  %s1, 1024, %s367, [#allocation6], 64, 64, 4
        $region16: #{tpu_custom_call.1} parent=11 // pred_fallthru
          _
        // Predicated region
        $region17: #{tpu_custom_call.1} parent=11 // pred_check
          %p373 = pneg %p99
        $region18: #{tpu_custom_call.1} parent=11 // pred_check_branch
          %375 = sbr.rel (%p373) target = $region20
        $region19: #{tpu_custom_call.1} parent=11 // pred_region
          _
        $region20: #{tpu_custom_call.1} parent=11 // pred_fallthru
          _
        // Predicated region
        $region21: #{tpu_custom_call.1} parent=11 // pred_check
          %p376 = pneg %p120
        $region22: #{tpu_custom_call.1} parent=11 // pred_check_branch
          %378 = sbr.rel (%p376) target = $region24
        $region23: #{tpu_custom_call.1} parent=11 // pred_region
          %s380 = ssub.s32 2048, 2048
          %381 = vsyncadd [#allocation6], %s380
          %s382 = sshll.u32 [#allocation7], 4
          %s383 = int_to_ptr.vmem [resolvable:$true] %s382
          %388 = dma.hbm_to_vmem [thread:$0]  %s3, 2048, %s383, [#allocation6], 128, 128, 8
        $region24: #{tpu_custom_call.1} parent=11 // pred_fallthru
          _
        // Predicated region
        $region25: #{tpu_custom_call.1} parent=11 // pred_check
          %p389 = pneg %p141
        $region26: #{tpu_custom_call.1} parent=11 // pred_check_branch
          %391 = sbr.rel (%p389) target = $region28
        $region27: #{tpu_custom_call.1} parent=11 // pred_region
          _
        $region28: #{tpu_custom_call.1} parent=11 // pred_fallthru
          _
        // Predicated region
        $region29: #{tpu_custom_call.1} parent=11 // pred_check
          %p392 = pneg %p162
        $region30: #{tpu_custom_call.1} parent=11 // pred_check_branch
          %394 = sbr.rel (%p392) target = $region32
        $region31: #{tpu_custom_call.1} parent=11 // pred_region
          _
        $region32: #{tpu_custom_call.1} parent=11 // pred_fallthru
          _
        // Predicated region
        $region33: #{tpu_custom_call.1} parent=11 // pred_check
          %p395 = pneg %p183
        $region34: #{tpu_custom_call.1} parent=11 // pred_check_branch
          %397 = sbr.rel (%p395) target = $region36
        $region35: #{tpu_custom_call.1} parent=11 // pred_region
          %s399 = ssub.s32 1024, 1024
          %400 = vsyncadd [#allocation9], %s399
          %s401 = sshll.u32 [#allocation8], 4
          %s402 = int_to_ptr.vmem [resolvable:$true] %s401
          %407 = dma.hbm_to_vmem [thread:$0]  %s6, 1024, %s402, [#allocation9], 64, 64, 4
        $region36: #{tpu_custom_call.1} parent=11 // pred_fallthru
          _
        // Predicated region
        $region37: #{tpu_custom_call.1} parent=11 // pred_check
          %p408 = pneg %p204
        $region38: #{tpu_custom_call.1} parent=11 // pred_check_branch
          %410 = sbr.rel (%p408) target = $region40
        $region39: #{tpu_custom_call.1} parent=11 // pred_region
          _
        $region40: #{tpu_custom_call.1} parent=11 // pred_fallthru
          _
        // Predicated region
        $region41: #{tpu_custom_call.1} parent=11 // pred_check
          %p411 = pneg %p225
        $region42: #{tpu_custom_call.1} parent=11 // pred_check_branch
          %413 = sbr.rel (%p411) target = $region44
        $region43: #{tpu_custom_call.1} parent=11 // pred_region
          %s415 = ssub.s32 2048, 2048
          %416 = vsyncadd [#allocation9], %s415
          %s417 = sshll.u32 [#allocation10], 4
          %s418 = int_to_ptr.vmem [resolvable:$true] %s417
          %423 = dma.hbm_to_vmem [thread:$0]  %s8, 2048, %s418, [#allocation9], 128, 128, 8
        $region44: #{tpu_custom_call.1} parent=11 // pred_fallthru
          _
        // Predicated region
        $region45: #{tpu_custom_call.1} parent=11 // pred_check
          %p424 = pneg %p246
        $region46: #{tpu_custom_call.1} parent=11 // pred_check_branch
          %426 = sbr.rel (%p424) target = $region48
        $region47: #{tpu_custom_call.1} parent=11 // pred_region
          _
        $region48: #{tpu_custom_call.1} parent=11 // pred_fallthru
          _
        // Predicated region
        $region49: #{tpu_custom_call.1} parent=11 // pred_check
          %p427 = pneg %p267
        $region50: #{tpu_custom_call.1} parent=11 // pred_check_branch
          %429 = sbr.rel (%p427) target = $region52
        $region51: #{tpu_custom_call.1} parent=11 // pred_region
          _
        $region52: #{tpu_custom_call.1} parent=11 // pred_fallthru
          _
      $region12: #{tpu_custom_call.1} parent=5 // pred_fallthru
        _
      %p430 = scmp.lt.s32.totalorder %s31, 4
      // Predicated region
      $region53: #{tpu_custom_call.1} parent=5 // pred_check
        %p431 = pneg %p430
      $region54: #{tpu_custom_call.1} parent=5 // pred_check_branch
        %433 = sbr.rel (%p431) target = $region56
      $region55: #{tpu_custom_call.1} parent=5 // pred_region
        // Predicated region
        $region57: #{tpu_custom_call.1} parent=55 // pred_check
          %p434 = pneg %p51
        $region58: #{tpu_custom_call.1} parent=55 // pred_check_branch
          %436 = sbr.rel (%p434) target = $region60
        $region59: #{tpu_custom_call.1} parent=55 // pred_region
          %s437 = sand.u32 %s41, 1
          %s438 = scalar_lea.sflag [#allocation3], %s437
          %s439 = sand.u32 %s41, 1
          %s440 = smul.addr %s439, 64
          %s441 = scalar_lea.vmem [#allocation2], %s440
          %s442 = smul.u32 16, %s31
          %s444 = ssub.s32 1024, 1024
          %445 = vsyncadd %s438, %s444
          %s446 = smul.addr %s442, 64
          %s447 = scalar_lea.hbm %s0, %s446
          %s448 = sshll.u32 %s441, 4
          %s449 = int_to_ptr.vmem [resolvable:$true] %s448
          %454 = dma.hbm_to_vmem [thread:$0]  %s447, 1024, %s449, %s438, 64, 64, 4
        $region60: #{tpu_custom_call.1} parent=55 // pred_fallthru
          _
      $region56: #{tpu_custom_call.1} parent=5 // pred_fallthru
        _
      %p455 = scmp.le.s32.totalorder 1, %s31
      %p456 = scmp.lt.s32.totalorder %s31, 5
      %p457 = pnand %p455, %p456
      %p458 = pneg %p457
      // Predicated region
      $region61: #{tpu_custom_call.1} parent=5 // pred_check
        _
      $region62: #{tpu_custom_call.1} parent=5 // pred_check_branch
        %460 = sbr.rel (%p457) target = $region64
      $region63: #{tpu_custom_call.1} parent=5 // pred_region
        %s461 = ssub.s32 %s31, 1
        %s462 = sand.u32 %s44, 1
        %s463 = scalar_lea.sflag [#allocation3], %s462
        %s464 = sand.u32 %s44, 1
        %s465 = smul.addr %s464, 64
        %s466 = scalar_lea.vmem [#allocation2], %s465
        // Predicated region
        $region65: #{tpu_custom_call.1} parent=63 // pred_check
          %p467 = pneg %p57
        $region66: #{tpu_custom_call.1} parent=63 // pred_check_branch
          %469 = sbr.rel (%p467) target = $region68
        $region67: #{tpu_custom_call.1} parent=63 // pred_region
          %470 = dma.done %s463, 1024
        $region68: #{tpu_custom_call.1} parent=63 // pred_fallthru
          _
        // Predicated region
        $region69: #{tpu_custom_call.1} parent=63 // pred_check
          %p471 = pneg %p78
        $region70: #{tpu_custom_call.1} parent=63 // pred_check_branch
          %473 = sbr.rel (%p471) target = $region72
        $region71: #{tpu_custom_call.1} parent=63 // pred_region
          %474 = dma.done [#allocation6], 1024
        $region72: #{tpu_custom_call.1} parent=63 // pred_fallthru
          _
        // Predicated region
        $region73: #{tpu_custom_call.1} parent=63 // pred_check
          %p475 = pneg %p120
        $region74: #{tpu_custom_call.1} parent=63 // pred_check_branch
          %477 = sbr.rel (%p475) target = $region76
        $region75: #{tpu_custom_call.1} parent=63 // pred_region
          %478 = dma.done [#allocation6], 2048
        $region76: #{tpu_custom_call.1} parent=63 // pred_fallthru
          _
        // Predicated region
        $region77: #{tpu_custom_call.1} parent=63 // pred_check
          %p479 = pneg %p183
        $region78: #{tpu_custom_call.1} parent=63 // pred_check_branch
          %481 = sbr.rel (%p479) target = $region80
        $region79: #{tpu_custom_call.1} parent=63 // pred_region
          %482 = dma.done [#allocation9], 1024
        $region80: #{tpu_custom_call.1} parent=63 // pred_fallthru
          _
        // Predicated region
        $region81: #{tpu_custom_call.1} parent=63 // pred_check
          %p483 = pneg %p225
        $region82: #{tpu_custom_call.1} parent=63 // pred_check_branch
          %485 = sbr.rel (%p483) target = $region84
        $region83: #{tpu_custom_call.1} parent=63 // pred_region
          %486 = dma.done [#allocation9], 2048
        $region84: #{tpu_custom_call.1} parent=63 // pred_fallthru
          _
        %s487 = sand.u32 %s44, 1
        %s488 = scalar_lea.sflag [#allocation3], %s487
        %s489 = sand.u32 %s44, 1
        %s490 = smul.addr %s489, 64
        %s491 = scalar_lea.vmem [#allocation2], %s490
        %p492 = pneg %p57
        %p493 = pneg %p54
        %p494 = pneg %p78
        %p495 = pneg %p75
        %p496 = pneg %p99
        %p497 = pneg %p96
        %p498 = pneg %p120
        %p499 = pneg %p117
        %p500 = pneg %p141
        %p501 = pneg %p138
        %p502 = pneg %p162
        %p503 = pneg %p159
        %p504 = pneg %p183
        %p505 = pneg %p180
        %p506 = pneg %p204
        %p507 = pneg %p201
        %p508 = pneg %p225
        %p509 = pneg %p222
        %p510 = pneg %p246
        %p511 = pneg %p243
        %p512 = pneg %p267
        %p513 = pneg %p264
        %p514 = pneg %p293
        %p515 = pneg %p290
        %s516 = sand.u32 %s280, 1
        %s517 = scalar_lea.sflag [#allocation4], %s516
        %s518 = sand.u32 %s280, 1
        %s519 = smul.addr %s518, 128
        %s520 = scalar_lea.vmem [#allocation11], %s519
        %p521 = pneg %p319
        %p522 = pneg %p316
        %s523 = sand.u32 %s36, 1
        %s524 = scalar_lea.sflag [#allocation13], %s523
        %s525 = sand.u32 %s306, 1
        %s526 = smul.addr %s525, 256
        %s527 = scalar_lea.vmem [#allocation12], %s526
        %p528 = pneg %p345
        %p529 = pneg %p342
        %s530 = sand.u32 %s36, 1
        %s531 = scalar_lea.sflag [#allocation13], %s530
        %s532 = sand.u32 %s332, 1
        %s533 = smul.addr %s532, 256
        %s534 = scalar_lea.vmem [#allocation14], %s533
        %s535 = smul.u32 16, %s36
        %s536 = smul.u32 16, %s36
        %s537 = smul.u32 16, %s36
        %s538 = smul.u32 16, %s36
        %v540 = vld [vmem:[%s466] sm:$0xf]
        %v541 = vld [vmem:[%s466 + $0x4] sm:$0xf]
        %v542 = vld [vmem:[%s466 + $0x8] sm:$0xf]
        %v543 = vld [vmem:[%s466 + $0xc] sm:$0xf]
        %v544 = vld [vmem:[%s466 + $0x10] sm:$0xf]
        %v545 = vld [vmem:[%s466 + $0x14] sm:$0xf]
        %v546 = vld [vmem:[%s466 + $0x18] sm:$0xf]
        %v547 = vld [vmem:[%s466 + $0x1c] sm:$0xf]
        %v548 = vld [vmem:[%s466 + $0x20] sm:$0xf]
        %v549 = vld [vmem:[%s466 + $0x24] sm:$0xf]
        %v550 = vld [vmem:[%s466 + $0x28] sm:$0xf]
        %v551 = vld [vmem:[%s466 + $0x2c] sm:$0xf]
        %v552 = vld [vmem:[%s466 + $0x30] sm:$0xf]
        %v553 = vld [vmem:[%s466 + $0x34] sm:$0xf]
        %v554 = vld [vmem:[%s466 + $0x38] sm:$0xf]
        %v555 = vld [vmem:[%s466 + $0x3c] sm:$0xf]
        %v556 = vld [vmem:[#allocation5] sm:$0xf]
        %v557 = vld [vmem:[#allocation5 + $0x4] sm:$0xf]
        %v558 = vld [vmem:[#allocation5 + $0x8] sm:$0xf]
        %v559 = vld [vmem:[#allocation5 + $0xc] sm:$0xf]
        %v560 = vld [vmem:[#allocation5 + $0x10] sm:$0xf]
        %v561 = vld [vmem:[#allocation5 + $0x14] sm:$0xf]
        %v562 = vld [vmem:[#allocation5 + $0x18] sm:$0xf]
        %v563 = vld [vmem:[#allocation5 + $0x1c] sm:$0xf]
        %v564 = vld [vmem:[#allocation5 + $0x20] sm:$0xf]
        %v565 = vld [vmem:[#allocation5 + $0x24] sm:$0xf]
        %v566 = vld [vmem:[#allocation5 + $0x28] sm:$0xf]
        %v567 = vld [vmem:[#allocation5 + $0x2c] sm:$0xf]
        %v568 = vld [vmem:[#allocation5 + $0x30] sm:$0xf]
        %v569 = vld [vmem:[#allocation5 + $0x34] sm:$0xf]
        %v570 = vld [vmem:[#allocation5 + $0x38] sm:$0xf]
        %v571 = vld [vmem:[#allocation5 + $0x3c] sm:$0xf]
        %v572 = vld [vmem:[%s2] sm:$0x1]
        %v574 = vlaneseq
        %v575 = vshrl.u32 %v574, 7
        %v576 = vsub.s32 0, %v575
        %v577 = vrot.slane %v572, %v576
        %v595 = vunpack.c.l.b16 %v540
        %v596 = vunpack.c.l.b16 %v541
        %v597 = vunpack.c.l.b16 %v542
        %v598 = vunpack.c.l.b16 %v543
        %v599 = vunpack.c.l.b16 %v544
        %v600 = vunpack.c.l.b16 %v545
        %v601 = vunpack.c.l.b16 %v546
        %v602 = vunpack.c.l.b16 %v547
        %v603 = vunpack.c.l.b16 %v548
        %v604 = vunpack.c.l.b16 %v549
        %v605 = vunpack.c.l.b16 %v550
        %v606 = vunpack.c.l.b16 %v551
        %v607 = vunpack.c.l.b16 %v552
        %v608 = vunpack.c.l.b16 %v553
        %v609 = vunpack.c.l.b16 %v554
        %v610 = vunpack.c.l.b16 %v555
        %v611 = vpack.c.b16 %v596, %v595
        %v612 = vpack.c.b16 %v598, %v597
        %v613 = vpack.c.b16 %v600, %v599
        %v614 = vpack.c.b16 %v602, %v601
        %v615 = vpack.c.b16 %v604, %v603
        %v616 = vpack.c.b16 %v606, %v605
        %v617 = vpack.c.b16 %v608, %v607
        %v618 = vpack.c.b16 %v610, %v609
        %v643 = vunpack.c.l.b16 %v556
        %v644 = vunpack.c.l.b16 %v557
        %v645 = vunpack.c.l.b16 %v558
        %v646 = vunpack.c.l.b16 %v559
        %v647 = vunpack.c.l.b16 %v560
        %v648 = vunpack.c.l.b16 %v561
        %v649 = vunpack.c.l.b16 %v562
        %v650 = vunpack.c.l.b16 %v563
        %v651 = vunpack.c.l.b16 %v564
        %v652 = vunpack.c.l.b16 %v565
        %v653 = vunpack.c.l.b16 %v566
        %v654 = vunpack.c.l.b16 %v567
        %v655 = vunpack.c.l.b16 %v568
        %v656 = vunpack.c.l.b16 %v569
        %v657 = vunpack.c.l.b16 %v570
        %v658 = vunpack.c.l.b16 %v571
        %v659 = vpack.c.b16 %v644, %v643
        %v660 = vpack.c.b16 %v646, %v645
        %v661 = vpack.c.b16 %v648, %v647
        %v662 = vpack.c.b16 %v650, %v649
        %v663 = vpack.c.b16 %v652, %v651
        %v664 = vpack.c.b16 %v654, %v653
        %v665 = vpack.c.b16 %v656, %v655
        %v666 = vpack.c.b16 %v658, %v657
        %675 = vmatprep.subr.bf16.mxu0 0
        %676 = vmatpush1.bf16.msra.mxu0 %v659
        %677 = vmatprep.subr.bf16.mxu0 0
        %678 = vmatpush1.bf16.msra.mxu0 %v660
        %679 = vmatprep.subr.bf16.mxu0 0
        %680 = vmatpush1.bf16.msra.mxu0 %v661
        %681 = vmatprep.subr.bf16.mxu0 0
        %682 = vmatpush1.bf16.msra.mxu0 %v662
        %683 = vmatprep.subr.bf16.mxu0 0
        %684 = vmatpush1.bf16.msra.mxu0 %v663
        %685 = vmatprep.subr.bf16.mxu0 0
        %686 = vmatpush1.bf16.msra.mxu0 %v664
        %687 = vmatprep.subr.bf16.mxu0 0
        %688 = vmatpush1.bf16.msra.mxu0 %v665
        %689 = vmatprep.subr.bf16.mxu0 0
        %690 = vmatpush1.bf16.msra.mxu0 %v666
        %691 = vmatprep.subr.bf16.mxu0 0
        %692 = vmatpush1.bf16.msra.mxu0 0
        %693 = vmatprep.subr.bf16.mxu0 0
        %694 = vmatpush1.bf16.msra.mxu0 0
        %695 = vmatprep.subr.bf16.mxu0 0
        %696 = vmatpush1.bf16.msra.mxu0 0
        %697 = vmatprep.subr.bf16.mxu0 0
        %698 = vmatpush1.bf16.msra.mxu0 0
        %699 = vmatprep.subr.bf16.mxu0 0
        %700 = vmatpush1.bf16.msra.mxu0 0
        %701 = vmatprep.subr.bf16.mxu0 0
        %702 = vmatpush1.bf16.msra.mxu0 0
        %703 = vmatprep.subr.bf16.mxu0 0
        %704 = vmatpush1.bf16.msra.mxu0 0
        %705 = vmatprep.subr.bf16.mxu0 0
        %706 = vmatpush1.bf16.msra.mxu0 0
        %707 = vmatprep.mubr.bf16.mxu0 0
        %708 = vmatmul.mubr.bf16.gmra.mrb[0].mxu0 %v611
        %v709 = vpop.f32.mrb[0].mxu0
        %v710 = vadd.f32 %v577, %v709
        %v711 = vpop.f32.mrb[0].mxu0
        %v712 = vpop.f32.mrb[0].mxu0
        %v713 = vadd.f32 %v577, %v712
        %v714 = vpop.f32.mrb[0].mxu0
        %715 = vmatprep.mubr.bf16.mxu0 0
        %716 = vmatmul.mubr.bf16.gmra.mrb[0].mxu0 %v612
        %v717 = vpop.f32.mrb[0].mxu0
        %v718 = vadd.f32 %v577, %v717
        %v719 = vpop.f32.mrb[0].mxu0
        %v720 = vpop.f32.mrb[0].mxu0
        %v721 = vadd.f32 %v577, %v720
        %v722 = vpop.f32.mrb[0].mxu0
        %723 = vmatprep.mubr.bf16.mxu0 0
        %724 = vmatmul.mubr.bf16.gmra.mrb[0].mxu0 %v613
        %v725 = vpop.f32.mrb[0].mxu0
        %v726 = vadd.f32 %v577, %v725
        %v727 = vpop.f32.mrb[0].mxu0
        %v728 = vpop.f32.mrb[0].mxu0
        %v729 = vadd.f32 %v577, %v728
        %v730 = vpop.f32.mrb[0].mxu0
        %731 = vmatprep.mubr.bf16.mxu0 0
        %732 = vmatmul.mubr.bf16.gmra.mrb[0].mxu0 %v614
        %v733 = vpop.f32.mrb[0].mxu0
        %v734 = vadd.f32 %v577, %v733
        %v735 = vpop.f32.mrb[0].mxu0
        %v736 = vpop.f32.mrb[0].mxu0
        %v737 = vadd.f32 %v577, %v736
        %v738 = vpop.f32.mrb[0].mxu0
        %739 = vmatprep.mubr.bf16.mxu0 0
        %740 = vmatmul.mubr.bf16.gmra.mrb[0].mxu0 %v615
        %v741 = vpop.f32.mrb[0].mxu0
        %v742 = vadd.f32 %v577, %v741
        %v743 = vpop.f32.mrb[0].mxu0
        %v744 = vpop.f32.mrb[0].mxu0
        %v745 = vadd.f32 %v577, %v744
        %v746 = vpop.f32.mrb[0].mxu0
        %747 = vmatprep.mubr.bf16.mxu0 0
        %748 = vmatmul.mubr.bf16.gmra.mrb[0].mxu0 %v616
        %v749 = vpop.f32.mrb[0].mxu0
        %v750 = vadd.f32 %v577, %v749
        %v751 = vpop.f32.mrb[0].mxu0
        %v752 = vpop.f32.mrb[0].mxu0
        %v753 = vadd.f32 %v577, %v752
        %v754 = vpop.f32.mrb[0].mxu0
        %755 = vmatprep.mubr.bf16.mxu0 0
        %756 = vmatmul.mubr.bf16.gmra.mrb[0].mxu0 %v617
        %v757 = vpop.f32.mrb[0].mxu0
        %v758 = vadd.f32 %v577, %v757
        %v759 = vpop.f32.mrb[0].mxu0
        %v760 = vpop.f32.mrb[0].mxu0
        %v761 = vadd.f32 %v577, %v760
        %v762 = vpop.f32.mrb[0].mxu0
        %763 = vmatprep.mubr.bf16.mxu0 0
        %764 = vmatmul.mubr.bf16.gmra.mrb[0].mxu0 %v618
        %v765 = vpop.f32.mrb[0].mxu0
        %v766 = vadd.f32 %v577, %v765
        %v767 = vpop.f32.mrb[0].mxu0
        %v768 = vpop.f32.mrb[0].mxu0
        %v769 = vadd.f32 %v577, %v768
        %v770 = vpop.f32.mrb[0].mxu0
        %771 = vdwg.mxu0
        %v772 = vtanh.pop %v710
        %v773 = vtanh.pop %v713
        %v774 = vtanh.pop %v718
        %v775 = vtanh.pop %v721
        %v776 = vtanh.pop %v726
        %v777 = vtanh.pop %v729
        %v778 = vtanh.pop %v734
        %v779 = vtanh.pop %v737
        %v780 = vtanh.pop %v742
        %v781 = vtanh.pop %v745
        %v782 = vtanh.pop %v750
        %v783 = vtanh.pop %v753
        %v784 = vtanh.pop %v758
        %v785 = vtanh.pop %v761
        %v786 = vtanh.pop %v766
        %v787 = vtanh.pop %v769
        %v788 = vpack.c.bf16 %v773, %v772
        %v789 = vpack.c.bf16 %v775, %v774
        %v790 = vpack.c.bf16 %v777, %v776
        %v791 = vpack.c.bf16 %v779, %v778
        %v792 = vpack.c.bf16 %v781, %v780
        %v793 = vpack.c.bf16 %v783, %v782
        %v794 = vpack.c.bf16 %v785, %v784
        %v795 = vpack.c.bf16 %v787, %v786
        %v796 = vld [vmem:[#allocation7] sm:$0xff]
        %v797 = vld [vmem:[#allocation7 + $0x8] sm:$0xff]
        %v798 = vld [vmem:[#allocation7 + $0x10] sm:$0xff]
        %v799 = vld [vmem:[#allocation7 + $0x18] sm:$0xff]
        %v800 = vld [vmem:[#allocation7 + $0x20] sm:$0xff]
        %v801 = vld [vmem:[#allocation7 + $0x28] sm:$0xff]
        %v802 = vld [vmem:[#allocation7 + $0x30] sm:$0xff]
        %v803 = vld [vmem:[#allocation7 + $0x38] sm:$0xff]
        %v804 = vld [vmem:[#allocation7 + $0x40] sm:$0xff]
        %v805 = vld [vmem:[#allocation7 + $0x48] sm:$0xff]
        %v806 = vld [vmem:[#allocation7 + $0x50] sm:$0xff]
        %v807 = vld [vmem:[#allocation7 + $0x58] sm:$0xff]
        %v808 = vld [vmem:[#allocation7 + $0x60] sm:$0xff]
        %v809 = vld [vmem:[#allocation7 + $0x68] sm:$0xff]
        %v810 = vld [vmem:[#allocation7 + $0x70] sm:$0xff]
        %v811 = vld [vmem:[#allocation7 + $0x78] sm:$0xff]
        %v812 = vld [vmem:[%s4] sm:$0x3]
        %v814 = vlaneseq
        %v815 = vshrl.u32 %v814, 7
        %v816 = vsub.s32 0, %v815
        %v817 = vrot.slane %v812, %v816
        %v818 = vlaneseq
        %v819 = vshrl.u32 %v818, 7
        %v820 = vsub.s32 1, %v819
        %v821 = vrot.slane %v812, %v820
        %v840 = vunpack.c.l.b16 %v796
        %v841 = vunpack.c.h.b16 %v796
        %v842 = vunpack.c.l.b16 %v797
        %v843 = vunpack.c.h.b16 %v797
        %v844 = vunpack.c.l.b16 %v798
        %v845 = vunpack.c.h.b16 %v798
        %v846 = vunpack.c.l.b16 %v799
        %v847 = vunpack.c.h.b16 %v799
        %v848 = vunpack.c.l.b16 %v800
        %v849 = vunpack.c.h.b16 %v800
        %v850 = vunpack.c.l.b16 %v801
        %v851 = vunpack.c.h.b16 %v801
        %v852 = vunpack.c.l.b16 %v802
        %v853 = vunpack.c.h.b16 %v802
        %v854 = vunpack.c.l.b16 %v803
        %v855 = vunpack.c.h.b16 %v803
        %v856 = vunpack.c.l.b16 %v804
        %v857 = vunpack.c.h.b16 %v804
        %v858 = vunpack.c.l.b16 %v805
        %v859 = vunpack.c.h.b16 %v805
        %v860 = vunpack.c.l.b16 %v806
        %v861 = vunpack.c.h.b16 %v806
        %v862 = vunpack.c.l.b16 %v807
        %v863 = vunpack.c.h.b16 %v807
        %v864 = vunpack.c.l.b16 %v808
        %v865 = vunpack.c.h.b16 %v808
        %v866 = vunpack.c.l.b16 %v809
        %v867 = vunpack.c.h.b16 %v809
        %v868 = vunpack.c.l.b16 %v810
        %v869 = vunpack.c.h.b16 %v810
        %v870 = vunpack.c.l.b16 %v811
        %v871 = vunpack.c.h.b16 %v811
        %v872 = vpack.c.b16 %v842, %v840
        %v873 = vpack.c.b16 %v843, %v841
        %v874 = vpack.c.b16 %v846, %v844
        %v875 = vpack.c.b16 %v847, %v845
        %v876 = vpack.c.b16 %v850, %v848
        %v877 = vpack.c.b16 %v851, %v849
        %v878 = vpack.c.b16 %v854, %v852
        %v879 = vpack.c.b16 %v855, %v853
        %v880 = vpack.c.b16 %v858, %v856
        %v881 = vpack.c.b16 %v859, %v857
        %v882 = vpack.c.b16 %v862, %v860
        %v883 = vpack.c.b16 %v863, %v861
        %v884 = vpack.c.b16 %v866, %v864
        %v885 = vpack.c.b16 %v867, %v865
        %v886 = vpack.c.b16 %v870, %v868
        %v887 = vpack.c.b16 %v871, %v869
        %904 = vmatprep.subr.bf16.mxu0 %v873
        %905 = vmatpush1.bf16.msra.mxu0 %v872
        %906 = vmatprep.subr.bf16.mxu0 %v875
        %907 = vmatpush1.bf16.msra.mxu0 %v874
        %908 = vmatprep.subr.bf16.mxu0 %v877
        %909 = vmatpush1.bf16.msra.mxu0 %v876
        %910 = vmatprep.subr.bf16.mxu0 %v879
        %911 = vmatpush1.bf16.msra.mxu0 %v878
        %912 = vmatprep.subr.bf16.mxu0 %v881
        %913 = vmatpush1.bf16.msra.mxu0 %v880
        %914 = vmatprep.subr.bf16.mxu0 %v883
        %915 = vmatpush1.bf16.msra.mxu0 %v882
        %916 = vmatprep.subr.bf16.mxu0 %v885
        %917 = vmatpush1.bf16.msra.mxu0 %v884
        %918 = vmatprep.subr.bf16.mxu0 %v887
        %919 = vmatpush1.bf16.msra.mxu0 %v886
        %920 = vmatprep.subr.bf16.mxu0 0
        %921 = vmatpush1.bf16.msra.mxu0 0
        %922 = vmatprep.subr.bf16.mxu0 0
        %923 = vmatpush1.bf16.msra.mxu0 0
        %924 = vmatprep.subr.bf16.mxu0 0
        %925 = vmatpush1.bf16.msra.mxu0 0
        %926 = vmatprep.subr.bf16.mxu0 0
        %927 = vmatpush1.bf16.msra.mxu0 0
        %928 = vmatprep.subr.bf16.mxu0 0
        %929 = vmatpush1.bf16.msra.mxu0 0
        %930 = vmatprep.subr.bf16.mxu0 0
        %931 = vmatpush1.bf16.msra.mxu0 0
        %932 = vmatprep.subr.bf16.mxu0 0
        %933 = vmatpush1.bf16.msra.mxu0 0
        %934 = vmatprep.subr.bf16.mxu0 0
        %935 = vmatpush1.bf16.msra.mxu0 0
        %936 = vmatprep.mubr.bf16.mxu0 0
        %937 = vmatmul.mubr.bf16.gmra.mrb[0].mxu0 %v788
        %v938 = vpop.f32.mrb[0].mxu0
        %v939 = vadd.f32 %v817, %v938
        %v940 = vpop.f32.mrb[0].mxu0
        %v941 = vadd.f32 %v821, %v940
        %v942 = vpop.f32.mrb[0].mxu0
        %v943 = vadd.f32 %v817, %v942
        %v944 = vpop.f32.mrb[0].mxu0
        %v945 = vadd.f32 %v821, %v944
        %946 = vmatprep.mubr.bf16.mxu0 0
        %947 = vmatmul.mubr.bf16.gmra.mrb[0].mxu0 %v789
        %v948 = vpop.f32.mrb[0].mxu0
        %v949 = vadd.f32 %v817, %v948
        %v950 = vpop.f32.mrb[0].mxu0
        %v951 = vadd.f32 %v821, %v950
        %v952 = vpop.f32.mrb[0].mxu0
        %v953 = vadd.f32 %v817, %v952
        %v954 = vpop.f32.mrb[0].mxu0
        %v955 = vadd.f32 %v821, %v954
        %956 = vmatprep.mubr.bf16.mxu0 0
        %957 = vmatmul.mubr.bf16.gmra.mrb[0].mxu0 %v790
        %v958 = vpop.f32.mrb[0].mxu0
        %v959 = vadd.f32 %v817, %v958
        %v960 = vpop.f32.mrb[0].mxu0
        %v961 = vadd.f32 %v821, %v960
        %v962 = vpop.f32.mrb[0].mxu0
        %v963 = vadd.f32 %v817, %v962
        %v964 = vpop.f32.mrb[0].mxu0
        %v965 = vadd.f32 %v821, %v964
        %966 = vmatprep.mubr.bf16.mxu0 0
        %967 = vmatmul.mubr.bf16.gmra.mrb[0].mxu0 %v791
        %v968 = vpop.f32.mrb[0].mxu0
        %v969 = vadd.f32 %v817, %v968
        %v970 = vpop.f32.mrb[0].mxu0
        %v971 = vadd.f32 %v821, %v970
        %v972 = vpop.f32.mrb[0].mxu0
        %v973 = vadd.f32 %v817, %v972
        %v974 = vpop.f32.mrb[0].mxu0
        %v975 = vadd.f32 %v821, %v974
        %976 = vmatprep.mubr.bf16.mxu0 0
        %977 = vmatmul.mubr.bf16.gmra.mrb[0].mxu0 %v792
        %v978 = vpop.f32.mrb[0].mxu0
        %v979 = vadd.f32 %v817, %v978
        %v980 = vpop.f32.mrb[0].mxu0
        %v981 = vadd.f32 %v821, %v980
        %v982 = vpop.f32.mrb[0].mxu0
        %v983 = vadd.f32 %v817, %v982
        %v984 = vpop.f32.mrb[0].mxu0
        %v985 = vadd.f32 %v821, %v984
        %986 = vmatprep.mubr.bf16.mxu0 0
        %987 = vmatmul.mubr.bf16.gmra.mrb[0].mxu0 %v793
        %v988 = vpop.f32.mrb[0].mxu0
        %v989 = vadd.f32 %v817, %v988
        %v990 = vpop.f32.mrb[0].mxu0
        %v991 = vadd.f32 %v821, %v990
        %v992 = vpop.f32.mrb[0].mxu0
        %v993 = vadd.f32 %v817, %v992
        %v994 = vpop.f32.mrb[0].mxu0
        %v995 = vadd.f32 %v821, %v994
        %996 = vmatprep.mubr.bf16.mxu0 0
        %997 = vmatmul.mubr.bf16.gmra.mrb[0].mxu0 %v794
        %v998 = vpop.f32.mrb[0].mxu0
        %v999 = vadd.f32 %v817, %v998
        %v1000 = vpop.f32.mrb[0].mxu0
        %v1001 = vadd.f32 %v821, %v1000
        %v1002 = vpop.f32.mrb[0].mxu0
        %v1003 = vadd.f32 %v817, %v1002
        %v1004 = vpop.f32.mrb[0].mxu0
        %v1005 = vadd.f32 %v821, %v1004
        %1006 = vmatprep.mubr.bf16.mxu0 0
        %1007 = vmatmul.mubr.bf16.gmra.mrb[0].mxu0 %v795
        %v1008 = vpop.f32.mrb[0].mxu0
        %v1009 = vadd.f32 %v817, %v1008
        %v1010 = vpop.f32.mrb[0].mxu0
        %v1011 = vadd.f32 %v821, %v1010
        %v1012 = vpop.f32.mrb[0].mxu0
        %v1013 = vadd.f32 %v817, %v1012
        %v1014 = vpop.f32.mrb[0].mxu0
        %v1015 = vadd.f32 %v821, %v1014
        %1016 = vdwg.mxu0
        %v1017 = vmul.f32 %v941, 0.5
        %v1018 = vmul.f32 %v945, 0.5
        %v1019 = vmul.f32 %v951, 0.5
        %v1020 = vmul.f32 %v955, 0.5
        %v1021 = vmul.f32 %v961, 0.5
        %v1022 = vmul.f32 %v965, 0.5
        %v1023 = vmul.f32 %v971, 0.5
        %v1024 = vmul.f32 %v975, 0.5
        %v1025 = vmul.f32 %v981, 0.5
        %v1026 = vmul.f32 %v985, 0.5
        %v1027 = vmul.f32 %v991, 0.5
        %v1028 = vmul.f32 %v995, 0.5
        %v1029 = vmul.f32 %v1001, 0.5
        %v1030 = vmul.f32 %v1005, 0.5
        %v1031 = vmul.f32 %v1011, 0.5
        %v1032 = vmul.f32 %v1015, 0.5
        %v1033 = vmul.f32 %v1017, 1.442695
        %v1034 = vpow.pop %v1033
        %v1035 = vmul.f32 %v1018, 1.442695
        %v1036 = vpow.pop %v1035
        %v1037 = vmul.f32 %v1019, 1.442695
        %v1038 = vpow.pop %v1037
        %v1039 = vmul.f32 %v1020, 1.442695
        %v1040 = vpow.pop %v1039
        %v1041 = vmul.f32 %v1021, 1.442695
        %v1042 = vpow.pop %v1041
        %v1043 = vmul.f32 %v1022, 1.442695
        %v1044 = vpow.pop %v1043
        %v1045 = vmul.f32 %v1023, 1.442695
        %v1046 = vpow.pop %v1045
        %v1047 = vmul.f32 %v1024, 1.442695
        %v1048 = vpow.pop %v1047
        %v1049 = vmul.f32 %v1025, 1.442695
        %v1050 = vpow.pop %v1049
        %v1051 = vmul.f32 %v1026, 1.442695
        %v1052 = vpow.pop %v1051
        %v1053 = vmul.f32 %v1027, 1.442695
        %v1054 = vpow.pop %v1053
        %v1055 = vmul.f32 %v1028, 1.442695
        %v1056 = vpow.pop %v1055
        %v1057 = vmul.f32 %v1029, 1.442695
        %v1058 = vpow.pop %v1057
        %v1059 = vmul.f32 %v1030, 1.442695
        %v1060 = vpow.pop %v1059
        %v1061 = vmul.f32 %v1031, 1.442695
        %v1062 = vpow.pop %v1061
        %v1063 = vmul.f32 %v1032, 1.442695
        %v1064 = vpow.pop %v1063
        %v1065 = vld [vmem:[%s5] sm:$0x1]
        %v1067 = vlaneseq
        %v1068 = vshrl.u32 %v1067, 7
        %v1069 = vsub.s32 0, %v1068
        %v1070 = vrot.slane %v1065, %v1069
        %v1072 = vmul.f32 %v1034, %v1070
        %v1073 = vmul.f32 %v1036, %v1070
        %v1074 = vmul.f32 %v1038, %v1070
        %v1075 = vmul.f32 %v1040, %v1070
        %v1076 = vmul.f32 %v1042, %v1070
        %v1077 = vmul.f32 %v1044, %v1070
        %v1078 = vmul.f32 %v1046, %v1070
        %v1079 = vmul.f32 %v1048, %v1070
        %v1080 = vmul.f32 %v1050, %v1070
        %v1081 = vmul.f32 %v1052, %v1070
        %v1082 = vmul.f32 %v1054, %v1070
        %v1083 = vmul.f32 %v1056, %v1070
        %v1084 = vmul.f32 %v1058, %v1070
        %v1085 = vmul.f32 %v1060, %v1070
        %v1086 = vmul.f32 %v1062, %v1070
        %v1087 = vmul.f32 %v1064, %v1070
        %v1088 = vadd.f32 %v939, %v1072
        %v1089 = vadd.f32 %v943, %v1073
        %v1090 = vadd.f32 %v949, %v1074
        %v1091 = vadd.f32 %v953, %v1075
        %v1092 = vadd.f32 %v959, %v1076
        %v1093 = vadd.f32 %v963, %v1077
        %v1094 = vadd.f32 %v969, %v1078
        %v1095 = vadd.f32 %v973, %v1079
        %v1096 = vadd.f32 %v979, %v1080
        %v1097 = vadd.f32 %v983, %v1081
        %v1098 = vadd.f32 %v989, %v1082
        %v1099 = vadd.f32 %v993, %v1083
        %v1100 = vadd.f32 %v999, %v1084
        %v1101 = vadd.f32 %v1003, %v1085
        %v1102 = vadd.f32 %v1009, %v1086
        %v1103 = vadd.f32 %v1013, %v1087
        %v1104 = vpack.c.bf16 %v1089, %v1088
        %v1105 = vpack.c.bf16 %v1091, %v1090
        %v1106 = vpack.c.bf16 %v1093, %v1092
        %v1107 = vpack.c.bf16 %v1095, %v1094
        %v1108 = vpack.c.bf16 %v1097, %v1096
        %v1109 = vpack.c.bf16 %v1099, %v1098
        %v1110 = vpack.c.bf16 %v1101, %v1100
        %v1111 = vpack.c.bf16 %v1103, %v1102
        %v1112 = vld [vmem:[#allocation8] sm:$0xf]
        %v1113 = vld [vmem:[#allocation8 + $0x4] sm:$0xf]
        %v1114 = vld [vmem:[#allocation8 + $0x8] sm:$0xf]
        %v1115 = vld [vmem:[#allocation8 + $0xc] sm:$0xf]
        %v1116 = vld [vmem:[#allocation8 + $0x10] sm:$0xf]
        %v1117 = vld [vmem:[#allocation8 + $0x14] sm:$0xf]
        %v1118 = vld [vmem:[#allocation8 + $0x18] sm:$0xf]
        %v1119 = vld [vmem:[#allocation8 + $0x1c] sm:$0xf]
        %v1120 = vld [vmem:[#allocation8 + $0x20] sm:$0xf]
        %v1121 = vld [vmem:[#allocation8 + $0x24] sm:$0xf]
        %v1122 = vld [vmem:[#allocation8 + $0x28] sm:$0xf]
        %v1123 = vld [vmem:[#allocation8 + $0x2c] sm:$0xf]
        %v1124 = vld [vmem:[#allocation8 + $0x30] sm:$0xf]
        %v1125 = vld [vmem:[#allocation8 + $0x34] sm:$0xf]
        %v1126 = vld [vmem:[#allocation8 + $0x38] sm:$0xf]
        %v1127 = vld [vmem:[#allocation8 + $0x3c] sm:$0xf]
        %v1128 = vld [vmem:[%s7] sm:$0x1]
        %v1130 = vlaneseq
        %v1131 = vshrl.u32 %v1130, 7
        %v1132 = vsub.s32 0, %v1131
        %v1133 = vrot.slane %v1128, %v1132
        %v1151 = vunpack.c.l.b16 %v1112
        %v1152 = vunpack.c.l.b16 %v1113
        %v1153 = vunpack.c.l.b16 %v1114
        %v1154 = vunpack.c.l.b16 %v1115
        %v1155 = vunpack.c.l.b16 %v1116
        %v1156 = vunpack.c.l.b16 %v1117
        %v1157 = vunpack.c.l.b16 %v1118
        %v1158 = vunpack.c.l.b16 %v1119
        %v1159 = vunpack.c.l.b16 %v1120
        %v1160 = vunpack.c.l.b16 %v1121
        %v1161 = vunpack.c.l.b16 %v1122
        %v1162 = vunpack.c.l.b16 %v1123
        %v1163 = vunpack.c.l.b16 %v1124
        %v1164 = vunpack.c.l.b16 %v1125
        %v1165 = vunpack.c.l.b16 %v1126
        %v1166 = vunpack.c.l.b16 %v1127
        %v1167 = vpack.c.b16 %v1152, %v1151
        %v1168 = vpack.c.b16 %v1154, %v1153
        %v1169 = vpack.c.b16 %v1156, %v1155
        %v1170 = vpack.c.b16 %v1158, %v1157
        %v1171 = vpack.c.b16 %v1160, %v1159
        %v1172 = vpack.c.b16 %v1162, %v1161
        %v1173 = vpack.c.b16 %v1164, %v1163
        %v1174 = vpack.c.b16 %v1166, %v1165
        %1183 = vmatprep.subr.bf16.mxu0 0
        %1184 = vmatpush1.bf16.msra.mxu0 %v1167
        %1185 = vmatprep.subr.bf16.mxu0 0
        %1186 = vmatpush1.bf16.msra.mxu0 %v1168
        %1187 = vmatprep.subr.bf16.mxu0 0
        %1188 = vmatpush1.bf16.msra.mxu0 %v1169
        %1189 = vmatprep.subr.bf16.mxu0 0
        %1190 = vmatpush1.bf16.msra.mxu0 %v1170
        %1191 = vmatprep.subr.bf16.mxu0 0
        %1192 = vmatpush1.bf16.msra.mxu0 %v1171
        %1193 = vmatprep.subr.bf16.mxu0 0
        %1194 = vmatpush1.bf16.msra.mxu0 %v1172
        %1195 = vmatprep.subr.bf16.mxu0 0
        %1196 = vmatpush1.bf16.msra.mxu0 %v1173
        %1197 = vmatprep.subr.bf16.mxu0 0
        %1198 = vmatpush1.bf16.msra.mxu0 %v1174
        %1199 = vmatprep.subr.bf16.mxu0 0
        %1200 = vmatpush1.bf16.msra.mxu0 0
        %1201 = vmatprep.subr.bf16.mxu0 0
        %1202 = vmatpush1.bf16.msra.mxu0 0
        %1203 = vmatprep.subr.bf16.mxu0 0
        %1204 = vmatpush1.bf16.msra.mxu0 0
        %1205 = vmatprep.subr.bf16.mxu0 0
        %1206 = vmatpush1.bf16.msra.mxu0 0
        %1207 = vmatprep.subr.bf16.mxu0 0
        %1208 = vmatpush1.bf16.msra.mxu0 0
        %1209 = vmatprep.subr.bf16.mxu0 0
        %1210 = vmatpush1.bf16.msra.mxu0 0
        %1211 = vmatprep.subr.bf16.mxu0 0
        %1212 = vmatpush1.bf16.msra.mxu0 0
        %1213 = vmatprep.subr.bf16.mxu0 0
        %1214 = vmatpush1.bf16.msra.mxu0 0
        %1215 = vmatprep.mubr.bf16.mxu0 0
        %1216 = vmatmul.mubr.bf16.gmra.mrb[0].mxu0 %v1104
        %v1217 = vpop.f32.mrb[0].mxu0
        %v1218 = vadd.f32 %v1133, %v1217
        %v1219 = vpop.f32.mrb[0].mxu0
        %v1220 = vpop.f32.mrb[0].mxu0
        %v1221 = vadd.f32 %v1133, %v1220
        %v1222 = vpop.f32.mrb[0].mxu0
        %1223 = vmatprep.mubr.bf16.mxu0 0
        %1224 = vmatmul.mubr.bf16.gmra.mrb[0].mxu0 %v1105
        %v1225 = vpop.f32.mrb[0].mxu0
        %v1226 = vadd.f32 %v1133, %v1225
        %v1227 = vpop.f32.mrb[0].mxu0
        %v1228 = vpop.f32.mrb[0].mxu0
        %v1229 = vadd.f32 %v1133, %v1228
        %v1230 = vpop.f32.mrb[0].mxu0
        %1231 = vmatprep.mubr.bf16.mxu0 0
        %1232 = vmatmul.mubr.bf16.gmra.mrb[0].mxu0 %v1106
        %v1233 = vpop.f32.mrb[0].mxu0
        %v1234 = vadd.f32 %v1133, %v1233
        %v1235 = vpop.f32.mrb[0].mxu0
        %v1236 = vpop.f32.mrb[0].mxu0
        %v1237 = vadd.f32 %v1133, %v1236
        %v1238 = vpop.f32.mrb[0].mxu0
        %1239 = vmatprep.mubr.bf16.mxu0 0
        %1240 = vmatmul.mubr.bf16.gmra.mrb[0].mxu0 %v1107
        %v1241 = vpop.f32.mrb[0].mxu0
        %v1242 = vadd.f32 %v1133, %v1241
        %v1243 = vpop.f32.mrb[0].mxu0
        %v1244 = vpop.f32.mrb[0].mxu0
        %v1245 = vadd.f32 %v1133, %v1244
        %v1246 = vpop.f32.mrb[0].mxu0
        %1247 = vmatprep.mubr.bf16.mxu0 0
        %1248 = vmatmul.mubr.bf16.gmra.mrb[0].mxu0 %v1108
        %v1249 = vpop.f32.mrb[0].mxu0
        %v1250 = vadd.f32 %v1133, %v1249
        %v1251 = vpop.f32.mrb[0].mxu0
        %v1252 = vpop.f32.mrb[0].mxu0
        %v1253 = vadd.f32 %v1133, %v1252
        %v1254 = vpop.f32.mrb[0].mxu0
        %1255 = vmatprep.mubr.bf16.mxu0 0
        %1256 = vmatmul.mubr.bf16.gmra.mrb[0].mxu0 %v1109
        %v1257 = vpop.f32.mrb[0].mxu0
        %v1258 = vadd.f32 %v1133, %v1257
        %v1259 = vpop.f32.mrb[0].mxu0
        %v1260 = vpop.f32.mrb[0].mxu0
        %v1261 = vadd.f32 %v1133, %v1260
        %v1262 = vpop.f32.mrb[0].mxu0
        %1263 = vmatprep.mubr.bf16.mxu0 0
        %1264 = vmatmul.mubr.bf16.gmra.mrb[0].mxu0 %v1110
        %v1265 = vpop.f32.mrb[0].mxu0
        %v1266 = vadd.f32 %v1133, %v1265
        %v1267 = vpop.f32.mrb[0].mxu0
        %v1268 = vpop.f32.mrb[0].mxu0
        %v1269 = vadd.f32 %v1133, %v1268
        %v1270 = vpop.f32.mrb[0].mxu0
        %1271 = vmatprep.mubr.bf16.mxu0 0
        %1272 = vmatmul.mubr.bf16.gmra.mrb[0].mxu0 %v1111
        %v1273 = vpop.f32.mrb[0].mxu0
        %v1274 = vadd.f32 %v1133, %v1273
        %v1275 = vpop.f32.mrb[0].mxu0
        %v1276 = vpop.f32.mrb[0].mxu0
        %v1277 = vadd.f32 %v1133, %v1276
        %v1278 = vpop.f32.mrb[0].mxu0
        %1279 = vdwg.mxu0
        %v1280 = vtanh.pop %v1218
        %v1281 = vtanh.pop %v1221
        %v1282 = vtanh.pop %v1226
        %v1283 = vtanh.pop %v1229
        %v1284 = vtanh.pop %v1234
        %v1285 = vtanh.pop %v1237
        %v1286 = vtanh.pop %v1242
        %v1287 = vtanh.pop %v1245
        %v1288 = vtanh.pop %v1250
        %v1289 = vtanh.pop %v1253
        %v1290 = vtanh.pop %v1258
        %v1291 = vtanh.pop %v1261
        %v1292 = vtanh.pop %v1266
        %v1293 = vtanh.pop %v1269
        %v1294 = vtanh.pop %v1274
        %v1295 = vtanh.pop %v1277
        %v1296 = vpack.c.bf16 %v1281, %v1280
        %v1297 = vpack.c.bf16 %v1283, %v1282
        %v1298 = vpack.c.bf16 %v1285, %v1284
        %v1299 = vpack.c.bf16 %v1287, %v1286
        %v1300 = vpack.c.bf16 %v1289, %v1288
        %v1301 = vpack.c.bf16 %v1291, %v1290
        %v1302 = vpack.c.bf16 %v1293, %v1292
        %v1303 = vpack.c.bf16 %v1295, %v1294
        %v1304 = vld [vmem:[#allocation10] sm:$0xff]
        %v1305 = vld [vmem:[#allocation10 + $0x8] sm:$0xff]
        %v1306 = vld [vmem:[#allocation10 + $0x10] sm:$0xff]
        %v1307 = vld [vmem:[#allocation10 + $0x18] sm:$0xff]
        %v1308 = vld [vmem:[#allocation10 + $0x20] sm:$0xff]
        %v1309 = vld [vmem:[#allocation10 + $0x28] sm:$0xff]
        %v1310 = vld [vmem:[#allocation10 + $0x30] sm:$0xff]
        %v1311 = vld [vmem:[#allocation10 + $0x38] sm:$0xff]
        %v1312 = vld [vmem:[#allocation10 + $0x40] sm:$0xff]
        %v1313 = vld [vmem:[#allocation10 + $0x48] sm:$0xff]
        %v1314 = vld [vmem:[#allocation10 + $0x50] sm:$0xff]
        %v1315 = vld [vmem:[#allocation10 + $0x58] sm:$0xff]
        %v1316 = vld [vmem:[#allocation10 + $0x60] sm:$0xff]
        %v1317 = vld [vmem:[#allocation10 + $0x68] sm:$0xff]
        %v1318 = vld [vmem:[#allocation10 + $0x70] sm:$0xff]
        %v1319 = vld [vmem:[#allocation10 + $0x78] sm:$0xff]
        %v1320 = vld [vmem:[%s9] sm:$0x3]
        %v1322 = vlaneseq
        %v1323 = vshrl.u32 %v1322, 7
        %v1324 = vsub.s32 0, %v1323
        %v1325 = vrot.slane %v1320, %v1324
        %v1326 = vlaneseq
        %v1327 = vshrl.u32 %v1326, 7
        %v1328 = vsub.s32 1, %v1327
        %v1329 = vrot.slane %v1320, %v1328
        %v1348 = vunpack.c.l.b16 %v1304
        %v1349 = vunpack.c.h.b16 %v1304
        %v1350 = vunpack.c.l.b16 %v1305
        %v1351 = vunpack.c.h.b16 %v1305
        %v1352 = vunpack.c.l.b16 %v1306
        %v1353 = vunpack.c.h.b16 %v1306
        %v1354 = vunpack.c.l.b16 %v1307
        %v1355 = vunpack.c.h.b16 %v1307
        %v1356 = vunpack.c.l.b16 %v1308
        %v1357 = vunpack.c.h.b16 %v1308
        %v1358 = vunpack.c.l.b16 %v1309
        %v1359 = vunpack.c.h.b16 %v1309
        %v1360 = vunpack.c.l.b16 %v1310
        %v1361 = vunpack.c.h.b16 %v1310
        %v1362 = vunpack.c.l.b16 %v1311
        %v1363 = vunpack.c.h.b16 %v1311
        %v1364 = vunpack.c.l.b16 %v1312
        %v1365 = vunpack.c.h.b16 %v1312
        %v1366 = vunpack.c.l.b16 %v1313
        %v1367 = vunpack.c.h.b16 %v1313
        %v1368 = vunpack.c.l.b16 %v1314
        %v1369 = vunpack.c.h.b16 %v1314
        %v1370 = vunpack.c.l.b16 %v1315
        %v1371 = vunpack.c.h.b16 %v1315
        %v1372 = vunpack.c.l.b16 %v1316
        %v1373 = vunpack.c.h.b16 %v1316
        %v1374 = vunpack.c.l.b16 %v1317
        %v1375 = vunpack.c.h.b16 %v1317
        %v1376 = vunpack.c.l.b16 %v1318
        %v1377 = vunpack.c.h.b16 %v1318
        %v1378 = vunpack.c.l.b16 %v1319
        %v1379 = vunpack.c.h.b16 %v1319
        %v1380 = vpack.c.b16 %v1350, %v1348
        %v1381 = vpack.c.b16 %v1351, %v1349
        %v1382 = vpack.c.b16 %v1354, %v1352
        %v1383 = vpack.c.b16 %v1355, %v1353
        %v1384 = vpack.c.b16 %v1358, %v1356
        %v1385 = vpack.c.b16 %v1359, %v1357
        %v1386 = vpack.c.b16 %v1362, %v1360
        %v1387 = vpack.c.b16 %v1363, %v1361
        %v1388 = vpack.c.b16 %v1366, %v1364
        %v1389 = vpack.c.b16 %v1367, %v1365
        %v1390 = vpack.c.b16 %v1370, %v1368
        %v1391 = vpack.c.b16 %v1371, %v1369
        %v1392 = vpack.c.b16 %v1374, %v1372
        %v1393 = vpack.c.b16 %v1375, %v1373
        %v1394 = vpack.c.b16 %v1378, %v1376
        %v1395 = vpack.c.b16 %v1379, %v1377
        %1412 = vmatprep.subr.bf16.mxu0 %v1381
        %1413 = vmatpush1.bf16.msra.mxu0 %v1380
        %1414 = vmatprep.subr.bf16.mxu0 %v1383
        %1415 = vmatpush1.bf16.msra.mxu0 %v1382
        %1416 = vmatprep.subr.bf16.mxu0 %v1385
        %1417 = vmatpush1.bf16.msra.mxu0 %v1384
        %1418 = vmatprep.subr.bf16.mxu0 %v1387
        %1419 = vmatpush1.bf16.msra.mxu0 %v1386
        %1420 = vmatprep.subr.bf16.mxu0 %v1389
        %1421 = vmatpush1.bf16.msra.mxu0 %v1388
        %1422 = vmatprep.subr.bf16.mxu0 %v1391
        %1423 = vmatpush1.bf16.msra.mxu0 %v1390
        %1424 = vmatprep.subr.bf16.mxu0 %v1393
        %1425 = vmatpush1.bf16.msra.mxu0 %v1392
        %1426 = vmatprep.subr.bf16.mxu0 %v1395
        %1427 = vmatpush1.bf16.msra.mxu0 %v1394
        %1428 = vmatprep.subr.bf16.mxu0 0
        %1429 = vmatpush1.bf16.msra.mxu0 0
        %1430 = vmatprep.subr.bf16.mxu0 0
        %1431 = vmatpush1.bf16.msra.mxu0 0
        %1432 = vmatprep.subr.bf16.mxu0 0
        %1433 = vmatpush1.bf16.msra.mxu0 0
        %1434 = vmatprep.subr.bf16.mxu0 0
        %1435 = vmatpush1.bf16.msra.mxu0 0
        %1436 = vmatprep.subr.bf16.mxu0 0
        %1437 = vmatpush1.bf16.msra.mxu0 0
        %1438 = vmatprep.subr.bf16.mxu0 0
        %1439 = vmatpush1.bf16.msra.mxu0 0
        %1440 = vmatprep.subr.bf16.mxu0 0
        %1441 = vmatpush1.bf16.msra.mxu0 0
        %1442 = vmatprep.subr.bf16.mxu0 0
        %1443 = vmatpush1.bf16.msra.mxu0 0
        %1444 = vmatprep.mubr.bf16.mxu0 0
        %1445 = vmatmul.mubr.bf16.gmra.mrb[0].mxu0 %v1296
        %v1446 = vpop.f32.mrb[0].mxu0
        %v1447 = vadd.f32 %v1325, %v1446
        %v1448 = vpop.f32.mrb[0].mxu0
        %v1449 = vadd.f32 %v1329, %v1448
        %v1450 = vpop.f32.mrb[0].mxu0
        %v1451 = vadd.f32 %v1325, %v1450
        %v1452 = vpop.f32.mrb[0].mxu0
        %v1453 = vadd.f32 %v1329, %v1452
        %1454 = vmatprep.mubr.bf16.mxu0 0
        %1455 = vmatmul.mubr.bf16.gmra.mrb[0].mxu0 %v1297
        %v1456 = vpop.f32.mrb[0].mxu0
        %v1457 = vadd.f32 %v1325, %v1456
        %v1458 = vpop.f32.mrb[0].mxu0
        %v1459 = vadd.f32 %v1329, %v1458
        %v1460 = vpop.f32.mrb[0].mxu0
        %v1461 = vadd.f32 %v1325, %v1460
        %v1462 = vpop.f32.mrb[0].mxu0
        %v1463 = vadd.f32 %v1329, %v1462
        %1464 = vmatprep.mubr.bf16.mxu0 0
        %1465 = vmatmul.mubr.bf16.gmra.mrb[0].mxu0 %v1298
        %v1466 = vpop.f32.mrb[0].mxu0
        %v1467 = vadd.f32 %v1325, %v1466
        %v1468 = vpop.f32.mrb[0].mxu0
        %v1469 = vadd.f32 %v1329, %v1468
        %v1470 = vpop.f32.mrb[0].mxu0
        %v1471 = vadd.f32 %v1325, %v1470
        %v1472 = vpop.f32.mrb[0].mxu0
        %v1473 = vadd.f32 %v1329, %v1472
        %1474 = vmatprep.mubr.bf16.mxu0 0
        %1475 = vmatmul.mubr.bf16.gmra.mrb[0].mxu0 %v1299
        %v1476 = vpop.f32.mrb[0].mxu0
        %v1477 = vadd.f32 %v1325, %v1476
        %v1478 = vpop.f32.mrb[0].mxu0
        %v1479 = vadd.f32 %v1329, %v1478
        %v1480 = vpop.f32.mrb[0].mxu0
        %v1481 = vadd.f32 %v1325, %v1480
        %v1482 = vpop.f32.mrb[0].mxu0
        %v1483 = vadd.f32 %v1329, %v1482
        %1484 = vmatprep.mubr.bf16.mxu0 0
        %1485 = vmatmul.mubr.bf16.gmra.mrb[0].mxu0 %v1300
        %v1486 = vpop.f32.mrb[0].mxu0
        %v1487 = vadd.f32 %v1325, %v1486
        %v1488 = vpop.f32.mrb[0].mxu0
        %v1489 = vadd.f32 %v1329, %v1488
        %v1490 = vpop.f32.mrb[0].mxu0
        %v1491 = vadd.f32 %v1325, %v1490
        %v1492 = vpop.f32.mrb[0].mxu0
        %v1493 = vadd.f32 %v1329, %v1492
        %1494 = vmatprep.mubr.bf16.mxu0 0
        %1495 = vmatmul.mubr.bf16.gmra.mrb[0].mxu0 %v1301
        %v1496 = vpop.f32.mrb[0].mxu0
        %v1497 = vadd.f32 %v1325, %v1496
        %v1498 = vpop.f32.mrb[0].mxu0
        %v1499 = vadd.f32 %v1329, %v1498
        %v1500 = vpop.f32.mrb[0].mxu0
        %v1501 = vadd.f32 %v1325, %v1500
        %v1502 = vpop.f32.mrb[0].mxu0
        %v1503 = vadd.f32 %v1329, %v1502
        %1504 = vmatprep.mubr.bf16.mxu0 0
        %1505 = vmatmul.mubr.bf16.gmra.mrb[0].mxu0 %v1302
        %v1506 = vpop.f32.mrb[0].mxu0
        %v1507 = vadd.f32 %v1325, %v1506
        %v1508 = vpop.f32.mrb[0].mxu0
        %v1509 = vadd.f32 %v1329, %v1508
        %v1510 = vpop.f32.mrb[0].mxu0
        %v1511 = vadd.f32 %v1325, %v1510
        %v1512 = vpop.f32.mrb[0].mxu0
        %v1513 = vadd.f32 %v1329, %v1512
        %1514 = vmatprep.mubr.bf16.mxu0 0
        %1515 = vmatmul.mubr.bf16.gmra.mrb[0].mxu0 %v1303
        %v1516 = vpop.f32.mrb[0].mxu0
        %v1517 = vadd.f32 %v1325, %v1516
        %v1518 = vpop.f32.mrb[0].mxu0
        %v1519 = vadd.f32 %v1329, %v1518
        %v1520 = vpop.f32.mrb[0].mxu0
        %v1521 = vadd.f32 %v1325, %v1520
        %v1522 = vpop.f32.mrb[0].mxu0
        %v1523 = vadd.f32 %v1329, %v1522
        %1524 = vdwg.mxu0
        %v1525 = vxor.u32 %v1447, 2147483648
        %v1526 = vxor.u32 %v1451, 2147483648
        %v1527 = vxor.u32 %v1457, 2147483648
        %v1528 = vxor.u32 %v1461, 2147483648
        %v1529 = vxor.u32 %v1467, 2147483648
        %v1530 = vxor.u32 %v1471, 2147483648
        %v1531 = vxor.u32 %v1477, 2147483648
        %v1532 = vxor.u32 %v1481, 2147483648
        %v1533 = vxor.u32 %v1487, 2147483648
        %v1534 = vxor.u32 %v1491, 2147483648
        %v1535 = vxor.u32 %v1497, 2147483648
        %v1536 = vxor.u32 %v1501, 2147483648
        %v1537 = vxor.u32 %v1507, 2147483648
        %v1538 = vxor.u32 %v1511, 2147483648
        %v1539 = vxor.u32 %v1517, 2147483648
        %v1540 = vxor.u32 %v1521, 2147483648
        %v1541 = vmul.f32 %v1525, 1.442695
        %v1542 = vpow.pop %v1541
        %v1543 = vmul.f32 %v1526, 1.442695
        %v1544 = vpow.pop %v1543
        %v1545 = vmul.f32 %v1527, 1.442695
        %v1546 = vpow.pop %v1545
        %v1547 = vmul.f32 %v1528, 1.442695
        %v1548 = vpow.pop %v1547
        %v1549 = vmul.f32 %v1529, 1.442695
        %v1550 = vpow.pop %v1549
        %v1551 = vmul.f32 %v1530, 1.442695
        %v1552 = vpow.pop %v1551
        %v1553 = vmul.f32 %v1531, 1.442695
        %v1554 = vpow.pop %v1553
        %v1555 = vmul.f32 %v1532, 1.442695
        %v1556 = vpow.pop %v1555
        %v1557 = vmul.f32 %v1533, 1.442695
        %v1558 = vpow.pop %v1557
        %v1559 = vmul.f32 %v1534, 1.442695
        %v1560 = vpow.pop %v1559
        %v1561 = vmul.f32 %v1535, 1.442695
        %v1562 = vpow.pop %v1561
        %v1563 = vmul.f32 %v1536, 1.442695
        %v1564 = vpow.pop %v1563
        %v1565 = vmul.f32 %v1537, 1.442695
        %v1566 = vpow.pop %v1565
        %v1567 = vmul.f32 %v1538, 1.442695
        %v1568 = vpow.pop %v1567
        %v1569 = vmul.f32 %v1539, 1.442695
        %v1570 = vpow.pop %v1569
        %v1571 = vmul.f32 %v1540, 1.442695
        %v1572 = vpow.pop %v1571
        %v1573 = vadd.f32 %v1542, 1.0
        %v1574 = vadd.f32 %v1544, 1.0
        %v1575 = vadd.f32 %v1546, 1.0
        %v1576 = vadd.f32 %v1548, 1.0
        %v1577 = vadd.f32 %v1550, 1.0
        %v1578 = vadd.f32 %v1552, 1.0
        %v1579 = vadd.f32 %v1554, 1.0
        %v1580 = vadd.f32 %v1556, 1.0
        %v1581 = vadd.f32 %v1558, 1.0
        %v1582 = vadd.f32 %v1560, 1.0
        %v1583 = vadd.f32 %v1562, 1.0
        %v1584 = vadd.f32 %v1564, 1.0
        %v1585 = vadd.f32 %v1566, 1.0
        %v1586 = vadd.f32 %v1568, 1.0
        %v1587 = vadd.f32 %v1570, 1.0
        %v1588 = vadd.f32 %v1572, 1.0
        %v1589 = vrcp.pop %v1573
        %v1590 = vmul.f32 1.0, %v1589
        %v1591 = vrcp.pop %v1574
        %v1592 = vmul.f32 1.0, %v1591
        %v1593 = vrcp.pop %v1575
        %v1594 = vmul.f32 1.0, %v1593
        %v1595 = vrcp.pop %v1576
        %v1596 = vmul.f32 1.0, %v1595
        %v1597 = vrcp.pop %v1577
        %v1598 = vmul.f32 1.0, %v1597
        %v1599 = vrcp.pop %v1578
        %v1600 = vmul.f32 1.0, %v1599
        %v1601 = vrcp.pop %v1579
        %v1602 = vmul.f32 1.0, %v1601
        %v1603 = vrcp.pop %v1580
        %v1604 = vmul.f32 1.0, %v1603
        %v1605 = vrcp.pop %v1581
        %v1606 = vmul.f32 1.0, %v1605
        %v1607 = vrcp.pop %v1582
        %v1608 = vmul.f32 1.0, %v1607
        %v1609 = vrcp.pop %v1583
        %v1610 = vmul.f32 1.0, %v1609
        %v1611 = vrcp.pop %v1584
        %v1612 = vmul.f32 1.0, %v1611
        %v1613 = vrcp.pop %v1585
        %v1614 = vmul.f32 1.0, %v1613
        %v1615 = vrcp.pop %v1586
        %v1616 = vmul.f32 1.0, %v1615
        %v1617 = vrcp.pop %v1587
        %v1618 = vmul.f32 1.0, %v1617
        %v1619 = vrcp.pop %v1588
        %v1620 = vmul.f32 1.0, %v1619
        %v1621 = vmul.f32 %v1449, 0.5
        %v1622 = vmul.f32 %v1453, 0.5
        %v1623 = vmul.f32 %v1459, 0.5
        %v1624 = vmul.f32 %v1463, 0.5
        %v1625 = vmul.f32 %v1469, 0.5
        %v1626 = vmul.f32 %v1473, 0.5
        %v1627 = vmul.f32 %v1479, 0.5
        %v1628 = vmul.f32 %v1483, 0.5
        %v1629 = vmul.f32 %v1489, 0.5
        %v1630 = vmul.f32 %v1493, 0.5
        %v1631 = vmul.f32 %v1499, 0.5
        %v1632 = vmul.f32 %v1503, 0.5
        %v1633 = vmul.f32 %v1509, 0.5
        %v1634 = vmul.f32 %v1513, 0.5
        %v1635 = vmul.f32 %v1519, 0.5
        %v1636 = vmul.f32 %v1523, 0.5
        %v1637 = vmul.f32 %v1621, 1.442695
        %v1638 = vpow.pop %v1637
        %v1639 = vmul.f32 %v1622, 1.442695
        %v1640 = vpow.pop %v1639
        %v1641 = vmul.f32 %v1623, 1.442695
        %v1642 = vpow.pop %v1641
        %v1643 = vmul.f32 %v1624, 1.442695
        %v1644 = vpow.pop %v1643
        %v1645 = vmul.f32 %v1625, 1.442695
        %v1646 = vpow.pop %v1645
        %v1647 = vmul.f32 %v1626, 1.442695
        %v1648 = vpow.pop %v1647
        %v1649 = vmul.f32 %v1627, 1.442695
        %v1650 = vpow.pop %v1649
        %v1651 = vmul.f32 %v1628, 1.442695
        %v1652 = vpow.pop %v1651
        %v1653 = vmul.f32 %v1629, 1.442695
        %v1654 = vpow.pop %v1653
        %v1655 = vmul.f32 %v1630, 1.442695
        %v1656 = vpow.pop %v1655
        %v1657 = vmul.f32 %v1631, 1.442695
        %v1658 = vpow.pop %v1657
        %v1659 = vmul.f32 %v1632, 1.442695
        %v1660 = vpow.pop %v1659
        %v1661 = vmul.f32 %v1633, 1.442695
        %v1662 = vpow.pop %v1661
        %v1663 = vmul.f32 %v1634, 1.442695
        %v1664 = vpow.pop %v1663
        %v1665 = vmul.f32 %v1635, 1.442695
        %v1666 = vpow.pop %v1665
        %v1667 = vmul.f32 %v1636, 1.442695
        %v1668 = vpow.pop %v1667
        %v1669 = vld [vmem:[%s10] sm:$0x1]
        %v1671 = vlaneseq
        %v1672 = vshrl.u32 %v1671, 7
        %v1673 = vsub.s32 0, %v1672
        %v1674 = vrot.slane %v1669, %v1673
        %v1676 = vmul.f32 %v1638, %v1674
        %v1677 = vmul.f32 %v1640, %v1674
        %v1678 = vmul.f32 %v1642, %v1674
        %v1679 = vmul.f32 %v1644, %v1674
        %v1680 = vmul.f32 %v1646, %v1674
        %v1681 = vmul.f32 %v1648, %v1674
        %v1682 = vmul.f32 %v1650, %v1674
        %v1683 = vmul.f32 %v1652, %v1674
        %v1684 = vmul.f32 %v1654, %v1674
        %v1685 = vmul.f32 %v1656, %v1674
        %v1686 = vmul.f32 %v1658, %v1674
        %v1687 = vmul.f32 %v1660, %v1674
        %v1688 = vmul.f32 %v1662, %v1674
        %v1689 = vmul.f32 %v1664, %v1674
        %v1690 = vmul.f32 %v1666, %v1674
        %v1691 = vmul.f32 %v1668, %v1674
        %v1692 = vadd.f32 %v1590, %v1676
        %v1693 = vadd.f32 %v1592, %v1677
        %v1694 = vadd.f32 %v1594, %v1678
        %v1695 = vadd.f32 %v1596, %v1679
        %v1696 = vadd.f32 %v1598, %v1680
        %v1697 = vadd.f32 %v1600, %v1681
        %v1698 = vadd.f32 %v1602, %v1682
        %v1699 = vadd.f32 %v1604, %v1683
        %v1700 = vadd.f32 %v1606, %v1684
        %v1701 = vadd.f32 %v1608, %v1685
        %v1702 = vadd.f32 %v1610, %v1686
        %v1703 = vadd.f32 %v1612, %v1687
        %v1704 = vadd.f32 %v1614, %v1688
        %v1705 = vadd.f32 %v1616, %v1689
        %v1706 = vadd.f32 %v1618, %v1690
        %v1707 = vadd.f32 %v1620, %v1691
        %1708 = vst [vmem:[%s520] sm:$0xff] %v1692
        %1709 = vst [vmem:[%s520 + $0x8] sm:$0xff] %v1693
        %1710 = vst [vmem:[%s520 + $0x10] sm:$0xff] %v1694
        %1711 = vst [vmem:[%s520 + $0x18] sm:$0xff] %v1695
        %1712 = vst [vmem:[%s520 + $0x20] sm:$0xff] %v1696
        %1713 = vst [vmem:[%s520 + $0x28] sm:$0xff] %v1697
        %1714 = vst [vmem:[%s520 + $0x30] sm:$0xff] %v1698
        %1715 = vst [vmem:[%s520 + $0x38] sm:$0xff] %v1699
        %1716 = vst [vmem:[%s520 + $0x40] sm:$0xff] %v1700
        %1717 = vst [vmem:[%s520 + $0x48] sm:$0xff] %v1701
        %1718 = vst [vmem:[%s520 + $0x50] sm:$0xff] %v1702
        %1719 = vst [vmem:[%s520 + $0x58] sm:$0xff] %v1703
        %1720 = vst [vmem:[%s520 + $0x60] sm:$0xff] %v1704
        %1721 = vst [vmem:[%s520 + $0x68] sm:$0xff] %v1705
        %1722 = vst [vmem:[%s520 + $0x70] sm:$0xff] %v1706
        %1723 = vst [vmem:[%s520 + $0x78] sm:$0xff] %v1707
        %1724 = vst [vmem:[%s527] sm:$0xff] %v939
        %1725 = vst [vmem:[%s527 + $0x10] sm:$0xff] %v943
        %1726 = vst [vmem:[%s527 + $0x20] sm:$0xff] %v949
        %1727 = vst [vmem:[%s527 + $0x30] sm:$0xff] %v953
        %1728 = vst [vmem:[%s527 + $0x40] sm:$0xff] %v959
        %1729 = vst [vmem:[%s527 + $0x50] sm:$0xff] %v963
        %1730 = vst [vmem:[%s527 + $0x60] sm:$0xff] %v969
        %1731 = vst [vmem:[%s527 + $0x70] sm:$0xff] %v973
        %1732 = vst [vmem:[%s527 + $0x80] sm:$0xff] %v979
        %1733 = vst [vmem:[%s527 + $0x90] sm:$0xff] %v983
        %1734 = vst [vmem:[%s527 + $0xa0] sm:$0xff] %v989
        %1735 = vst [vmem:[%s527 + $0xb0] sm:$0xff] %v993
        %1736 = vst [vmem:[%s527 + $0xc0] sm:$0xff] %v999
        %1737 = vst [vmem:[%s527 + $0xd0] sm:$0xff] %v1003
        %1738 = vst [vmem:[%s527 + $0xe0] sm:$0xff] %v1009
        %1739 = vst [vmem:[%s527 + $0xf0] sm:$0xff] %v1013
        %v1740 = vmul.f32 %v1034, %v1034
        %v1741 = vmul.f32 %v1036, %v1036
        %v1742 = vmul.f32 %v1038, %v1038
        %v1743 = vmul.f32 %v1040, %v1040
        %v1744 = vmul.f32 %v1042, %v1042
        %v1745 = vmul.f32 %v1044, %v1044
        %v1746 = vmul.f32 %v1046, %v1046
        %v1747 = vmul.f32 %v1048, %v1048
        %v1748 = vmul.f32 %v1050, %v1050
        %v1749 = vmul.f32 %v1052, %v1052
        %v1750 = vmul.f32 %v1054, %v1054
        %v1751 = vmul.f32 %v1056, %v1056
        %v1752 = vmul.f32 %v1058, %v1058
        %v1753 = vmul.f32 %v1060, %v1060
        %v1754 = vmul.f32 %v1062, %v1062
        %v1755 = vmul.f32 %v1064, %v1064
        %1756 = vst [vmem:[%s527 + $0x8] sm:$0xff] %v1740
        %1757 = vst [vmem:[%s527 + $0x18] sm:$0xff] %v1741
        %1758 = vst [vmem:[%s527 + $0x28] sm:$0xff] %v1742
        %1759 = vst [vmem:[%s527 + $0x38] sm:$0xff] %v1743
        %1760 = vst [vmem:[%s527 + $0x48] sm:$0xff] %v1744
        %1761 = vst [vmem:[%s527 + $0x58] sm:$0xff] %v1745
        %1762 = vst [vmem:[%s527 + $0x68] sm:$0xff] %v1746
        %1763 = vst [vmem:[%s527 + $0x78] sm:$0xff] %v1747
        %1764 = vst [vmem:[%s527 + $0x88] sm:$0xff] %v1748
        %1765 = vst [vmem:[%s527 + $0x98] sm:$0xff] %v1749
        %1766 = vst [vmem:[%s527 + $0xa8] sm:$0xff] %v1750
        %1767 = vst [vmem:[%s527 + $0xb8] sm:$0xff] %v1751
        %1768 = vst [vmem:[%s527 + $0xc8] sm:$0xff] %v1752
        %1769 = vst [vmem:[%s527 + $0xd8] sm:$0xff] %v1753
        %1770 = vst [vmem:[%s527 + $0xe8] sm:$0xff] %v1754
        %1771 = vst [vmem:[%s527 + $0xf8] sm:$0xff] %v1755
        %1772 = vst [vmem:[%s534] sm:$0xff] %v1590
        %1773 = vst [vmem:[%s534 + $0x10] sm:$0xff] %v1592
        %1774 = vst [vmem:[%s534 + $0x20] sm:$0xff] %v1594
        %1775 = vst [vmem:[%s534 + $0x30] sm:$0xff] %v1596
        %1776 = vst [vmem:[%s534 + $0x40] sm:$0xff] %v1598
        %1777 = vst [vmem:[%s534 + $0x50] sm:$0xff] %v1600
        %1778 = vst [vmem:[%s534 + $0x60] sm:$0xff] %v1602
        %1779 = vst [vmem:[%s534 + $0x70] sm:$0xff] %v1604
        %1780 = vst [vmem:[%s534 + $0x80] sm:$0xff] %v1606
        %1781 = vst [vmem:[%s534 + $0x90] sm:$0xff] %v1608
        %1782 = vst [vmem:[%s534 + $0xa0] sm:$0xff] %v1610
        %1783 = vst [vmem:[%s534 + $0xb0] sm:$0xff] %v1612
        %1784 = vst [vmem:[%s534 + $0xc0] sm:$0xff] %v1614
        %1785 = vst [vmem:[%s534 + $0xd0] sm:$0xff] %v1616
        %1786 = vst [vmem:[%s534 + $0xe0] sm:$0xff] %v1618
        %1787 = vst [vmem:[%s534 + $0xf0] sm:$0xff] %v1620
        %v1788 = vmul.f32 %v1638, %v1638
        %v1789 = vmul.f32 %v1640, %v1640
        %v1790 = vmul.f32 %v1642, %v1642
        %v1791 = vmul.f32 %v1644, %v1644
        %v1792 = vmul.f32 %v1646, %v1646
        %v1793 = vmul.f32 %v1648, %v1648
        %v1794 = vmul.f32 %v1650, %v1650
        %v1795 = vmul.f32 %v1652, %v1652
        %v1796 = vmul.f32 %v1654, %v1654
        %v1797 = vmul.f32 %v1656, %v1656
        %v1798 = vmul.f32 %v1658, %v1658
        %v1799 = vmul.f32 %v1660, %v1660
        %v1800 = vmul.f32 %v1662, %v1662
        %v1801 = vmul.f32 %v1664, %v1664
        %v1802 = vmul.f32 %v1666, %v1666
        %v1803 = vmul.f32 %v1668, %v1668
        %1804 = vst [vmem:[%s534 + $0x8] sm:$0xff] %v1788
        %1805 = vst [vmem:[%s534 + $0x18] sm:$0xff] %v1789
        %1806 = vst [vmem:[%s534 + $0x28] sm:$0xff] %v1790
        %1807 = vst [vmem:[%s534 + $0x38] sm:$0xff] %v1791
        %1808 = vst [vmem:[%s534 + $0x48] sm:$0xff] %v1792
        %1809 = vst [vmem:[%s534 + $0x58] sm:$0xff] %v1793
        %1810 = vst [vmem:[%s534 + $0x68] sm:$0xff] %v1794
        %1811 = vst [vmem:[%s534 + $0x78] sm:$0xff] %v1795
        %1812 = vst [vmem:[%s534 + $0x88] sm:$0xff] %v1796
        %1813 = vst [vmem:[%s534 + $0x98] sm:$0xff] %v1797
        %1814 = vst [vmem:[%s534 + $0xa8] sm:$0xff] %v1798
        %1815 = vst [vmem:[%s534 + $0xb8] sm:$0xff] %v1799
        %1816 = vst [vmem:[%s534 + $0xc8] sm:$0xff] %v1800
        %1817 = vst [vmem:[%s534 + $0xd8] sm:$0xff] %v1801
        %1818 = vst [vmem:[%s534 + $0xe8] sm:$0xff] %v1802
        %1819 = vst [vmem:[%s534 + $0xf8] sm:$0xff] %v1803
        %s1820 = sand.u32 %s280, 1
        %s1821 = scalar_lea.sflag [#allocation4], %s1820
        %s1822 = sand.u32 %s280, 1
        %s1823 = smul.addr %s1822, 128
        %s1824 = scalar_lea.vmem [#allocation11], %s1823
        %s1825 = sand.u32 %s36, 1
        %s1826 = scalar_lea.sflag [#allocation13], %s1825
        %s1827 = sand.u32 %s306, 1
        %s1828 = smul.addr %s1827, 256
        %s1829 = scalar_lea.vmem [#allocation12], %s1828
        %s1830 = sand.u32 %s36, 1
        %s1831 = scalar_lea.sflag [#allocation13], %s1830
        %s1832 = sand.u32 %s332, 1
        %s1833 = smul.addr %s1832, 256
        %s1834 = scalar_lea.vmem [#allocation14], %s1833
        // Predicated region
        $region85: #{tpu_custom_call.1} parent=63 // pred_check
          %p1835 = pneg %p290
        $region86: #{tpu_custom_call.1} parent=63 // pred_check_branch
          %1837 = sbr.rel (%p1835) target = $region88
        $region87: #{tpu_custom_call.1} parent=63 // pred_region
          %s1838 = smul.u32 16, %s36
          %s1840 = ssub.s32 2048, 2048
          %1841 = vsyncadd %s1821, %s1840
          %s1842 = smul.addr %s1838, 128
          %s1843 = scalar_lea.hbm %s11, %s1842
          %s1844 = sshll.u32 %s1824, 4
          %s1845 = int_to_ptr.vmem [resolvable:$true] %s1844
          %1850 = dma.vmem_to_hbm [thread:$0]  %s1845, 2048, %s1843, %s1821, 128, 128, 8
        $region88: #{tpu_custom_call.1} parent=63 // pred_fallthru
          _
        // Predicated region
        $region89: #{tpu_custom_call.1} parent=63 // pred_check
          %p1851 = pneg %p316
        $region90: #{tpu_custom_call.1} parent=63 // pred_check_branch
          %1853 = sbr.rel (%p1851) target = $region92
        $region91: #{tpu_custom_call.1} parent=63 // pred_region
          %s1854 = smul.u32 16, %s36
          %s1856 = ssub.s32 4096, 4096
          %1857 = vsyncadd %s1826, %s1856
          %s1858 = smul.addr %s1854, 2
          %s1859 = smul.addr %s1858, 128
          %s1860 = scalar_lea.hbm %s12, %s1859
          %s1861 = sshll.u32 %s1829, 4
          %s1862 = int_to_ptr.vmem [resolvable:$true] %s1861
          %1867 = dma.vmem_to_hbm [thread:$0]  %s1862, 4096, %s1860, %s1826, 256, 256, 16
        $region92: #{tpu_custom_call.1} parent=63 // pred_fallthru
          _
        // Predicated region
        $region93: #{tpu_custom_call.1} parent=63 // pred_check
          %p1868 = pneg %p342
        $region94: #{tpu_custom_call.1} parent=63 // pred_check_branch
          %1870 = sbr.rel (%p1868) target = $region96
        $region95: #{tpu_custom_call.1} parent=63 // pred_region
          %s1871 = smul.u32 16, %s36
          %s1873 = ssub.s32 4096, 4096
          %1874 = vsyncadd %s1831, %s1873
          %s1875 = smul.addr %s1871, 2
          %s1876 = smul.addr %s1875, 128
          %s1877 = scalar_lea.hbm %s13, %s1876
          %s1878 = sshll.u32 %s1834, 4
          %s1879 = int_to_ptr.vmem [resolvable:$true] %s1878
          %1884 = dma.vmem_to_hbm [thread:$0]  %s1879, 4096, %s1877, %s1831, 256, 256, 16
        $region96: #{tpu_custom_call.1} parent=63 // pred_fallthru
          _
      $region64: #{tpu_custom_call.1} parent=5 // pred_fallthru
        _
      %p1885 = scmp.le.s32.totalorder 2, %s31
      // Predicated region
      $region97: #{tpu_custom_call.1} parent=5 // pred_check
        %p1886 = pneg %p1885
      $region98: #{tpu_custom_call.1} parent=5 // pred_check_branch
        %1888 = sbr.rel (%p1886) target = $region100
      $region99: #{tpu_custom_call.1} parent=5 // pred_region
        %s1889 = ssub.s32 %s31, 2
        // Predicated region
        $region101: #{tpu_custom_call.1} parent=99 // pred_check
          %p1890 = pneg %p296
        $region102: #{tpu_custom_call.1} parent=99 // pred_check_branch
          %1892 = sbr.rel (%p1890) target = $region104
        $region103: #{tpu_custom_call.1} parent=99 // pred_region
          %s1893 = sand.u32 %s281, 1
          %s1894 = scalar_lea.sflag [#allocation4], %s1893
          %s1895 = sand.u32 %s281, 1
          %s1896 = smul.addr %s1895, 128
          %s1897 = scalar_lea.vmem [#allocation11], %s1896
          %1898 = dma.done %s1894, 2048
        $region104: #{tpu_custom_call.1} parent=99 // pred_fallthru
          _
        // Predicated region
        $region105: #{tpu_custom_call.1} parent=99 // pred_check
          %p1899 = pneg %p322
        $region106: #{tpu_custom_call.1} parent=99 // pred_check_branch
          %1901 = sbr.rel (%p1899) target = $region108
        $region107: #{tpu_custom_call.1} parent=99 // pred_region
          %s1902 = sand.u32 %s37, 1
          %s1903 = scalar_lea.sflag [#allocation13], %s1902
          %s1904 = sand.u32 %s307, 1
          %s1905 = smul.addr %s1904, 256
          %s1906 = scalar_lea.vmem [#allocation12], %s1905
          %1907 = dma.done %s1903, 4096
        $region108: #{tpu_custom_call.1} parent=99 // pred_fallthru
          _
        // Predicated region
        $region109: #{tpu_custom_call.1} parent=99 // pred_check
          %p1908 = pneg %p348
        $region110: #{tpu_custom_call.1} parent=99 // pred_check_branch
          %1910 = sbr.rel (%p1908) target = $region112
        $region111: #{tpu_custom_call.1} parent=99 // pred_region
          %s1911 = sand.u32 %s37, 1
          %s1912 = scalar_lea.sflag [#allocation13], %s1911
          %s1913 = sand.u32 %s333, 1
          %s1914 = smul.addr %s1913, 256
          %s1915 = scalar_lea.vmem [#allocation14], %s1914
          %1916 = dma.done %s1912, 4096
        $region112: #{tpu_custom_call.1} parent=99 // pred_fallthru
          _
      $region100: #{tpu_custom_call.1} parent=5 // pred_fallthru
        _
    $region6: #{tpu_custom_call.1} parent=1 // loop_footer
      %s35 = sadd.s32 1, %s31
    $region7: #{tpu_custom_call.1} parent=1 // loop_footer_branch
      %30 = sbr.rel target = $region3
    $region8: #{tpu_custom_call.1} parent=1 // loop_exit
      _
    %1917 = vsyncpa [#allocation3], 1
    %s1918 = scalar_lea.sflag [#allocation3], 1
    %1919 = vsyncpa %s1918, 1
    %1920 = vsyncpa [#allocation6], 1
    %1921 = vsyncpa [#allocation9], 1
    %1922 = vsyncpa [#allocation4], 1
    %s1923 = scalar_lea.sflag [#allocation4], 1
    %1924 = vsyncpa %s1923, 1
    %1925 = vsyncpa [#allocation13], 1
    %s1926 = scalar_lea.sflag [#allocation13], 1
    %1927 = vsyncpa %s1926, 1

// kernel: tpu_custom_call.1
$region0: #{tpu_custom_call.1}
  #allocation0 [shape = 'u32[]', space=smem, size = 0x4, offset = 0x4, fixed_abs, tag = 'smem constant byte address 0x4 - core index']
  #allocation1 [shape = 'u32[144,128]{1,0:T(1,128)}', space=vmem, size = 0x12000, scoped, tag = 'internal scratch']
  %s0 = inlined_call_operand.hbm [shape: bf16[512,128], index: 0, kind: input, shape index: {}]
  %s1 = inlined_call_operand.hbm [shape: bf16[128,128], index: 1, kind: input, shape index: {}]
  %s2 = inlined_call_operand.vmem [shape: f32[1,128], index: 2, kind: input, shape index: {}]
  %s3 = inlined_call_operand.hbm [shape: bf16[128,256], index: 3, kind: input, shape index: {}]
  %s4 = inlined_call_operand.vmem [shape: f32[1,256], index: 4, kind: input, shape index: {}]
  %s5 = inlined_call_operand.vmem [shape: f32[1,128], index: 5, kind: input, shape index: {}]
  %s6 = inlined_call_operand.hbm [shape: bf16[128,128], index: 6, kind: input, shape index: {}]
  %s7 = inlined_call_operand.vmem [shape: f32[1,128], index: 7, kind: input, shape index: {}]
  %s8 = inlined_call_operand.hbm [shape: bf16[128,256], index: 8, kind: input, shape index: {}]
  %s9 = inlined_call_operand.vmem [shape: f32[1,256], index: 9, kind: input, shape index: {}]
  %s10 = inlined_call_operand.vmem [shape: f32[1,128], index: 10, kind: input, shape index: {}]
  %s11 = inlined_call_operand.hbm [shape: f32[512,128], index: 11, kind: output, shape index: {0}]
  %s12 = inlined_call_operand.hbm [shape: f32[512,256], index: 12, kind: output, shape index: {1}]
  %s13 = inlined_call_operand.hbm [shape: f32[512,256], index: 13, kind: output, shape index: {2}]
  %14 = xla_tuple %s11, %s12, %s13
  %s15 = sld [smem:[#allocation0]]
  $region113: #{tpu_custom_call.1} parent=0
    _
  %s17 = ssub.s32 1, %s15
  %s18 = scalar_select 0, %s17, %s15
  $region1: #{tpu_custom_call.1} parent=0
    #allocation2 [shape = 'u8[65536]{0}', space=vmem, size = 0x10000, scoped, tag = 'input window, operand 0']
    #allocation3 [shape = 's32[2]{0}', space=sflag, size = 0x8, scoped, tag = 'scoped memory for tpu_custom_call.1']
    #allocation4 [shape = 's32[2]{0}', space=sflag, size = 0x8, scoped, tag = 'scoped memory for tpu_custom_call.1']
    #allocation5 [shape = 'u8[32768]{0}', space=vmem, size = 0x8000, scoped, tag = 'input window, operand 1, single buffered']
    #allocation6 [shape = 's32[1]{0}', space=sflag, size = 0x4, scoped, tag = 'scoped memory for tpu_custom_call.1']
    #allocation7 [shape = 'u8[65536]{0}', space=vmem, size = 0x10000, scoped, tag = 'input window, operand 3, single buffered']
    #allocation8 [shape = 'u8[32768]{0}', space=vmem, size = 0x8000, scoped, tag = 'input window, operand 6, single buffered']
    #allocation9 [shape = 's32[1]{0}', space=sflag, size = 0x4, scoped, tag = 'scoped memory for tpu_custom_call.1']
    #allocation10 [shape = 'u8[65536]{0}', space=vmem, size = 0x10000, scoped, tag = 'input window, operand 8, single buffered']
    #allocation11 [shape = 'u8[131072]{0}', space=vmem, size = 0x20000, scoped, tag = 'output window, operand 0']
    #allocation12 [shape = 'u8[262144]{0}', space=vmem, size = 0x40000, scoped, tag = 'output window, operand 1']
    #allocation13 [shape = 's32[2]{0}', space=sflag, size = 0x8, scoped, tag = 'scoped memory for tpu_custom_call.1']
    #allocation14 [shape = 'u8[262144]{0}', space=vmem, size = 0x40000, scoped, tag = 'output window, operand 2']
    %19 = vsyncpa [#allocation3], 0
    %s20 = scalar_lea.sflag [#allocation3], 1
    %21 = vsyncpa %s20, 0
    %22 = vsyncpa [#allocation6], 0
    %23 = vsyncpa [#allocation9], 0
    %24 = vsyncpa [#allocation4], 0
    %s25 = scalar_lea.sflag [#allocation4], 1
    %26 = vsyncpa %s25, 0
    %27 = vsyncpa [#allocation13], 0
    %s28 = scalar_lea.sflag [#allocation13], 1
    %29 = vsyncpa %s28, 0
    loop: start=0, step=1, limit=6
    $region2: #{tpu_custom_call.1} parent=1 // loop_pre_header
      _
    $region3: #{tpu_custom_call.1} parent=1 // loop_header
      %s31 = sphi 0, %s35
      %p32 = scmp.ge.s32.totalorder %s31, 6
      %s41 = sphi 0, %s43
      %s44 = sphi 0, %s41
      %s45 = sphi 0, %s44
      %s61 = sphi 0, %s45
      %s65 = sphi 0, %s65
      %s67 = sphi 0, %s65
      %s68 = sphi 0, %s67
      %s82 = sphi 0, %s68
      %s86 = sphi 0, %s86
      %s88 = sphi 0, %s86
      %s89 = sphi 0, %s88
      %s103 = sphi 0, %s89
      %s107 = sphi 0, %s107
      %s109 = sphi 0, %s107
      %s110 = sphi 0, %s109
      %s124 = sphi 0, %s110
      %s128 = sphi 0, %s128
      %s130 = sphi 0, %s128
      %s131 = sphi 0, %s130
      %s145 = sphi 0, %s131
      %s149 = sphi 0, %s149
      %s151 = sphi 0, %s149
      %s152 = sphi 0, %s151
      %s166 = sphi 0, %s152
      %s170 = sphi 0, %s170
      %s172 = sphi 0, %s170
      %s173 = sphi 0, %s172
      %s187 = sphi 0, %s173
      %s191 = sphi 0, %s191
      %s193 = sphi 0, %s191
      %s194 = sphi 0, %s193
      %s208 = sphi 0, %s194
      %s212 = sphi 0, %s212
      %s214 = sphi 0, %s212
      %s215 = sphi 0, %s214
      %s229 = sphi 0, %s215
      %s233 = sphi 0, %s233
      %s235 = sphi 0, %s233
      %s236 = sphi 0, %s235
      %s250 = sphi 0, %s236
      %s254 = sphi 0, %s254
      %s256 = sphi 0, %s254
      %s257 = sphi 0, %s256
      %s271 = sphi 0, %s257
      %s277 = sphi 0, %s279
      %s280 = sphi 0, %s277
      %s281 = sphi 0, %s280
      %s297 = sphi 0, %s281
      %s303 = sphi 0, %s305
      %s306 = sphi 0, %s303
      %s307 = sphi 0, %s306
      %s323 = sphi 0, %s307
      %s329 = sphi 0, %s331
      %s332 = sphi 0, %s329
      %s333 = sphi 0, %s332
      %s349 = sphi 0, %s333
    $region4: #{tpu_custom_call.1} parent=1 // loop_header_branch
      %34 = sbr.rel (%p32) target = $region8
    $region5: #{tpu_custom_call.1} parent=1 // loop_body
      %s36 = ssub.s32 %s31, 1
      %s37 = ssub.s32 %s31, 2
      %s38 = sadd.s32 %s31, 1
      %s39 = ssub.s32 %s31, %s38
      %p40 = scmp.eq.s32.totalorder %s39, 0
      %s42 = sadd.s32 %s41, 1
      %s43 = scalar_select %p40, %s41, %s42
      %p46 = pneg %p40
      %p47 = scmp.eq.s32.totalorder %s31, 3
      %p48 = por %p46, %p47
      %p49 = scmp.ne.s32.totalorder %s41, %s44
      %p50 = scmp.eq.s32.totalorder %s31, 0
      %p51 = por %p49, %p50
      %p52 = scmp.ne.s32.totalorder %s41, %s44
      %p53 = scmp.eq.s32.totalorder %s36, 3
      %p54 = por %p52, %p53
      %p55 = scmp.ne.s32.totalorder %s44, %s45
      %p56 = scmp.eq.s32.totalorder %s36, 0
      %p57 = por %p55, %p56
      %p58 = scmp.ne.s32.totalorder %s44, %s45
      %p59 = scmp.eq.s32.totalorder %s37, 3
      %p60 = por %p58, %p59
      %p62 = scmp.ne.s32.totalorder %s45, %s61
      %p63 = scmp.eq.s32.totalorder %s37, 0
      %p64 = por %p62, %p63
      %s66 = sadd.s32 %s65, 1
      %p69 = scmp.eq.s32.totalorder %s31, 3
      %p70 = scmp.ne.s32.totalorder %s65, %s67
      %p71 = scmp.eq.s32.totalorder %s31, 0
      %p72 = por %p70, %p71
      %p73 = scmp.ne.s32.totalorder %s65, %s67
      %p74 = scmp.eq.s32.totalorder %s36, 3
      %p75 = por %p73, %p74
      %p76 = scmp.ne.s32.totalorder %s67, %s68
      %p77 = scmp.eq.s32.totalorder %s36, 0
      %p78 = por %p76, %p77
      %p79 = scmp.ne.s32.totalorder %s67, %s68
      %p80 = scmp.eq.s32.totalorder %s37, 3
      %p81 = por %p79, %p80
      %p83 = scmp.ne.s32.totalorder %s68, %s82
      %p84 = scmp.eq.s32.totalorder %s37, 0
      %p85 = por %p83, %p84
      %s87 = sadd.s32 %s86, 1
      %p90 = scmp.eq.s32.totalorder %s31, 3
      %p91 = scmp.ne.s32.totalorder %s86, %s88
      %p92 = scmp.eq.s32.totalorder %s31, 0
      %p93 = por %p91, %p92
      %p94 = scmp.ne.s32.totalorder %s86, %s88
      %p95 = scmp.eq.s32.totalorder %s36, 3
      %p96 = por %p94, %p95
      %p97 = scmp.ne.s32.totalorder %s88, %s89
      %p98 = scmp.eq.s32.totalorder %s36, 0
      %p99 = por %p97, %p98
      %p100 = scmp.ne.s32.totalorder %s88, %s89
      %p101 = scmp.eq.s32.totalorder %s37, 3
      %p102 = por %p100, %p101
      %p104 = scmp.ne.s32.totalorder %s89, %s103
      %p105 = scmp.eq.s32.totalorder %s37, 0
      %p106 = por %p104, %p105
      %s108 = sadd.s32 %s107, 1
      %p111 = scmp.eq.s32.totalorder %s31, 3
      %p112 = scmp.ne.s32.totalorder %s107, %s109
      %p113 = scmp.eq.s32.totalorder %s31, 0
      %p114 = por %p112, %p113
      %p115 = scmp.ne.s32.totalorder %s107, %s109
      %p116 = scmp.eq.s32.totalorder %s36, 3
      %p117 = por %p115, %p116
      %p118 = scmp.ne.s32.totalorder %s109, %s110
      %p119 = scmp.eq.s32.totalorder %s36, 0
      %p120 = por %p118, %p119
      %p121 = scmp.ne.s32.totalorder %s109, %s110
      %p122 = scmp.eq.s32.totalorder %s37, 3
      %p123 = por %p121, %p122
      %p125 = scmp.ne.s32.totalorder %s110, %s124
      %p126 = scmp.eq.s32.totalorder %s37, 0
      %p127 = por %p125, %p126
      %s129 = sadd.s32 %s128, 1
      %p132 = scmp.eq.s32.totalorder %s31, 3
      %p133 = scmp.ne.s32.totalorder %s128, %s130
      %p134 = scmp.eq.s32.totalorder %s31, 0
      %p135 = por %p133, %p134
      %p136 = scmp.ne.s32.totalorder %s128, %s130
      %p137 = scmp.eq.s32.totalorder %s36, 3
      %p138 = por %p136, %p137
      %p139 = scmp.ne.s32.totalorder %s130, %s131
      %p140 = scmp.eq.s32.totalorder %s36, 0
      %p141 = por %p139, %p140
      %p142 = scmp.ne.s32.totalorder %s130, %s131
      %p143 = scmp.eq.s32.totalorder %s37, 3
      %p144 = por %p142, %p143
      %p146 = scmp.ne.s32.totalorder %s131, %s145
      %p147 = scmp.eq.s32.totalorder %s37, 0
      %p148 = por %p146, %p147
      %s150 = sadd.s32 %s149, 1
      %p153 = scmp.eq.s32.totalorder %s31, 3
      %p154 = scmp.ne.s32.totalorder %s149, %s151
      %p155 = scmp.eq.s32.totalorder %s31, 0
      %p156 = por %p154, %p155
      %p157 = scmp.ne.s32.totalorder %s149, %s151
      %p158 = scmp.eq.s32.totalorder %s36, 3
      %p159 = por %p157, %p158
      %p160 = scmp.ne.s32.totalorder %s151, %s152
      %p161 = scmp.eq.s32.totalorder %s36, 0
      %p162 = por %p160, %p161
      %p163 = scmp.ne.s32.totalorder %s151, %s152
      %p164 = scmp.eq.s32.totalorder %s37, 3
      %p165 = por %p163, %p164
      %p167 = scmp.ne.s32.totalorder %s152, %s166
      %p168 = scmp.eq.s32.totalorder %s37, 0
      %p169 = por %p167, %p168
      %s171 = sadd.s32 %s170, 1
      %p174 = scmp.eq.s32.totalorder %s31, 3
      %p175 = scmp.ne.s32.totalorder %s170, %s172
      %p176 = scmp.eq.s32.totalorder %s31, 0
      %p177 = por %p175, %p176
      %p178 = scmp.ne.s32.totalorder %s170, %s172
      %p179 = scmp.eq.s32.totalorder %s36, 3
      %p180 = por %p178, %p179
      %p181 = scmp.ne.s32.totalorder %s172, %s173
      %p182 = scmp.eq.s32.totalorder %s36, 0
      %p183 = por %p181, %p182
      %p184 = scmp.ne.s32.totalorder %s172, %s173
      %p185 = scmp.eq.s32.totalorder %s37, 3
      %p186 = por %p184, %p185
      %p188 = scmp.ne.s32.totalorder %s173, %s187
      %p189 = scmp.eq.s32.totalorder %s37, 0
      %p190 = por %p188, %p189
      %s192 = sadd.s32 %s191, 1
      %p195 = scmp.eq.s32.totalorder %s31, 3
      %p196 = scmp.ne.s32.totalorder %s191, %s193
      %p197 = scmp.eq.s32.totalorder %s31, 0
      %p198 = por %p196, %p197
      %p199 = scmp.ne.s32.totalorder %s191, %s193
      %p200 = scmp.eq.s32.totalorder %s36, 3
      %p201 = por %p199, %p200
      %p202 = scmp.ne.s32.totalorder %s193, %s194
      %p203 = scmp.eq.s32.totalorder %s36, 0
      %p204 = por %p202, %p203
      %p205 = scmp.ne.s32.totalorder %s193, %s194
      %p206 = scmp.eq.s32.totalorder %s37, 3
      %p207 = por %p205, %p206
      %p209 = scmp.ne.s32.totalorder %s194, %s208
      %p210 = scmp.eq.s32.totalorder %s37, 0
      %p211 = por %p209, %p210
      %s213 = sadd.s32 %s212, 1
      %p216 = scmp.eq.s32.totalorder %s31, 3
      %p217 = scmp.ne.s32.totalorder %s212, %s214
      %p218 = scmp.eq.s32.totalorder %s31, 0
      %p219 = por %p217, %p218
      %p220 = scmp.ne.s32.totalorder %s212, %s214
      %p221 = scmp.eq.s32.totalorder %s36, 3
      %p222 = por %p220, %p221
      %p223 = scmp.ne.s32.totalorder %s214, %s215
      %p224 = scmp.eq.s32.totalorder %s36, 0
      %p225 = por %p223, %p224
      %p226 = scmp.ne.s32.totalorder %s214, %s215
      %p227 = scmp.eq.s32.totalorder %s37, 3
      %p228 = por %p226, %p227
      %p230 = scmp.ne.s32.totalorder %s215, %s229
      %p231 = scmp.eq.s32.totalorder %s37, 0
      %p232 = por %p230, %p231
      %s234 = sadd.s32 %s233, 1
      %p237 = scmp.eq.s32.totalorder %s31, 3
      %p238 = scmp.ne.s32.totalorder %s233, %s235
      %p239 = scmp.eq.s32.totalorder %s31, 0
      %p240 = por %p238, %p239
      %p241 = scmp.ne.s32.totalorder %s233, %s235
      %p242 = scmp.eq.s32.totalorder %s36, 3
      %p243 = por %p241, %p242
      %p244 = scmp.ne.s32.totalorder %s235, %s236
      %p245 = scmp.eq.s32.totalorder %s36, 0
      %p246 = por %p244, %p245
      %p247 = scmp.ne.s32.totalorder %s235, %s236
      %p248 = scmp.eq.s32.totalorder %s37, 3
      %p249 = por %p247, %p248
      %p251 = scmp.ne.s32.totalorder %s236, %s250
      %p252 = scmp.eq.s32.totalorder %s37, 0
      %p253 = por %p251, %p252
      %s255 = sadd.s32 %s254, 1
      %p258 = scmp.eq.s32.totalorder %s31, 3
      %p259 = scmp.ne.s32.totalorder %s254, %s256
      %p260 = scmp.eq.s32.totalorder %s31, 0
      %p261 = por %p259, %p260
      %p262 = scmp.ne.s32.totalorder %s254, %s256
      %p263 = scmp.eq.s32.totalorder %s36, 3
      %p264 = por %p262, %p263
      %p265 = scmp.ne.s32.totalorder %s256, %s257
      %p266 = scmp.eq.s32.totalorder %s36, 0
      %p267 = por %p265, %p266
      %p268 = scmp.ne.s32.totalorder %s256, %s257
      %p269 = scmp.eq.s32.totalorder %s37, 3
      %p270 = por %p268, %p269
      %p272 = scmp.ne.s32.totalorder %s257, %s271
      %p273 = scmp.eq.s32.totalorder %s37, 0
      %p274 = por %p272, %p273
      %s275 = ssub.s32 %s31, %s38
      %p276 = scmp.eq.s32.totalorder %s275, 0
      %s278 = sadd.s32 %s277, 1
      %s279 = scalar_select %p276, %s277, %s278
      %p282 = pneg %p276
      %p283 = scmp.eq.s32.totalorder %s31, 3
      %p284 = por %p282, %p283
      %p285 = scmp.ne.s32.totalorder %s277, %s280
      %p286 = scmp.eq.s32.totalorder %s31, 0
      %p287 = por %p285, %p286
      %p288 = scmp.ne.s32.totalorder %s277, %s280
      %p289 = scmp.eq.s32.totalorder %s36, 3
      %p290 = por %p288, %p289
      %p291 = scmp.ne.s32.totalorder %s280, %s281
      %p292 = scmp.eq.s32.totalorder %s36, 0
      %p293 = por %p291, %p292
      %p294 = scmp.ne.s32.totalorder %s280, %s281
      %p295 = scmp.eq.s32.totalorder %s37, 3
      %p296 = por %p294, %p295
      %p298 = scmp.ne.s32.totalorder %s281, %s297
      %p299 = scmp.eq.s32.totalorder %s37, 0
      %p300 = por %p298, %p299
      %s301 = ssub.s32 %s31, %s38
      %p302 = scmp.eq.s32.totalorder %s301, 0
      %s304 = sadd.s32 %s303, 1
      %s305 = scalar_select %p302, %s303, %s304
      %p308 = pneg %p302
      %p309 = scmp.eq.s32.totalorder %s31, 3
      %p310 = por %p308, %p309
      %p311 = scmp.ne.s32.totalorder %s303, %s306
      %p312 = scmp.eq.s32.totalorder %s31, 0
      %p313 = por %p311, %p312
      %p314 = scmp.ne.s32.totalorder %s303, %s306
      %p315 = scmp.eq.s32.totalorder %s36, 3
      %p316 = por %p314, %p315
      %p317 = scmp.ne.s32.totalorder %s306, %s307
      %p318 = scmp.eq.s32.totalorder %s36, 0
      %p319 = por %p317, %p318
      %p320 = scmp.ne.s32.totalorder %s306, %s307
      %p321 = scmp.eq.s32.totalorder %s37, 3
      %p322 = por %p320, %p321
      %p324 = scmp.ne.s32.totalorder %s307, %s323
      %p325 = scmp.eq.s32.totalorder %s37, 0
      %p326 = por %p324, %p325
      %s327 = ssub.s32 %s31, %s38
      %p328 = scmp.eq.s32.totalorder %s327, 0
      %s330 = sadd.s32 %s329, 1
      %s331 = scalar_select %p328, %s329, %s330
      %p334 = pneg %p328
      %p335 = scmp.eq.s32.totalorder %s31, 3
      %p336 = por %p334, %p335
      %p337 = scmp.ne.s32.totalorder %s329, %s332
      %p338 = scmp.eq.s32.totalorder %s31, 0
      %p339 = por %p337, %p338
      %p340 = scmp.ne.s32.totalorder %s329, %s332
      %p341 = scmp.eq.s32.totalorder %s36, 3
      %p342 = por %p340, %p341
      %p343 = scmp.ne.s32.totalorder %s332, %s333
      %p344 = scmp.eq.s32.totalorder %s36, 0
      %p345 = por %p343, %p344
      %p346 = scmp.ne.s32.totalorder %s332, %s333
      %p347 = scmp.eq.s32.totalorder %s37, 3
      %p348 = por %p346, %p347
      %p350 = scmp.ne.s32.totalorder %s333, %s349
      %p351 = scmp.eq.s32.totalorder %s37, 0
      %p352 = por %p350, %p351
      %p353 = scmp.le.s32.totalorder 1, %s31
      %p354 = scmp.lt.s32.totalorder %s31, 5
      %p355 = pnand %p353, %p354
      %p356 = pneg %p355
      // Predicated region
      $region9: #{tpu_custom_call.1} parent=5 // pred_check
        _
      $region10: #{tpu_custom_call.1} parent=5 // pred_check_branch
        %358 = sbr.rel (%p355) target = $region12
      $region11: #{tpu_custom_call.1} parent=5 // pred_region
        %s359 = ssub.s32 %s31, 1
        // Predicated region
        $region13: #{tpu_custom_call.1} parent=11 // pred_check
          %p360 = pneg %p78
        $region14: #{tpu_custom_call.1} parent=11 // pred_check_branch
          %362 = sbr.rel (%p360) target = $region16
        $region15: #{tpu_custom_call.1} parent=11 // pred_region
          %s364 = ssub.s32 1024, 1024
          %365 = vsyncadd [#allocation6], %s364
          %s366 = sshll.u32 [#allocation5], 4
          %s367 = int_to_ptr.vmem [resolvable:$true] %s366
          %372 = dma.hbm_to_vmem [thread:$0]  %s1, 1024, %s367, [#allocation6], 64, 64, 4
        $region16: #{tpu_custom_call.1} parent=11 // pred_fallthru
          _
        // Predicated region
        $region17: #{tpu_custom_call.1} parent=11 // pred_check
          %p373 = pneg %p99
        $region18: #{tpu_custom_call.1} parent=11 // pred_check_branch
          %375 = sbr.rel (%p373) target = $region20
        $region19: #{tpu_custom_call.1} parent=11 // pred_region
          _
        $region20: #{tpu_custom_call.1} parent=11 // pred_fallthru
          _
        // Predicated region
        $region21: #{tpu_custom_call.1} parent=11 // pred_check
          %p376 = pneg %p120
        $region22: #{tpu_custom_call.1} parent=11 // pred_check_branch
          %378 = sbr.rel (%p376) target = $region24
        $region23: #{tpu_custom_call.1} parent=11 // pred_region
          %s380 = ssub.s32 2048, 2048
          %381 = vsyncadd [#allocation6], %s380
          %s382 = sshll.u32 [#allocation7], 4
          %s383 = int_to_ptr.vmem [resolvable:$true] %s382
          %388 = dma.hbm_to_vmem [thread:$0]  %s3, 2048, %s383, [#allocation6], 128, 128, 8
        $region24: #{tpu_custom_call.1} parent=11 // pred_fallthru
          _
        // Predicated region
        $region25: #{tpu_custom_call.1} parent=11 // pred_check
          %p389 = pneg %p141
        $region26: #{tpu_custom_call.1} parent=11 // pred_check_branch
          %391 = sbr.rel (%p389) target = $region28
        $region27: #{tpu_custom_call.1} parent=11 // pred_region
          _
        $region28: #{tpu_custom_call.1} parent=11 // pred_fallthru
          _
        // Predicated region
        $region29: #{tpu_custom_call.1} parent=11 // pred_check
          %p392 = pneg %p162
        $region30: #{tpu_custom_call.1} parent=11 // pred_check_branch
          %394 = sbr.rel (%p392) target = $region32
        $region31: #{tpu_custom_call.1} parent=11 // pred_region
          _
        $region32: #{tpu_custom_call.1} parent=11 // pred_fallthru
          _
        // Predicated region
        $region33: #{tpu_custom_call.1} parent=11 // pred_check
          %p395 = pneg %p183
        $region34: #{tpu_custom_call.1} parent=11 // pred_check_branch
          %397 = sbr.rel (%p395) target = $region36
        $region35: #{tpu_custom_call.1} parent=11 // pred_region
          %s399 = ssub.s32 1024, 1024
          %400 = vsyncadd [#allocation9], %s399
          %s401 = sshll.u32 [#allocation8], 4
          %s402 = int_to_ptr.vmem [resolvable:$true] %s401
          %407 = dma.hbm_to_vmem [thread:$0]  %s6, 1024, %s402, [#allocation9], 64, 64, 4
        $region36: #{tpu_custom_call.1} parent=11 // pred_fallthru
          _
        // Predicated region
        $region37: #{tpu_custom_call.1} parent=11 // pred_check
          %p408 = pneg %p204
        $region38: #{tpu_custom_call.1} parent=11 // pred_check_branch
          %410 = sbr.rel (%p408) target = $region40
        $region39: #{tpu_custom_call.1} parent=11 // pred_region
          _
        $region40: #{tpu_custom_call.1} parent=11 // pred_fallthru
          _
        // Predicated region
        $region41: #{tpu_custom_call.1} parent=11 // pred_check
          %p411 = pneg %p225
        $region42: #{tpu_custom_call.1} parent=11 // pred_check_branch
          %413 = sbr.rel (%p411) target = $region44
        $region43: #{tpu_custom_call.1} parent=11 // pred_region
          %s415 = ssub.s32 2048, 2048
          %416 = vsyncadd [#allocation9], %s415
          %s417 = sshll.u32 [#allocation10], 4
          %s418 = int_to_ptr.vmem [resolvable:$true] %s417
          %423 = dma.hbm_to_vmem [thread:$0]  %s8, 2048, %s418, [#allocation9], 128, 128, 8
        $region44: #{tpu_custom_call.1} parent=11 // pred_fallthru
          _
        // Predicated region
        $region45: #{tpu_custom_call.1} parent=11 // pred_check
          %p424 = pneg %p246
        $region46: #{tpu_custom_call.1} parent=11 // pred_check_branch
          %426 = sbr.rel (%p424) target = $region48
        $region47: #{tpu_custom_call.1} parent=11 // pred_region
          _
        $region48: #{tpu_custom_call.1} parent=11 // pred_fallthru
          _
        // Predicated region
        $region49: #{tpu_custom_call.1} parent=11 // pred_check
          %p427 = pneg %p267
        $region50: #{tpu_custom_call.1} parent=11 // pred_check_branch
          %429 = sbr.rel (%p427) target = $region52
        $region51: #{tpu_custom_call.1} parent=11 // pred_region
          _
        $region52: #{tpu_custom_call.1} parent=11 // pred_fallthru
          _
      $region12: #{tpu_custom_call.1} parent=5 // pred_fallthru
        _
      %p430 = scmp.lt.s32.totalorder %s31, 4
      // Predicated region
      $region53: #{tpu_custom_call.1} parent=5 // pred_check
        %p431 = pneg %p430
      $region54: #{tpu_custom_call.1} parent=5 // pred_check_branch
        %433 = sbr.rel (%p431) target = $region56
      $region55: #{tpu_custom_call.1} parent=5 // pred_region
        // Predicated region
        $region57: #{tpu_custom_call.1} parent=55 // pred_check
          %p434 = pneg %p51
        $region58: #{tpu_custom_call.1} parent=55 // pred_check_branch
          %436 = sbr.rel (%p434) target = $region60
        $region59: #{tpu_custom_call.1} parent=55 // pred_region
          %s437 = sand.u32 %s41, 1
          %s438 = scalar_lea.sflag [#allocation3], %s437
          %s439 = sand.u32 %s41, 1
          %s440 = smul.addr %s439, 64
          %s441 = scalar_lea.vmem [#allocation2], %s440
          %s442 = smul.u32 16, %s31
          %s444 = ssub.s32 1024, 1024
          %445 = vsyncadd %s438, %s444
          %s446 = smul.addr %s442, 64
          %s447 = scalar_lea.hbm %s0, %s446
          %s448 = sshll.u32 %s441, 4
          %s449 = int_to_ptr.vmem [resolvable:$true] %s448
          %454 = dma.hbm_to_vmem [thread:$0]  %s447, 1024, %s449, %s438, 64, 64, 4
        $region60: #{tpu_custom_call.1} parent=55 // pred_fallthru
          _
      $region56: #{tpu_custom_call.1} parent=5 // pred_fallthru
        _
      %p455 = scmp.le.s32.totalorder 1, %s31
      %p456 = scmp.lt.s32.totalorder %s31, 5
      %p457 = pnand %p455, %p456
      %p458 = pneg %p457
      // Predicated region
      $region61: #{tpu_custom_call.1} parent=5 // pred_check
        _
      $region62: #{tpu_custom_call.1} parent=5 // pred_check_branch
        %460 = sbr.rel (%p457) target = $region64
      $region63: #{tpu_custom_call.1} parent=5 // pred_region
        %s461 = ssub.s32 %s31, 1
        %s462 = sand.u32 %s44, 1
        %s463 = scalar_lea.sflag [#allocation3], %s462
        %s464 = sand.u32 %s44, 1
        %s465 = smul.addr %s464, 64
        %s466 = scalar_lea.vmem [#allocation2], %s465
        // Predicated region
        $region65: #{tpu_custom_call.1} parent=63 // pred_check
          %p467 = pneg %p57
        $region66: #{tpu_custom_call.1} parent=63 // pred_check_branch
          %469 = sbr.rel (%p467) target = $region68
        $region67: #{tpu_custom_call.1} parent=63 // pred_region
          %470 = dma.done %s463, 1024
        $region68: #{tpu_custom_call.1} parent=63 // pred_fallthru
          _
        // Predicated region
        $region69: #{tpu_custom_call.1} parent=63 // pred_check
          %p471 = pneg %p78
        $region70: #{tpu_custom_call.1} parent=63 // pred_check_branch
          %473 = sbr.rel (%p471) target = $region72
        $region71: #{tpu_custom_call.1} parent=63 // pred_region
          %474 = dma.done [#allocation6], 1024
        $region72: #{tpu_custom_call.1} parent=63 // pred_fallthru
          _
        // Predicated region
        $region73: #{tpu_custom_call.1} parent=63 // pred_check
          %p475 = pneg %p120
        $region74: #{tpu_custom_call.1} parent=63 // pred_check_branch
          %477 = sbr.rel (%p475) target = $region76
        $region75: #{tpu_custom_call.1} parent=63 // pred_region
          %478 = dma.done [#allocation6], 2048
        $region76: #{tpu_custom_call.1} parent=63 // pred_fallthru
          _
        // Predicated region
        $region77: #{tpu_custom_call.1} parent=63 // pred_check
          %p479 = pneg %p183
        $region78: #{tpu_custom_call.1} parent=63 // pred_check_branch
          %481 = sbr.rel (%p479) target = $region80
        $region79: #{tpu_custom_call.1} parent=63 // pred_region
          %482 = dma.done [#allocation9], 1024
        $region80: #{tpu_custom_call.1} parent=63 // pred_fallthru
          _
        // Predicated region
        $region81: #{tpu_custom_call.1} parent=63 // pred_check
          %p483 = pneg %p225
        $region82: #{tpu_custom_call.1} parent=63 // pred_check_branch
          %485 = sbr.rel (%p483) target = $region84
        $region83: #{tpu_custom_call.1} parent=63 // pred_region
          %486 = dma.done [#allocation9], 2048
        $region84: #{tpu_custom_call.1} parent=63 // pred_fallthru
          _
        %s487 = sand.u32 %s44, 1
        %s488 = scalar_lea.sflag [#allocation3], %s487
        %s489 = sand.u32 %s44, 1
        %s490 = smul.addr %s489, 64
        %s491 = scalar_lea.vmem [#allocation2], %s490
        %p492 = pneg %p57
        %p493 = pneg %p54
        %p494 = pneg %p78
        %p495 = pneg %p75
        %p496 = pneg %p99
        %p497 = pneg %p96
        %p498 = pneg %p120
        %p499 = pneg %p117
        %p500 = pneg %p141
        %p501 = pneg %p138
        %p502 = pneg %p162
        %p503 = pneg %p159
        %p504 = pneg %p183
        %p505 = pneg %p180
        %p506 = pneg %p204
        %p507 = pneg %p201
        %p508 = pneg %p225
        %p509 = pneg %p222
        %p510 = pneg %p246
        %p511 = pneg %p243
        %p512 = pneg %p267
        %p513 = pneg %p264
        %p514 = pneg %p293
        %p515 = pneg %p290
        %s516 = sand.u32 %s280, 1
        %s517 = scalar_lea.sflag [#allocation4], %s516
        %s518 = sand.u32 %s280, 1
        %s519 = smul.addr %s518, 128
        %s520 = scalar_lea.vmem [#allocation11], %s519
        %p521 = pneg %p319
        %p522 = pneg %p316
        %s523 = sand.u32 %s36, 1
        %s524 = scalar_lea.sflag [#allocation13], %s523
        %s525 = sand.u32 %s306, 1
        %s526 = smul.addr %s525, 256
        %s527 = scalar_lea.vmem [#allocation12], %s526
        %p528 = pneg %p345
        %p529 = pneg %p342
        %s530 = sand.u32 %s36, 1
        %s531 = scalar_lea.sflag [#allocation13], %s530
        %s532 = sand.u32 %s332, 1
        %s533 = smul.addr %s532, 256
        %s534 = scalar_lea.vmem [#allocation14], %s533
        %s535 = smul.u32 16, %s36
        %s536 = smul.u32 16, %s36
        %s537 = smul.u32 16, %s36
        %s538 = smul.u32 16, %s36
        %v540 = vld [vmem:[%s466] sm:$0xf]
        %v541 = vld [vmem:[%s466 + $0x4] sm:$0xf]
        %v542 = vld [vmem:[%s466 + $0x8] sm:$0xf]
        %v543 = vld [vmem:[%s466 + $0xc] sm:$0xf]
        %v544 = vld [vmem:[%s466 + $0x10] sm:$0xf]
        %v545 = vld [vmem:[%s466 + $0x14] sm:$0xf]
        %v546 = vld [vmem:[%s466 + $0x18] sm:$0xf]
        %v547 = vld [vmem:[%s466 + $0x1c] sm:$0xf]
        %v548 = vld [vmem:[%s466 + $0x20] sm:$0xf]
        %v549 = vld [vmem:[%s466 + $0x24] sm:$0xf]
        %v550 = vld [vmem:[%s466 + $0x28] sm:$0xf]
        %v551 = vld [vmem:[%s466 + $0x2c] sm:$0xf]
        %v552 = vld [vmem:[%s466 + $0x30] sm:$0xf]
        %v553 = vld [vmem:[%s466 + $0x34] sm:$0xf]
        %v554 = vld [vmem:[%s466 + $0x38] sm:$0xf]
        %v555 = vld [vmem:[%s466 + $0x3c] sm:$0xf]
        %v556 = vld [vmem:[#allocation5] sm:$0xf]
        %v557 = vld [vmem:[#allocation5 + $0x4] sm:$0xf]
        %v558 = vld [vmem:[#allocation5 + $0x8] sm:$0xf]
        %v559 = vld [vmem:[#allocation5 + $0xc] sm:$0xf]
        %v560 = vld [vmem:[#allocation5 + $0x10] sm:$0xf]
        %v561 = vld [vmem:[#allocation5 + $0x14] sm:$0xf]
        %v562 = vld [vmem:[#allocation5 + $0x18] sm:$0xf]
        %v563 = vld [vmem:[#allocation5 + $0x1c] sm:$0xf]
        %v564 = vld [vmem:[#allocation5 + $0x20] sm:$0xf]
        %v565 = vld [vmem:[#allocation5 + $0x24] sm:$0xf]
        %v566 = vld [vmem:[#allocation5 + $0x28] sm:$0xf]
        %v567 = vld [vmem:[#allocation5 + $0x2c] sm:$0xf]
        %v568 = vld [vmem:[#allocation5 + $0x30] sm:$0xf]
        %v569 = vld [vmem:[#allocation5 + $0x34] sm:$0xf]
        %v570 = vld [vmem:[#allocation5 + $0x38] sm:$0xf]
        %v571 = vld [vmem:[#allocation5 + $0x3c] sm:$0xf]
        %v572 = vld [vmem:[%s2] sm:$0x1]
        %v574 = vlaneseq
        %v575 = vshrl.u32 %v574, 7
        %v576 = vsub.s32 0, %v575
        %v577 = vrot.slane %v572, %v576
        %v595 = vunpack.c.l.b16 %v540
        %v596 = vunpack.c.l.b16 %v541
        %v597 = vunpack.c.l.b16 %v542
        %v598 = vunpack.c.l.b16 %v543
        %v599 = vunpack.c.l.b16 %v544
        %v600 = vunpack.c.l.b16 %v545
        %v601 = vunpack.c.l.b16 %v546
        %v602 = vunpack.c.l.b16 %v547
        %v603 = vunpack.c.l.b16 %v548
        %v604 = vunpack.c.l.b16 %v549
        %v605 = vunpack.c.l.b16 %v550
        %v606 = vunpack.c.l.b16 %v551
        %v607 = vunpack.c.l.b16 %v552
        %v608 = vunpack.c.l.b16 %v553
        %v609 = vunpack.c.l.b16 %v554
        %v610 = vunpack.c.l.b16 %v555
        %v611 = vpack.c.b16 %v596, %v595
        %v612 = vpack.c.b16 %v598, %v597
        %v613 = vpack.c.b16 %v600, %v599
        %v614 = vpack.c.b16 %v602, %v601
        %v615 = vpack.c.b16 %v604, %v603
        %v616 = vpack.c.b16 %v606, %v605
        %v617 = vpack.c.b16 %v608, %v607
        %v618 = vpack.c.b16 %v610, %v609
        %v643 = vunpack.c.l.b16 %v556
        %v644 = vunpack.c.l.b16 %v557
        %v645 = vunpack.c.l.b16 %v558
        %v646 = vunpack.c.l.b16 %v559
        %v647 = vunpack.c.l.b16 %v560
        %v648 = vunpack.c.l.b16 %v561
        %v649 = vunpack.c.l.b16 %v562
        %v650 = vunpack.c.l.b16 %v563
        %v651 = vunpack.c.l.b16 %v564
        %v652 = vunpack.c.l.b16 %v565
        %v653 = vunpack.c.l.b16 %v566
        %v654 = vunpack.c.l.b16 %v567
        %v655 = vunpack.c.l.b16 %v568
        %v656 = vunpack.c.l.b16 %v569
        %v657 = vunpack.c.l.b16 %v570
        %v658 = vunpack.c.l.b16 %v571
        %v659 = vpack.c.b16 %v644, %v643
        %v660 = vpack.c.b16 %v646, %v645
        %v661 = vpack.c.b16 %v648, %v647
        %v662 = vpack.c.b16 %v650, %v649
        %v663 = vpack.c.b16 %v652, %v651
        %v664 = vpack.c.b16 %v654, %v653
        %v665 = vpack.c.b16 %v656, %v655
        %v666 = vpack.c.b16 %v658, %v657
        %675 = vmatprep.subr.bf16.mxu0 0
        %676 = vmatpush1.bf16.msra.mxu0 %v659
        %677 = vmatprep.subr.bf16.mxu0 0
        %678 = vmatpush1.bf16.msra.mxu0 %v660
        %679 = vmatprep.subr.bf16.mxu0 0
        %680 = vmatpush1.bf16.msra.mxu0 %v661
        %681 = vmatprep.subr.bf16.mxu0 0
        %682 = vmatpush1.bf16.msra.mxu0 %v662
        %683 = vmatprep.subr.bf16.mxu0 0
        %684 = vmatpush1.bf16.msra.mxu0 %v663
        %685 = vmatprep.subr.bf16.mxu0 0
        %686 = vmatpush1.bf16.msra.mxu0 %v664
        %687 = vmatprep.subr.bf16.mxu0 0
        %688 = vmatpush1.bf16.msra.mxu0 %v665
        %689 = vmatprep.subr.bf16.mxu0 0
        %690 = vmatpush1.bf16.msra.mxu0 %v666
        %691 = vmatprep.subr.bf16.mxu0 0
        %692 = vmatpush1.bf16.msra.mxu0 0
        %693 = vmatprep.subr.bf16.mxu0 0
        %694 = vmatpush1.bf16.msra.mxu0 0
        %695 = vmatprep.subr.bf16.mxu0 0
        %696 = vmatpush1.bf16.msra.mxu0 0
        %697 = vmatprep.subr.bf16.mxu0 0
        %698 = vmatpush1.bf16.msra.mxu0 0
        %699 = vmatprep.subr.bf16.mxu0 0
        %700 = vmatpush1.bf16.msra.mxu0 0
        %701 = vmatprep.subr.bf16.mxu0 0
        %702 = vmatpush1.bf16.msra.mxu0 0
        %703 = vmatprep.subr.bf16.mxu0 0
        %704 = vmatpush1.bf16.msra.mxu0 0
        %705 = vmatprep.subr.bf16.mxu0 0
        %706 = vmatpush1.bf16.msra.mxu0 0
        %707 = vmatprep.mubr.bf16.mxu0 0
        %708 = vmatmul.mubr.bf16.gmra.mrb[0].mxu0 %v611
        %v709 = vpop.f32.mrb[0].mxu0
        %v710 = vadd.f32 %v577, %v709
        %v711 = vpop.f32.mrb[0].mxu0
        %v712 = vpop.f32.mrb[0].mxu0
        %v713 = vadd.f32 %v577, %v712
        %v714 = vpop.f32.mrb[0].mxu0
        %715 = vmatprep.mubr.bf16.mxu0 0
        %716 = vmatmul.mubr.bf16.gmra.mrb[0].mxu0 %v612
        %v717 = vpop.f32.mrb[0].mxu0
        %v718 = vadd.f32 %v577, %v717
        %v719 = vpop.f32.mrb[0].mxu0
        %v720 = vpop.f32.mrb[0].mxu0
        %v721 = vadd.f32 %v577, %v720
        %v722 = vpop.f32.mrb[0].mxu0
        %723 = vmatprep.mubr.bf16.mxu0 0
        %724 = vmatmul.mubr.bf16.gmra.mrb[0].mxu0 %v613
        %v725 = vpop.f32.mrb[0].mxu0
        %v726 = vadd.f32 %v577, %v725
        %v727 = vpop.f32.mrb[0].mxu0
        %v728 = vpop.f32.mrb[0].mxu0
        %v729 = vadd.f32 %v577, %v728
        %v730 = vpop.f32.mrb[0].mxu0
        %731 = vmatprep.mubr.bf16.mxu0 0
        %732 = vmatmul.mubr.bf16.gmra.mrb[0].mxu0 %v614
        %v733 = vpop.f32.mrb[0].mxu0
        %v734 = vadd.f32 %v577, %v733
        %v735 = vpop.f32.mrb[0].mxu0
        %v736 = vpop.f32.mrb[0].mxu0
        %v737 = vadd.f32 %v577, %v736
        %v738 = vpop.f32.mrb[0].mxu0
        %739 = vmatprep.mubr.bf16.mxu0 0
        %740 = vmatmul.mubr.bf16.gmra.mrb[0].mxu0 %v615
        %v741 = vpop.f32.mrb[0].mxu0
        %v742 = vadd.f32 %v577, %v741
        %v743 = vpop.f32.mrb[0].mxu0
        %v744 = vpop.f32.mrb[0].mxu0
        %v745 = vadd.f32 %v577, %v744
        %v746 = vpop.f32.mrb[0].mxu0
        %747 = vmatprep.mubr.bf16.mxu0 0
        %748 = vmatmul.mubr.bf16.gmra.mrb[0].mxu0 %v616
        %v749 = vpop.f32.mrb[0].mxu0
        %v750 = vadd.f32 %v577, %v749
        %v751 = vpop.f32.mrb[0].mxu0
        %v752 = vpop.f32.mrb[0].mxu0
        %v753 = vadd.f32 %v577, %v752
        %v754 = vpop.f32.mrb[0].mxu0
        %755 = vmatprep.mubr.bf16.mxu0 0
        %756 = vmatmul.mubr.bf16.gmra.mrb[0].mxu0 %v617
        %v757 = vpop.f32.mrb[0].mxu0
        %v758 = vadd.f32 %v577, %v757
        %v759 = vpop.f32.mrb[0].mxu0
        %v760 = vpop.f32.mrb[0].mxu0
        %v761 = vadd.f32 %v577, %v760
        %v762 = vpop.f32.mrb[0].mxu0
        %763 = vmatprep.mubr.bf16.mxu0 0
        %764 = vmatmul.mubr.bf16.gmra.mrb[0].mxu0 %v618
        %v765 = vpop.f32.mrb[0].mxu0
        %v766 = vadd.f32 %v577, %v765
        %v767 = vpop.f32.mrb[0].mxu0
        %v768 = vpop.f32.mrb[0].mxu0
        %v769 = vadd.f32 %v577, %v768
        %v770 = vpop.f32.mrb[0].mxu0
        %771 = vdwg.mxu0
        %v772 = vtanh.pop %v710
        %v773 = vtanh.pop %v713
        %v774 = vtanh.pop %v718
        %v775 = vtanh.pop %v721
        %v776 = vtanh.pop %v726
        %v777 = vtanh.pop %v729
        %v778 = vtanh.pop %v734
        %v779 = vtanh.pop %v737
        %v780 = vtanh.pop %v742
        %v781 = vtanh.pop %v745
        %v782 = vtanh.pop %v750
        %v783 = vtanh.pop %v753
        %v784 = vtanh.pop %v758
        %v785 = vtanh.pop %v761
        %v786 = vtanh.pop %v766
        %v787 = vtanh.pop %v769
        %v788 = vpack.c.bf16 %v773, %v772
        %v789 = vpack.c.bf16 %v775, %v774
        %v790 = vpack.c.bf16 %v777, %v776
        %v791 = vpack.c.bf16 %v779, %v778
        %v792 = vpack.c.bf16 %v781, %v780
        %v793 = vpack.c.bf16 %v783, %v782
        %v794 = vpack.c.bf16 %v785, %v784
        %v795 = vpack.c.bf16 %v787, %v786
        %v796 = vld [vmem:[#allocation7] sm:$0xff]
        %v797 = vld [vmem:[#allocation7 + $0x8] sm:$0xff]
        %v798 = vld [vmem:[#allocation7 + $0x10] sm:$0xff]
        %v799 = vld [vmem:[#allocation7 + $0x18] sm:$0xff]
        %v800 = vld [vmem:[#allocation7 + $0x20] sm:$0xff]
        %v801 = vld [vmem:[#allocation7 + $0x28] sm:$0xff]
        %v802 = vld [vmem:[#allocation7 + $0x30] sm:$0xff]
        %v803 = vld [vmem:[#allocation7 + $0x38] sm:$0xff]
        %v804 = vld [vmem:[#allocation7 + $0x40] sm:$0xff]
        %v805 = vld [vmem:[#allocation7 + $0x48] sm:$0xff]
        %v806 = vld [vmem:[#allocation7 + $0x50] sm:$0xff]
        %v807 = vld [vmem:[#allocation7 + $0x58] sm:$0xff]
        %v808 = vld [vmem:[#allocation7 + $0x60] sm:$0xff]
        %v809 = vld [vmem:[#allocation7 + $0x68] sm:$0xff]
        %v810 = vld [vmem:[#allocation7 + $0x70] sm:$0xff]
        %v811 = vld [vmem:[#allocation7 + $0x78] sm:$0xff]
        %v812 = vld [vmem:[%s4] sm:$0x3]
        %v814 = vlaneseq
        %v815 = vshrl.u32 %v814, 7
        %v816 = vsub.s32 0, %v815
        %v817 = vrot.slane %v812, %v816
        %v818 = vlaneseq
        %v819 = vshrl.u32 %v818, 7
        %v820 = vsub.s32 1, %v819
        %v821 = vrot.slane %v812, %v820
        %v840 = vunpack.c.l.b16 %v796
        %v841 = vunpack.c.h.b16 %v796
        %v842 = vunpack.c.l.b16 %v797
        %v843 = vunpack.c.h.b16 %v797
        %v844 = vunpack.c.l.b16 %v798
        %v845 = vunpack.c.h.b16 %v798
        %v846 = vunpack.c.l.b16 %v799
        %v847 = vunpack.c.h.b16 %v799
        %v848 = vunpack.c.l.b16 %v800
        %v849 = vunpack.c.h.b16 %v800
        %v850 = vunpack.c.l.b16 %v801
        %v851 = vunpack.c.h.b16 %v801
        %v852 = vunpack.c.l.b16 %v802
        %v853 = vunpack.c.h.b16 %v802
        %v854 = vunpack.c.l.b16 %v803
        %v855 = vunpack.c.h.b16 %v803
        %v856 = vunpack.c.l.b16 %v804
        %v857 = vunpack.c.h.b16 %v804
        %v858 = vunpack.c.l.b16 %v805
        %v859 = vunpack.c.h.b16 %v805
        %v860 = vunpack.c.l.b16 %v806
        %v861 = vunpack.c.h.b16 %v806
        %v862 = vunpack.c.l.b16 %v807
        %v863 = vunpack.c.h.b16 %v807
        %v864 = vunpack.c.l.b16 %v808
        %v865 = vunpack.c.h.b16 %v808
        %v866 = vunpack.c.l.b16 %v809
        %v867 = vunpack.c.h.b16 %v809
        %v868 = vunpack.c.l.b16 %v810
        %v869 = vunpack.c.h.b16 %v810
        %v870 = vunpack.c.l.b16 %v811
        %v871 = vunpack.c.h.b16 %v811
        %v872 = vpack.c.b16 %v842, %v840
        %v873 = vpack.c.b16 %v843, %v841
        %v874 = vpack.c.b16 %v846, %v844
        %v875 = vpack.c.b16 %v847, %v845
        %v876 = vpack.c.b16 %v850, %v848
        %v877 = vpack.c.b16 %v851, %v849
        %v878 = vpack.c.b16 %v854, %v852
        %v879 = vpack.c.b16 %v855, %v853
        %v880 = vpack.c.b16 %v858, %v856
        %v881 = vpack.c.b16 %v859, %v857
        %v882 = vpack.c.b16 %v862, %v860
        %v883 = vpack.c.b16 %v863, %v861
        %v884 = vpack.c.b16 %v866, %v864
        %v885 = vpack.c.b16 %v867, %v865
        %v886 = vpack.c.b16 %v870, %v868
        %v887 = vpack.c.b16 %v871, %v869
        %904 = vmatprep.subr.bf16.mxu0 %v873
        %905 = vmatpush1.bf16.msra.mxu0 %v872
        %906 = vmatprep.subr.bf16.mxu0 %v875
        %907 = vmatpush1.bf16.msra.mxu0 %v874
        %908 = vmatprep.subr.bf16.mxu0 %v877
        %909 = vmatpush1.bf16.msra.mxu0 %v876
        %910 = vmatprep.subr.bf16.mxu0 %v879
        %911 = vmatpush1.bf16.msra.mxu0 %v878
        %912 = vmatprep.subr.bf16.mxu0 %v881
        %913 = vmatpush1.bf16.msra.mxu0 %v880
        %914 = vmatprep.subr.bf16.mxu0 %v883
        %915 = vmatpush1.bf16.msra.mxu0 %v882
        %916 = vmatprep.subr.bf16.mxu0 %v885
        %917 = vmatpush1.bf16.msra.mxu0 %v884
        %918 = vmatprep.subr.bf16.mxu0 %v887
        %919 = vmatpush1.bf16.msra.mxu0 %v886
        %920 = vmatprep.subr.bf16.mxu0 0
        %921 = vmatpush1.bf16.msra.mxu0 0
        %922 = vmatprep.subr.bf16.mxu0 0
        %923 = vmatpush1.bf16.msra.mxu0 0
        %924 = vmatprep.subr.bf16.mxu0 0
        %925 = vmatpush1.bf16.msra.mxu0 0
        %926 = vmatprep.subr.bf16.mxu0 0
        %927 = vmatpush1.bf16.msra.mxu0 0
        %928 = vmatprep.subr.bf16.mxu0 0
        %929 = vmatpush1.bf16.msra.mxu0 0
        %930 = vmatprep.subr.bf16.mxu0 0
        %931 = vmatpush1.bf16.msra.mxu0 0
        %932 = vmatprep.subr.bf16.mxu0 0
        %933 = vmatpush1.bf16.msra.mxu0 0
        %934 = vmatprep.subr.bf16.mxu0 0
        %935 = vmatpush1.bf16.msra.mxu0 0
        %936 = vmatprep.mubr.bf16.mxu0 0
        %937 = vmatmul.mubr.bf16.gmra.mrb[0].mxu0 %v788
        %v938 = vpop.f32.mrb[0].mxu0
        %v939 = vadd.f32 %v817, %v938
        %v940 = vpop.f32.mrb[0].mxu0
        %v941 = vadd.f32 %v821, %v940
        %v942 = vpop.f32.mrb[0].mxu0
        %v943 = vadd.f32 %v817, %v942
        %v944 = vpop.f32.mrb[0].mxu0
        %v945 = vadd.f32 %v821, %v944
        %946 = vmatprep.mubr.bf16.mxu0 0
        %947 = vmatmul.mubr.bf16.gmra.mrb[0].mxu0 %v789
        %v948 = vpop.f32.mrb[0].mxu0
        %v949 = vadd.f32 %v817, %v948
        %v950 = vpop.f32.mrb[0].mxu0
        %v951 = vadd.f32 %v821, %v950
        %v952 = vpop.f32.mrb[0].mxu0
        %v953 = vadd.f32 %v817, %v952
        %v954 = vpop.f32.mrb[0].mxu0
        %v955 = vadd.f32 %v821, %v954
        %956 = vmatprep.mubr.bf16.mxu0 0
        %957 = vmatmul.mubr.bf16.gmra.mrb[0].mxu0 %v790
        %v958 = vpop.f32.mrb[0].mxu0
        %v959 = vadd.f32 %v817, %v958
        %v960 = vpop.f32.mrb[0].mxu0
        %v961 = vadd.f32 %v821, %v960
        %v962 = vpop.f32.mrb[0].mxu0
        %v963 = vadd.f32 %v817, %v962
        %v964 = vpop.f32.mrb[0].mxu0
        %v965 = vadd.f32 %v821, %v964
        %966 = vmatprep.mubr.bf16.mxu0 0
        %967 = vmatmul.mubr.bf16.gmra.mrb[0].mxu0 %v791
        %v968 = vpop.f32.mrb[0].mxu0
        %v969 = vadd.f32 %v817, %v968
        %v970 = vpop.f32.mrb[0].mxu0
        %v971 = vadd.f32 %v821, %v970
        %v972 = vpop.f32.mrb[0].mxu0
        %v973 = vadd.f32 %v817, %v972
        %v974 = vpop.f32.mrb[0].mxu0
        %v975 = vadd.f32 %v821, %v974
        %976 = vmatprep.mubr.bf16.mxu0 0
        %977 = vmatmul.mubr.bf16.gmra.mrb[0].mxu0 %v792
        %v978 = vpop.f32.mrb[0].mxu0
        %v979 = vadd.f32 %v817, %v978
        %v980 = vpop.f32.mrb[0].mxu0
        %v981 = vadd.f32 %v821, %v980
        %v982 = vpop.f32.mrb[0].mxu0
        %v983 = vadd.f32 %v817, %v982
        %v984 = vpop.f32.mrb[0].mxu0
        %v985 = vadd.f32 %v821, %v984
        %986 = vmatprep.mubr.bf16.mxu0 0
        %987 = vmatmul.mubr.bf16.gmra.mrb[0].mxu0 %v793
        %v988 = vpop.f32.mrb[0].mxu0
        %v989 = vadd.f32 %v817, %v988
        %v990 = vpop.f32.mrb[0].mxu0
        %v991 = vadd.f32 %v821, %v990
        %v992 = vpop.f32.mrb[0].mxu0
        %v993 = vadd.f32 %v817, %v992
        %v994 = vpop.f32.mrb[0].mxu0
        %v995 = vadd.f32 %v821, %v994
        %996 = vmatprep.mubr.bf16.mxu0 0
        %997 = vmatmul.mubr.bf16.gmra.mrb[0].mxu0 %v794
        %v998 = vpop.f32.mrb[0].mxu0
        %v999 = vadd.f32 %v817, %v998
        %v1000 = vpop.f32.mrb[0].mxu0
        %v1001 = vadd.f32 %v821, %v1000
        %v1002 = vpop.f32.mrb[0].mxu0
        %v1003 = vadd.f32 %v817, %v1002
        %v1004 = vpop.f32.mrb[0].mxu0
        %v1005 = vadd.f32 %v821, %v1004
        %1006 = vmatprep.mubr.bf16.mxu0 0
        %1007 = vmatmul.mubr.bf16.gmra.mrb[0].mxu0 %v795
        %v1008 = vpop.f32.mrb[0].mxu0
        %v1009 = vadd.f32 %v817, %v1008
        %v1010 = vpop.f32.mrb[0].mxu0
        %v1011 = vadd.f32 %v821, %v1010
        %v1012 = vpop.f32.mrb[0].mxu0
        %v1013 = vadd.f32 %v817, %v1012
        %v1014 = vpop.f32.mrb[0].mxu0
        %v1015 = vadd.f32 %v821, %v1014
        %1016 = vdwg.mxu0
        %v1017 = vmul.f32 %v941, 0.5
        %v1018 = vmul.f32 %v945, 0.5
        %v1019 = vmul.f32 %v951, 0.5
        %v1020 = vmul.f32 %v955, 0.5
        %v1021 = vmul.f32 %v961, 0.5
        %v1022 = vmul.f32 %v965, 0.5
        %v1023 = vmul.f32 %v971, 0.5
        %v1024 = vmul.f32 %v975, 0.5
        %v1025 = vmul.f32 %v981, 0.5
        %v1026 = vmul.f32 %v985, 0.5
        %v1027 = vmul.f32 %v991, 0.5
        %v1028 = vmul.f32 %v995, 0.5
        %v1029 = vmul.f32 %v1001, 0.5
        %v1030 = vmul.f32 %v1005, 0.5
        %v1031 = vmul.f32 %v1011, 0.5
        %v1032 = vmul.f32 %v1015, 0.5
        %v1033 = vmul.f32 %v1017, 1.442695
        %v1034 = vpow.pop %v1033
        %v1035 = vmul.f32 %v1018, 1.442695
        %v1036 = vpow.pop %v1035
        %v1037 = vmul.f32 %v1019, 1.442695
        %v1038 = vpow.pop %v1037
        %v1039 = vmul.f32 %v1020, 1.442695
        %v1040 = vpow.pop %v1039
        %v1041 = vmul.f32 %v1021, 1.442695
        %v1042 = vpow.pop %v1041
        %v1043 = vmul.f32 %v1022, 1.442695
        %v1044 = vpow.pop %v1043
        %v1045 = vmul.f32 %v1023, 1.442695
        %v1046 = vpow.pop %v1045
        %v1047 = vmul.f32 %v1024, 1.442695
        %v1048 = vpow.pop %v1047
        %v1049 = vmul.f32 %v1025, 1.442695
        %v1050 = vpow.pop %v1049
        %v1051 = vmul.f32 %v1026, 1.442695
        %v1052 = vpow.pop %v1051
        %v1053 = vmul.f32 %v1027, 1.442695
        %v1054 = vpow.pop %v1053
        %v1055 = vmul.f32 %v1028, 1.442695
        %v1056 = vpow.pop %v1055
        %v1057 = vmul.f32 %v1029, 1.442695
        %v1058 = vpow.pop %v1057
        %v1059 = vmul.f32 %v1030, 1.442695
        %v1060 = vpow.pop %v1059
        %v1061 = vmul.f32 %v1031, 1.442695
        %v1062 = vpow.pop %v1061
        %v1063 = vmul.f32 %v1032, 1.442695
        %v1064 = vpow.pop %v1063
        %v1065 = vld [vmem:[%s5] sm:$0x1]
        %v1067 = vlaneseq
        %v1068 = vshrl.u32 %v1067, 7
        %v1069 = vsub.s32 0, %v1068
        %v1070 = vrot.slane %v1065, %v1069
        %v1072 = vmul.f32 %v1034, %v1070
        %v1073 = vmul.f32 %v1036, %v1070
        %v1074 = vmul.f32 %v1038, %v1070
        %v1075 = vmul.f32 %v1040, %v1070
        %v1076 = vmul.f32 %v1042, %v1070
        %v1077 = vmul.f32 %v1044, %v1070
        %v1078 = vmul.f32 %v1046, %v1070
        %v1079 = vmul.f32 %v1048, %v1070
        %v1080 = vmul.f32 %v1050, %v1070
        %v1081 = vmul.f32 %v1052, %v1070
        %v1082 = vmul.f32 %v1054, %v1070
        %v1083 = vmul.f32 %v1056, %v1070
        %v1084 = vmul.f32 %v1058, %v1070
        %v1085 = vmul.f32 %v1060, %v1070
        %v1086 = vmul.f32 %v1062, %v1070
        %v1087 = vmul.f32 %v1064, %v1070
        %v1088 = vadd.f32 %v939, %v1072
        %v1089 = vadd.f32 %v943, %v1073
        %v1090 = vadd.f32 %v949, %v1074
        %v1091 = vadd.f32 %v953, %v1075
        %v1092 = vadd.f32 %v959, %v1076
        %v1093 = vadd.f32 %v963, %v1077
        %v1094 = vadd.f32 %v969, %v1078
        %v1095 = vadd.f32 %v973, %v1079
        %v1096 = vadd.f32 %v979, %v1080
        %v1097 = vadd.f32 %v983, %v1081
        %v1098 = vadd.f32 %v989, %v1082
        %v1099 = vadd.f32 %v993, %v1083
        %v1100 = vadd.f32 %v999, %v1084
        %v1101 = vadd.f32 %v1003, %v1085
        %v1102 = vadd.f32 %v1009, %v1086
        %v1103 = vadd.f32 %v1013, %v1087
        %v1104 = vpack.c.bf16 %v1089, %v1088
        %v1105 = vpack.c.bf16 %v1091, %v1090
        %v1106 = vpack.c.bf16 %v1093, %v1092
        %v1107 = vpack.c.bf16 %v1095, %v1094
        %v1108 = vpack.c.bf16 %v1097, %v1096
        %v1109 = vpack.c.bf16 %v1099, %v1098
        %v1110 = vpack.c.bf16 %v1101, %v1100
        %v1111 = vpack.c.bf16 %v1103, %v1102
        %v1112 = vld [vmem:[#allocation8] sm:$0xf]
        %v1113 = vld [vmem:[#allocation8 + $0x4] sm:$0xf]
        %v1114 = vld [vmem:[#allocation8 + $0x8] sm:$0xf]
        %v1115 = vld [vmem:[#allocation8 + $0xc] sm:$0xf]
        %v1116 = vld [vmem:[#allocation8 + $0x10] sm:$0xf]
        %v1117 = vld [vmem:[#allocation8 + $0x14] sm:$0xf]
        %v1118 = vld [vmem:[#allocation8 + $0x18] sm:$0xf]
        %v1119 = vld [vmem:[#allocation8 + $0x1c] sm:$0xf]
        %v1120 = vld [vmem:[#allocation8 + $0x20] sm:$0xf]
        %v1121 = vld [vmem:[#allocation8 + $0x24] sm:$0xf]
        %v1122 = vld [vmem:[#allocation8 + $0x28] sm:$0xf]
        %v1123 = vld [vmem:[#allocation8 + $0x2c] sm:$0xf]
        %v1124 = vld [vmem:[#allocation8 + $0x30] sm:$0xf]
        %v1125 = vld [vmem:[#allocation8 + $0x34] sm:$0xf]
        %v1126 = vld [vmem:[#allocation8 + $0x38] sm:$0xf]
        %v1127 = vld [vmem:[#allocation8 + $0x3c] sm:$0xf]
        %v1128 = vld [vmem:[%s7] sm:$0x1]
        %v1130 = vlaneseq
        %v1131 = vshrl.u32 %v1130, 7
        %v1132 = vsub.s32 0, %v1131
        %v1133 = vrot.slane %v1128, %v1132
        %v1151 = vunpack.c.l.b16 %v1112
        %v1152 = vunpack.c.l.b16 %v1113
        %v1153 = vunpack.c.l.b16 %v1114
        %v1154 = vunpack.c.l.b16 %v1115
        %v1155 = vunpack.c.l.b16 %v1116
        %v1156 = vunpack.c.l.b16 %v1117
        %v1157 = vunpack.c.l.b16 %v1118
        %v1158 = vunpack.c.l.b16 %v1119
        %v1159 = vunpack.c.l.b16 %v1120
        %v1160 = vunpack.c.l.b16 %v1121
        %v1161 = vunpack.c.l.b16 %v1122
        %v1162 = vunpack.c.l.b16 %v1123
        %v1163 = vunpack.c.l.b16 %v1124
        %v1164 = vunpack.c.l.b16 %v1125
        %v1165 = vunpack.c.l.b16 %v1126
        %v1166 = vunpack.c.l.b16 %v1127
        %v1167 = vpack.c.b16 %v1152, %v1151
        %v1168 = vpack.c.b16 %v1154, %v1153
        %v1169 = vpack.c.b16 %v1156, %v1155
        %v1170 = vpack.c.b16 %v1158, %v1157
        %v1171 = vpack.c.b16 %v1160, %v1159
        %v1172 = vpack.c.b16 %v1162, %v1161
        %v1173 = vpack.c.b16 %v1164, %v1163
        %v1174 = vpack.c.b16 %v1166, %v1165
        %1183 = vmatprep.subr.bf16.mxu0 0
        %1184 = vmatpush1.bf16.msra.mxu0 %v1167
        %1185 = vmatprep.subr.bf16.mxu0 0
        %1186 = vmatpush1.bf16.msra.mxu0 %v1168
        %1187 = vmatprep.subr.bf16.mxu0 0
        %1188 = vmatpush1.bf16.msra.mxu0 %v1169
        %1189 = vmatprep.subr.bf16.mxu0 0
        %1190 = vmatpush1.bf16.msra.mxu0 %v1170
        %1191 = vmatprep.subr.bf16.mxu0 0
        %1192 = vmatpush1.bf16.msra.mxu0 %v1171
        %1193 = vmatprep.subr.bf16.mxu0 0
        %1194 = vmatpush1.bf16.msra.mxu0 %v1172
        %1195 = vmatprep.subr.bf16.mxu0 0
        %1196 = vmatpush1.bf16.msra.mxu0 %v1173
        %1197 = vmatprep.subr.bf16.mxu0 0
        %1198 = vmatpush1.bf16.msra.mxu0 %v1174
        %1199 = vmatprep.subr.bf16.mxu0 0
        %1200 = vmatpush1.bf16.msra.mxu0 0
        %1201 = vmatprep.subr.bf16.mxu0 0
        %1202 = vmatpush1.bf16.msra.mxu0 0
        %1203 = vmatprep.subr.bf16.mxu0 0
        %1204 = vmatpush1.bf16.msra.mxu0 0
        %1205 = vmatprep.subr.bf16.mxu0 0
        %1206 = vmatpush1.bf16.msra.mxu0 0
        %1207 = vmatprep.subr.bf16.mxu0 0
        %1208 = vmatpush1.bf16.msra.mxu0 0
        %1209 = vmatprep.subr.bf16.mxu0 0
        %1210 = vmatpush1.bf16.msra.mxu0 0
        %1211 = vmatprep.subr.bf16.mxu0 0
        %1212 = vmatpush1.bf16.msra.mxu0 0
        %1213 = vmatprep.subr.bf16.mxu0 0
        %1214 = vmatpush1.bf16.msra.mxu0 0
        %1215 = vmatprep.mubr.bf16.mxu0 0
        %1216 = vmatmul.mubr.bf16.gmra.mrb[0].mxu0 %v1104
        %v1217 = vpop.f32.mrb[0].mxu0
        %v1218 = vadd.f32 %v1133, %v1217
        %v1219 = vpop.f32.mrb[0].mxu0
        %v1220 = vpop.f32.mrb[0].mxu0
        %v1221 = vadd.f32 %v1133, %v1220
        %v1222 = vpop.f32.mrb[0].mxu0
        %1223 = vmatprep.mubr.bf16.mxu0 0
        %1224 = vmatmul.mubr.bf16.gmra.mrb[0].mxu0 %v1105
        %v1225 = vpop.f32.mrb[0].mxu0
        %v1226 = vadd.f32 %v1133, %v1225
        %v1227 = vpop.f32.mrb[0].mxu0
        %v1228 = vpop.f32.mrb[0].mxu0
        %v1229 = vadd.f32 %v1133, %v1228
        %v1230 = vpop.f32.mrb[0].mxu0
        %1231 = vmatprep.mubr.bf16.mxu0 0
        %1232 = vmatmul.mubr.bf16.gmra.mrb[0].mxu0 %v1106
        %v1233 = vpop.f32.mrb[0].mxu0
        %v1234 = vadd.f32 %v1133, %v1233
        %v1235 = vpop.f32.mrb[0].mxu0
        %v1236 = vpop.f32.mrb[0].mxu0
        %v1237 = vadd.f32 %v1133, %v1236
        %v1238 = vpop.f32.mrb[0].mxu0
        %1239 = vmatprep.mubr.bf16.mxu0 0
        %1240 = vmatmul.mubr.bf16.gmra.mrb[0].mxu0 %v1107
        %v1241 = vpop.f32.mrb[0].mxu0
        %v1242 = vadd.f32 %v1133, %v1241
        %v1243 = vpop.f32.mrb[0].mxu0
        %v1244 = vpop.f32.mrb[0].mxu0
        %v1245 = vadd.f32 %v1133, %v1244
        %v1246 = vpop.f32.mrb[0].mxu0
        %1247 = vmatprep.mubr.bf16.mxu0 0
        %1248 = vmatmul.mubr.bf16.gmra.mrb[0].mxu0 %v1108
        %v1249 = vpop.f32.mrb[0].mxu0
        %v1250 = vadd.f32 %v1133, %v1249
        %v1251 = vpop.f32.mrb[0].mxu0
        %v1252 = vpop.f32.mrb[0].mxu0
        %v1253 = vadd.f32 %v1133, %v1252
        %v1254 = vpop.f32.mrb[0].mxu0
        %1255 = vmatprep.mubr.bf16.mxu0 0
        %1256 = vmatmul.mubr.bf16.gmra.mrb[0].mxu0 %v1109
        %v1257 = vpop.f32.mrb[0].mxu0
        %v1258 = vadd.f32 %v1133, %v1257
        %v1259 = vpop.f32.mrb[0].mxu0
        %v1260 = vpop.f32.mrb[0].mxu0
        %v1261 = vadd.f32 %v1133, %v1260
        %v1262 = vpop.f32.mrb[0].mxu0
        %1263 = vmatprep.mubr.bf16.mxu0 0
        %1264 = vmatmul.mubr.bf16.gmra.mrb[0].mxu0 %v1110
        %v1265 = vpop.f32.mrb[0].mxu0
        %v1266 = vadd.f32 %v1133, %v1265
        %v1267 = vpop.f32.mrb[0].mxu0
        %v1268 = vpop.f32.mrb[0].mxu0
        %v1269 = vadd.f32 %v1133, %v1268
        %v1270 = vpop.f32.mrb[0].mxu0
        %1271 = vmatprep.mubr.bf16.mxu0 0
        %1272 = vmatmul.mubr.bf16.gmra.mrb[0].mxu0 %v1111
        %v1273 = vpop.f32.mrb[0].mxu0
        %v1274 = vadd.f32 %v1133, %v1273
        %v1275 = vpop.f32.mrb[0].mxu0
        %v1276 = vpop.f32.mrb[0].mxu0
        %v1277 = vadd.f32 %v1133, %v1276
        %v1278 = vpop.f32.mrb[0].mxu0
        %1279 = vdwg.mxu0
        %v1280 = vtanh.pop %v1218
        %v1281 = vtanh.pop %v1221
        %v1282 = vtanh.pop %v1226
        %v1283 = vtanh.pop %v1229
        %v1284 = vtanh.pop %v1234
        %v1285 = vtanh.pop %v1237
        %v1286 = vtanh.pop %v1242
        %v1287 = vtanh.pop %v1245
        %v1288 = vtanh.pop %v1250
        %v1289 = vtanh.pop %v1253
        %v1290 = vtanh.pop %v1258
        %v1291 = vtanh.pop %v1261
        %v1292 = vtanh.pop %v1266
        %v1293 = vtanh.pop %v1269
        %v1294 = vtanh.pop %v1274
        %v1295 = vtanh.pop %v1277
        %v1296 = vpack.c.bf16 %v1281, %v1280
        %v1297 = vpack.c.bf16 %v1283, %v1282
        %v1298 = vpack.c.bf16 %v1285, %v1284
        %v1299 = vpack.c.bf16 %v1287, %v1286
        %v1300 = vpack.c.bf16 %v1289, %v1288
        %v1301 = vpack.c.bf16 %v1291, %v1290
        %v1302 = vpack.c.bf16 %v1293, %v1292
        %v1303 = vpack.c.bf16 %v1295, %v1294
        %v1304 = vld [vmem:[#allocation10] sm:$0xff]
        %v1305 = vld [vmem:[#allocation10 + $0x8] sm:$0xff]
        %v1306 = vld [vmem:[#allocation10 + $0x10] sm:$0xff]
        %v1307 = vld [vmem:[#allocation10 + $0x18] sm:$0xff]
        %v1308 = vld [vmem:[#allocation10 + $0x20] sm:$0xff]
        %v1309 = vld [vmem:[#allocation10 + $0x28] sm:$0xff]
        %v1310 = vld [vmem:[#allocation10 + $0x30] sm:$0xff]
        %v1311 = vld [vmem:[#allocation10 + $0x38] sm:$0xff]
        %v1312 = vld [vmem:[#allocation10 + $0x40] sm:$0xff]
        %v1313 = vld [vmem:[#allocation10 + $0x48] sm:$0xff]
        %v1314 = vld [vmem:[#allocation10 + $0x50] sm:$0xff]
        %v1315 = vld [vmem:[#allocation10 + $0x58] sm:$0xff]
        %v1316 = vld [vmem:[#allocation10 + $0x60] sm:$0xff]
        %v1317 = vld [vmem:[#allocation10 + $0x68] sm:$0xff]
        %v1318 = vld [vmem:[#allocation10 + $0x70] sm:$0xff]
        %v1319 = vld [vmem:[#allocation10 + $0x78] sm:$0xff]
        %v1320 = vld [vmem:[%s9] sm:$0x3]
        %v1322 = vlaneseq
        %v1323 = vshrl.u32 %v1322, 7
        %v1324 = vsub.s32 0, %v1323
        %v1325 = vrot.slane %v1320, %v1324
        %v1326 = vlaneseq
        %v1327 = vshrl.u32 %v1326, 7
        %v1328 = vsub.s32 1, %v1327
        %v1329 = vrot.slane %v1320, %v1328
        %v1348 = vunpack.c.l.b16 %v1304
        %v1349 = vunpack.c.h.b16 %v1304
        %v1350 = vunpack.c.l.b16 %v1305
        %v1351 = vunpack.c.h.b16 %v1305
        %v1352 = vunpack.c.l.b16 %v1306
        %v1353 = vunpack.c.h.b16 %v1306
        %v1354 = vunpack.c.l.b16 %v1307
        %v1355 = vunpack.c.h.b16 %v1307
        %v1356 = vunpack.c.l.b16 %v1308
        %v1357 = vunpack.c.h.b16 %v1308
        %v1358 = vunpack.c.l.b16 %v1309
        %v1359 = vunpack.c.h.b16 %v1309
        %v1360 = vunpack.c.l.b16 %v1310
        %v1361 = vunpack.c.h.b16 %v1310
        %v1362 = vunpack.c.l.b16 %v1311
        %v1363 = vunpack.c.h.b16 %v1311
        %v1364 = vunpack.c.l.b16 %v1312
        %v1365 = vunpack.c.h.b16 %v1312
        %v1366 = vunpack.c.l.b16 %v1313
        %v1367 = vunpack.c.h.b16 %v1313
        %v1368 = vunpack.c.l.b16 %v1314
        %v1369 = vunpack.c.h.b16 %v1314
        %v1370 = vunpack.c.l.b16 %v1315
        %v1371 = vunpack.c.h.b16 %v1315
        %v1372 = vunpack.c.l.b16 %v1316
        %v1373 = vunpack.c.h.b16 %v1316
        %v1374 = vunpack.c.l.b16 %v1317
        %v1375 = vunpack.c.h.b16 %v1317
        %v1376 = vunpack.c.l.b16 %v1318
        %v1377 = vunpack.c.h.b16 %v1318
        %v1378 = vunpack.c.l.b16 %v1319
        %v1379 = vunpack.c.h.b16 %v1319
        %v1380 = vpack.c.b16 %v1350, %v1348
        %v1381 = vpack.c.b16 %v1351, %v1349
        %v1382 = vpack.c.b16 %v1354, %v1352
        %v1383 = vpack.c.b16 %v1355, %v1353
        %v1384 = vpack.c.b16 %v1358, %v1356
        %v1385 = vpack.c.b16 %v1359, %v1357
        %v1386 = vpack.c.b16 %v1362, %v1360
        %v1387 = vpack.c.b16 %v1363, %v1361
        %v1388 = vpack.c.b16 %v1366, %v1364
        %v1389 = vpack.c.b16 %v1367, %v1365
        %v1390 = vpack.c.b16 %v1370, %v1368
        %v1391 = vpack.c.b16 %v1371, %v1369
        %v1392 = vpack.c.b16 %v1374, %v1372
        %v1393 = vpack.c.b16 %v1375, %v1373
        %v1394 = vpack.c.b16 %v1378, %v1376
        %v1395 = vpack.c.b16 %v1379, %v1377
        %1412 = vmatprep.subr.bf16.mxu0 %v1381
        %1413 = vmatpush1.bf16.msra.mxu0 %v1380
        %1414 = vmatprep.subr.bf16.mxu0 %v1383
        %1415 = vmatpush1.bf16.msra.mxu0 %v1382
        %1416 = vmatprep.subr.bf16.mxu0 %v1385
        %1417 = vmatpush1.bf16.msra.mxu0 %v1384
        %1418 = vmatprep.subr.bf16.mxu0 %v1387
        %1419 = vmatpush1.bf16.msra.mxu0 %v1386
        %1420 = vmatprep.subr.bf16.mxu0 %v1389
        %1421 = vmatpush1.bf16.msra.mxu0 %v1388
        %1422 = vmatprep.subr.bf16.mxu0 %v1391
        %1423 = vmatpush1.bf16.msra.mxu0 %v1390
        %1424 = vmatprep.subr.bf16.mxu0 %v1393
        %1425 = vmatpush1.bf16.msra.mxu0 %v1392
        %1426 = vmatprep.subr.bf16.mxu0 %v1395
        %1427 = vmatpush1.bf16.msra.mxu0 %v1394
        %1428 = vmatprep.subr.bf16.mxu0 0
        %1429 = vmatpush1.bf16.msra.mxu0 0
        %1430 = vmatprep.subr.bf16.mxu0 0
        %1431 = vmatpush1.bf16.msra.mxu0 0
        %1432 = vmatprep.subr.bf16.mxu0 0
        %1433 = vmatpush1.bf16.msra.mxu0 0
        %1434 = vmatprep.subr.bf16.mxu0 0
        %1435 = vmatpush1.bf16.msra.mxu0 0
        %1436 = vmatprep.subr.bf16.mxu0 0
        %1437 = vmatpush1.bf16.msra.mxu0 0
        %1438 = vmatprep.subr.bf16.mxu0 0
        %1439 = vmatpush1.bf16.msra.mxu0 0
        %1440 = vmatprep.subr.bf16.mxu0 0
        %1441 = vmatpush1.bf16.msra.mxu0 0
        %1442 = vmatprep.subr.bf16.mxu0 0
        %1443 = vmatpush1.bf16.msra.mxu0 0
        %1444 = vmatprep.mubr.bf16.mxu0 0
        %1445 = vmatmul.mubr.bf16.gmra.mrb[0].mxu0 %v1296
        %v1446 = vpop.f32.mrb[0].mxu0
        %v1447 = vadd.f32 %v1325, %v1446
        %v1448 = vpop.f32.mrb[0].mxu0
        %v1449 = vadd.f32 %v1329, %v1448
        %v1450 = vpop.f32.mrb[0].mxu0
        %v1451 = vadd.f32 %v1325, %v1450
        %v1452 = vpop.f32.mrb[0].mxu0
        %v1453 = vadd.f32 %v1329, %v1452
        %1454 = vmatprep.mubr.bf16.mxu0 0
        %1455 = vmatmul.mubr.bf16.gmra.mrb[0].mxu0 %v1297
        %v1456 = vpop.f32.mrb[0].mxu0
        %v1457 = vadd.f32 %v1325, %v1456
        %v1458 = vpop.f32.mrb[0].mxu0
        %v1459 = vadd.f32 %v1329, %v1458
        %v1460 = vpop.f32.mrb[0].mxu0
        %v1461 = vadd.f32 %v1325, %v1460
        %v1462 = vpop.f32.mrb[0].mxu0
        %v1463 = vadd.f32 %v1329, %v1462
        %1464 = vmatprep.mubr.bf16.mxu0 0
        %1465 = vmatmul.mubr.bf16.gmra.mrb[0].mxu0 %v1298
        %v1466 = vpop.f32.mrb[0].mxu0
        %v1467 = vadd.f32 %v1325, %v1466
        %v1468 = vpop.f32.mrb[0].mxu0
        %v1469 = vadd.f32 %v1329, %v1468
        %v1470 = vpop.f32.mrb[0].mxu0
        %v1471 = vadd.f32 %v1325, %v1470
        %v1472 = vpop.f32.mrb[0].mxu0
        %v1473 = vadd.f32 %v1329, %v1472
        %1474 = vmatprep.mubr.bf16.mxu0 0
        %1475 = vmatmul.mubr.bf16.gmra.mrb[0].mxu0 %v1299
        %v1476 = vpop.f32.mrb[0].mxu0
        %v1477 = vadd.f32 %v1325, %v1476
        %v1478 = vpop.f32.mrb[0].mxu0
        %v1479 = vadd.f32 %v1329, %v1478
        %v1480 = vpop.f32.mrb[0].mxu0
        %v1481 = vadd.f32 %v1325, %v1480
        %v1482 = vpop.f32.mrb[0].mxu0
        %v1483 = vadd.f32 %v1329, %v1482
        %1484 = vmatprep.mubr.bf16.mxu0 0
        %1485 = vmatmul.mubr.bf16.gmra.mrb[0].mxu0 %v1300
        %v1486 = vpop.f32.mrb[0].mxu0
        %v1487 = vadd.f32 %v1325, %v1486
        %v1488 = vpop.f32.mrb[0].mxu0
        %v1489 = vadd.f32 %v1329, %v1488
        %v1490 = vpop.f32.mrb[0].mxu0
        %v1491 = vadd.f32 %v1325, %v1490
        %v1492 = vpop.f32.mrb[0].mxu0
        %v1493 = vadd.f32 %v1329, %v1492
        %1494 = vmatprep.mubr.bf16.mxu0 0
        %1495 = vmatmul.mubr.bf16.gmra.mrb[0].mxu0 %v1301
        %v1496 = vpop.f32.mrb[0].mxu0
        %v1497 = vadd.f32 %v1325, %v1496
        %v1498 = vpop.f32.mrb[0].mxu0
        %v1499 = vadd.f32 %v1329, %v1498
        %v1500 = vpop.f32.mrb[0].mxu0
        %v1501 = vadd.f32 %v1325, %v1500
        %v1502 = vpop.f32.mrb[0].mxu0
        %v1503 = vadd.f32 %v1329, %v1502
        %1504 = vmatprep.mubr.bf16.mxu0 0
        %1505 = vmatmul.mubr.bf16.gmra.mrb[0].mxu0 %v1302
        %v1506 = vpop.f32.mrb[0].mxu0
        %v1507 = vadd.f32 %v1325, %v1506
        %v1508 = vpop.f32.mrb[0].mxu0
        %v1509 = vadd.f32 %v1329, %v1508
        %v1510 = vpop.f32.mrb[0].mxu0
        %v1511 = vadd.f32 %v1325, %v1510
        %v1512 = vpop.f32.mrb[0].mxu0
        %v1513 = vadd.f32 %v1329, %v1512
        %1514 = vmatprep.mubr.bf16.mxu0 0
        %1515 = vmatmul.mubr.bf16.gmra.mrb[0].mxu0 %v1303
        %v1516 = vpop.f32.mrb[0].mxu0
        %v1517 = vadd.f32 %v1325, %v1516
        %v1518 = vpop.f32.mrb[0].mxu0
        %v1519 = vadd.f32 %v1329, %v1518
        %v1520 = vpop.f32.mrb[0].mxu0
        %v1521 = vadd.f32 %v1325, %v1520
        %v1522 = vpop.f32.mrb[0].mxu0
        %v1523 = vadd.f32 %v1329, %v1522
        %1524 = vdwg.mxu0
        %v1525 = vxor.u32 %v1447, 2147483648
        %v1526 = vxor.u32 %v1451, 2147483648
        %v1527 = vxor.u32 %v1457, 2147483648
        %v1528 = vxor.u32 %v1461, 2147483648
        %v1529 = vxor.u32 %v1467, 2147483648
        %v1530 = vxor.u32 %v1471, 2147483648
        %v1531 = vxor.u32 %v1477, 2147483648
        %v1532 = vxor.u32 %v1481, 2147483648
        %v1533 = vxor.u32 %v1487, 2147483648
        %v1534 = vxor.u32 %v1491, 2147483648
        %v1535 = vxor.u32 %v1497, 2147483648
        %v1536 = vxor.u32 %v1501, 2147483648
        %v1537 = vxor.u32 %v1507, 2147483648
        %v1538 = vxor.u32 %v1511, 2147483648
        %v1539 = vxor.u32 %v1517, 2147483648
        %v1540 = vxor.u32 %v1521, 2147483648
        %v1541 = vmul.f32 %v1525, 1.442695
        %v1542 = vpow.pop %v1541
        %v1543 = vmul.f32 %v1526, 1.442695
        %v1544 = vpow.pop %v1543
        %v1545 = vmul.f32 %v1527, 1.442695
        %v1546 = vpow.pop %v1545
        %v1547 = vmul.f32 %v1528, 1.442695
        %v1548 = vpow.pop %v1547
        %v1549 = vmul.f32 %v1529, 1.442695
        %v1550 = vpow.pop %v1549
        %v1551 = vmul.f32 %v1530, 1.442695
        %v1552 = vpow.pop %v1551
        %v1553 = vmul.f32 %v1531, 1.442695
        %v1554 = vpow.pop %v1553
        %v1555 = vmul.f32 %v1532, 1.442695
        %v1556 = vpow.pop %v1555
        %v1557 = vmul.f32 %v1533, 1.442695
        %v1558 = vpow.pop %v1557
        %v1559 = vmul.f32 %v1534, 1.442695
        %v1560 = vpow.pop %v1559
        %v1561 = vmul.f32 %v1535, 1.442695
        %v1562 = vpow.pop %v1561
        %v1563 = vmul.f32 %v1536, 1.442695
        %v1564 = vpow.pop %v1563
        %v1565 = vmul.f32 %v1537, 1.442695
        %v1566 = vpow.pop %v1565
        %v1567 = vmul.f32 %v1538, 1.442695
        %v1568 = vpow.pop %v1567
        %v1569 = vmul.f32 %v1539, 1.442695
        %v1570 = vpow.pop %v1569
        %v1571 = vmul.f32 %v1540, 1.442695
        %v1572 = vpow.pop %v1571
        %v1573 = vadd.f32 %v1542, 1.0
        %v1574 = vadd.f32 %v1544, 1.0
        %v1575 = vadd.f32 %v1546, 1.0
        %v1576 = vadd.f32 %v1548, 1.0
        %v1577 = vadd.f32 %v1550, 1.0
        %v1578 = vadd.f32 %v1552, 1.0
        %v1579 = vadd.f32 %v1554, 1.0
        %v1580 = vadd.f32 %v1556, 1.0
        %v1581 = vadd.f32 %v1558, 1.0
        %v1582 = vadd.f32 %v1560, 1.0
        %v1583 = vadd.f32 %v1562, 1.0
        %v1584 = vadd.f32 %v1564, 1.0
        %v1585 = vadd.f32 %v1566, 1.0
        %v1586 = vadd.f32 %v1568, 1.0
        %v1587 = vadd.f32 %v1570, 1.0
        %v1588 = vadd.f32 %v1572, 1.0
        %v1589 = vrcp.pop %v1573
        %v1590 = vmul.f32 1.0, %v1589
        %v1591 = vrcp.pop %v1574
        %v1592 = vmul.f32 1.0, %v1591
        %v1593 = vrcp.pop %v1575
        %v1594 = vmul.f32 1.0, %v1593
        %v1595 = vrcp.pop %v1576
        %v1596 = vmul.f32 1.0, %v1595
        %v1597 = vrcp.pop %v1577
        %v1598 = vmul.f32 1.0, %v1597
        %v1599 = vrcp.pop %v1578
        %v1600 = vmul.f32 1.0, %v1599
        %v1601 = vrcp.pop %v1579
        %v1602 = vmul.f32 1.0, %v1601
        %v1603 = vrcp.pop %v1580
        %v1604 = vmul.f32 1.0, %v1603
        %v1605 = vrcp.pop %v1581
        %v1606 = vmul.f32 1.0, %v1605
        %v1607 = vrcp.pop %v1582
        %v1608 = vmul.f32 1.0, %v1607
        %v1609 = vrcp.pop %v1583
        %v1610 = vmul.f32 1.0, %v1609
        %v1611 = vrcp.pop %v1584
        %v1612 = vmul.f32 1.0, %v1611
        %v1613 = vrcp.pop %v1585
        %v1614 = vmul.f32 1.0, %v1613
        %v1615 = vrcp.pop %v1586
        %v1616 = vmul.f32 1.0, %v1615
        %v1617 = vrcp.pop %v1587
        %v1618 = vmul.f32 1.0, %v1617
        %v1619 = vrcp.pop %v1588
        %v1620 = vmul.f32 1.0, %v1619
        %v1621 = vmul.f32 %v1449, 0.5
        %v1622 = vmul.f32 %v1453, 0.5
        %v1623 = vmul.f32 %v1459, 0.5
        %v1624 = vmul.f32 %v1463, 0.5
        %v1625 = vmul.f32 %v1469, 0.5
        %v1626 = vmul.f32 %v1473, 0.5
        %v1627 = vmul.f32 %v1479, 0.5
        %v1628 = vmul.f32 %v1483, 0.5
        %v1629 = vmul.f32 %v1489, 0.5
        %v1630 = vmul.f32 %v1493, 0.5
        %v1631 = vmul.f32 %v1499, 0.5
        %v1632 = vmul.f32 %v1503, 0.5
        %v1633 = vmul.f32 %v1509, 0.5
        %v1634 = vmul.f32 %v1513, 0.5
        %v1635 = vmul.f32 %v1519, 0.5
        %v1636 = vmul.f32 %v1523, 0.5
        %v1637 = vmul.f32 %v1621, 1.442695
        %v1638 = vpow.pop %v1637
        %v1639 = vmul.f32 %v1622, 1.442695
        %v1640 = vpow.pop %v1639
        %v1641 = vmul.f32 %v1623, 1.442695
        %v1642 = vpow.pop %v1641
        %v1643 = vmul.f32 %v1624, 1.442695
        %v1644 = vpow.pop %v1643
        %v1645 = vmul.f32 %v1625, 1.442695
        %v1646 = vpow.pop %v1645
        %v1647 = vmul.f32 %v1626, 1.442695
        %v1648 = vpow.pop %v1647
        %v1649 = vmul.f32 %v1627, 1.442695
        %v1650 = vpow.pop %v1649
        %v1651 = vmul.f32 %v1628, 1.442695
        %v1652 = vpow.pop %v1651
        %v1653 = vmul.f32 %v1629, 1.442695
        %v1654 = vpow.pop %v1653
        %v1655 = vmul.f32 %v1630, 1.442695
        %v1656 = vpow.pop %v1655
        %v1657 = vmul.f32 %v1631, 1.442695
        %v1658 = vpow.pop %v1657
        %v1659 = vmul.f32 %v1632, 1.442695
        %v1660 = vpow.pop %v1659
        %v1661 = vmul.f32 %v1633, 1.442695
        %v1662 = vpow.pop %v1661
        %v1663 = vmul.f32 %v1634, 1.442695
        %v1664 = vpow.pop %v1663
        %v1665 = vmul.f32 %v1635, 1.442695
        %v1666 = vpow.pop %v1665
        %v1667 = vmul.f32 %v1636, 1.442695
        %v1668 = vpow.pop %v1667
        %v1669 = vld [vmem:[%s10] sm:$0x1]
        %v1671 = vlaneseq
        %v1672 = vshrl.u32 %v1671, 7
        %v1673 = vsub.s32 0, %v1672
        %v1674 = vrot.slane %v1669, %v1673
        %v1676 = vmul.f32 %v1638, %v1674
        %v1677 = vmul.f32 %v1640, %v1674
        %v1678 = vmul.f32 %v1642, %v1674
        %v1679 = vmul.f32 %v1644, %v1674
        %v1680 = vmul.f32 %v1646, %v1674
        %v1681 = vmul.f32 %v1648, %v1674
        %v1682 = vmul.f32 %v1650, %v1674
        %v1683 = vmul.f32 %v1652, %v1674
        %v1684 = vmul.f32 %v1654, %v1674
        %v1685 = vmul.f32 %v1656, %v1674
        %v1686 = vmul.f32 %v1658, %v1674
        %v1687 = vmul.f32 %v1660, %v1674
        %v1688 = vmul.f32 %v1662, %v1674
        %v1689 = vmul.f32 %v1664, %v1674
        %v1690 = vmul.f32 %v1666, %v1674
        %v1691 = vmul.f32 %v1668, %v1674
        %v1692 = vadd.f32 %v1590, %v1676
        %v1693 = vadd.f32 %v1592, %v1677
        %v1694 = vadd.f32 %v1594, %v1678
        %v1695 = vadd.f32 %v1596, %v1679
        %v1696 = vadd.f32 %v1598, %v1680
        %v1697 = vadd.f32 %v1600, %v1681
        %v1698 = vadd.f32 %v1602, %v1682
        %v1699 = vadd.f32 %v1604, %v1683
        %v1700 = vadd.f32 %v1606, %v1684
        %v1701 = vadd.f32 %v1608, %v1685
        %v1702 = vadd.f32 %v1610, %v1686
        %v1703 = vadd.f32 %v1612, %v1687
        %v1704 = vadd.f32 %v1614, %v1688
        %v1705 = vadd.f32 %v1616, %v1689
        %v1706 = vadd.f32 %v1618, %v1690
        %v1707 = vadd.f32 %v1620, %v1691
        %1708 = vst [vmem:[%s520] sm:$0xff] %v1692
        %1709 = vst [vmem:[%s520 + $0x8] sm:$0xff] %v1693
        %1710 = vst [vmem:[%s520 + $0x10] sm:$0xff] %v1694
        %1711 = vst [vmem:[%s520 + $0x18] sm:$0xff] %v1695
        %1712 = vst [vmem:[%s520 + $0x20] sm:$0xff] %v1696
        %1713 = vst [vmem:[%s520 + $0x28] sm:$0xff] %v1697
        %1714 = vst [vmem:[%s520 + $0x30] sm:$0xff] %v1698
        %1715 = vst [vmem:[%s520 + $0x38] sm:$0xff] %v1699
        %1716 = vst [vmem:[%s520 + $0x40] sm:$0xff] %v1700
        %1717 = vst [vmem:[%s520 + $0x48] sm:$0xff] %v1701
        %1718 = vst [vmem:[%s520 + $0x50] sm:$0xff] %v1702
        %1719 = vst [vmem:[%s520 + $0x58] sm:$0xff] %v1703
        %1720 = vst [vmem:[%s520 + $0x60] sm:$0xff] %v1704
        %1721 = vst [vmem:[%s520 + $0x68] sm:$0xff] %v1705
        %1722 = vst [vmem:[%s520 + $0x70] sm:$0xff] %v1706
        %1723 = vst [vmem:[%s520 + $0x78] sm:$0xff] %v1707
        %1724 = vst [vmem:[%s527] sm:$0xff] %v939
        %1725 = vst [vmem:[%s527 + $0x10] sm:$0xff] %v943
        %1726 = vst [vmem:[%s527 + $0x20] sm:$0xff] %v949
        %1727 = vst [vmem:[%s527 + $0x30] sm:$0xff] %v953
        %1728 = vst [vmem:[%s527 + $0x40] sm:$0xff] %v959
        %1729 = vst [vmem:[%s527 + $0x50] sm:$0xff] %v963
        %1730 = vst [vmem:[%s527 + $0x60] sm:$0xff] %v969
        %1731 = vst [vmem:[%s527 + $0x70] sm:$0xff] %v973
        %1732 = vst [vmem:[%s527 + $0x80] sm:$0xff] %v979
        %1733 = vst [vmem:[%s527 + $0x90] sm:$0xff] %v983
        %1734 = vst [vmem:[%s527 + $0xa0] sm:$0xff] %v989
        %1735 = vst [vmem:[%s527 + $0xb0] sm:$0xff] %v993
        %1736 = vst [vmem:[%s527 + $0xc0] sm:$0xff] %v999
        %1737 = vst [vmem:[%s527 + $0xd0] sm:$0xff] %v1003
        %1738 = vst [vmem:[%s527 + $0xe0] sm:$0xff] %v1009
        %1739 = vst [vmem:[%s527 + $0xf0] sm:$0xff] %v1013
        %v1740 = vmul.f32 %v1034, %v1034
        %v1741 = vmul.f32 %v1036, %v1036
        %v1742 = vmul.f32 %v1038, %v1038
        %v1743 = vmul.f32 %v1040, %v1040
        %v1744 = vmul.f32 %v1042, %v1042
        %v1745 = vmul.f32 %v1044, %v1044
        %v1746 = vmul.f32 %v1046, %v1046
        %v1747 = vmul.f32 %v1048, %v1048
        %v1748 = vmul.f32 %v1050, %v1050
        %v1749 = vmul.f32 %v1052, %v1052
        %v1750 = vmul.f32 %v1054, %v1054
        %v1751 = vmul.f32 %v1056, %v1056
        %v1752 = vmul.f32 %v1058, %v1058
        %v1753 = vmul.f32 %v1060, %v1060
        %v1754 = vmul.f32 %v1062, %v1062
        %v1755 = vmul.f32 %v1064, %v1064
        %1756 = vst [vmem:[%s527 + $0x8] sm:$0xff] %v1740
        %1757 = vst [vmem:[%s527 + $0x18] sm:$0xff] %v1741
        %1758 = vst [vmem:[%s527 + $0x28] sm:$0xff] %v1742
        %1759 = vst [vmem:[%s527 + $0x38] sm:$0xff] %v1743
        %1760 = vst [vmem:[%s527 + $0x48] sm:$0xff] %v1744
        %1761 = vst [vmem:[%s527 + $0x58] sm:$0xff] %v1745
        %1762 = vst [vmem:[%s527 + $0x68] sm:$0xff] %v1746
        %1763 = vst [vmem:[%s527 + $0x78] sm:$0xff] %v1747
        %1764 = vst [vmem:[%s527 + $0x88] sm:$0xff] %v1748
        %1765 = vst [vmem:[%s527 + $0x98] sm:$0xff] %v1749
        %1766 = vst [vmem:[%s527 + $0xa8] sm:$0xff] %v1750
        %1767 = vst [vmem:[%s527 + $0xb8] sm:$0xff] %v1751
        %1768 = vst [vmem:[%s527 + $0xc8] sm:$0xff] %v1752
        %1769 = vst [vmem:[%s527 + $0xd8] sm:$0xff] %v1753
        %1770 = vst [vmem:[%s527 + $0xe8] sm:$0xff] %v1754
        %1771 = vst [vmem:[%s527 + $0xf8] sm:$0xff] %v1755
        %1772 = vst [vmem:[%s534] sm:$0xff] %v1590
        %1773 = vst [vmem:[%s534 + $0x10] sm:$0xff] %v1592
        %1774 = vst [vmem:[%s534 + $0x20] sm:$0xff] %v1594
        %1775 = vst [vmem:[%s534 + $0x30] sm:$0xff] %v1596
        %1776 = vst [vmem:[%s534 + $0x40] sm:$0xff] %v1598
        %1777 = vst [vmem:[%s534 + $0x50] sm:$0xff] %v1600
        %1778 = vst [vmem:[%s534 + $0x60] sm:$0xff] %v1602
        %1779 = vst [vmem:[%s534 + $0x70] sm:$0xff] %v1604
        %1780 = vst [vmem:[%s534 + $0x80] sm:$0xff] %v1606
        %1781 = vst [vmem:[%s534 + $0x90] sm:$0xff] %v1608
        %1782 = vst [vmem:[%s534 + $0xa0] sm:$0xff] %v1610
        %1783 = vst [vmem:[%s534 + $0xb0] sm:$0xff] %v1612
        %1784 = vst [vmem:[%s534 + $0xc0] sm:$0xff] %v1614
        %1785 = vst [vmem:[%s534 + $0xd0] sm:$0xff] %v1616
        %1786 = vst [vmem:[%s534 + $0xe0] sm:$0xff] %v1618
        %1787 = vst [vmem:[%s534 + $0xf0] sm:$0xff] %v1620
        %v1788 = vmul.f32 %v1638, %v1638
        %v1789 = vmul.f32 %v1640, %v1640
        %v1790 = vmul.f32 %v1642, %v1642
        %v1791 = vmul.f32 %v1644, %v1644
        %v1792 = vmul.f32 %v1646, %v1646
        %v1793 = vmul.f32 %v1648, %v1648
        %v1794 = vmul.f32 %v1650, %v1650
        %v1795 = vmul.f32 %v1652, %v1652
        %v1796 = vmul.f32 %v1654, %v1654
        %v1797 = vmul.f32 %v1656, %v1656
        %v1798 = vmul.f32 %v1658, %v1658
        %v1799 = vmul.f32 %v1660, %v1660
        %v1800 = vmul.f32 %v1662, %v1662
        %v1801 = vmul.f32 %v1664, %v1664
        %v1802 = vmul.f32 %v1666, %v1666
        %v1803 = vmul.f32 %v1668, %v1668
        %1804 = vst [vmem:[%s534 + $0x8] sm:$0xff] %v1788
        %1805 = vst [vmem:[%s534 + $0x18] sm:$0xff] %v1789
        %1806 = vst [vmem:[%s534 + $0x28] sm:$0xff] %v1790
        %1807 = vst [vmem:[%s534 + $0x38] sm:$0xff] %v1791
        %1808 = vst [vmem:[%s534 + $0x48] sm:$0xff] %v1792
        %1809 = vst [vmem:[%s534 + $0x58] sm:$0xff] %v1793
        %1810 = vst [vmem:[%s534 + $0x68] sm:$0xff] %v1794
        %1811 = vst [vmem:[%s534 + $0x78] sm:$0xff] %v1795
        %1812 = vst [vmem:[%s534 + $0x88] sm:$0xff] %v1796
        %1813 = vst [vmem:[%s534 + $0x98] sm:$0xff] %v1797
        %1814 = vst [vmem:[%s534 + $0xa8] sm:$0xff] %v1798
        %1815 = vst [vmem:[%s534 + $0xb8] sm:$0xff] %v1799
        %1816 = vst [vmem:[%s534 + $0xc8] sm:$0xff] %v1800
        %1817 = vst [vmem:[%s534 + $0xd8] sm:$0xff] %v1801
        %1818 = vst [vmem:[%s534 + $0xe8] sm:$0xff] %v1802
        %1819 = vst [vmem:[%s534 + $0xf8] sm:$0xff] %v1803
        %s1820 = sand.u32 %s280, 1
        %s1821 = scalar_lea.sflag [#allocation4], %s1820
        %s1822 = sand.u32 %s280, 1
        %s1823 = smul.addr %s1822, 128
        %s1824 = scalar_lea.vmem [#allocation11], %s1823
        %s1825 = sand.u32 %s36, 1
        %s1826 = scalar_lea.sflag [#allocation13], %s1825
        %s1827 = sand.u32 %s306, 1
        %s1828 = smul.addr %s1827, 256
        %s1829 = scalar_lea.vmem [#allocation12], %s1828
        %s1830 = sand.u32 %s36, 1
        %s1831 = scalar_lea.sflag [#allocation13], %s1830
        %s1832 = sand.u32 %s332, 1
        %s1833 = smul.addr %s1832, 256
        %s1834 = scalar_lea.vmem [#allocation14], %s1833
        // Predicated region
        $region85: #{tpu_custom_call.1} parent=63 // pred_check
          %p1835 = pneg %p290
        $region86: #{tpu_custom_call.1} parent=63 // pred_check_branch
          %1837 = sbr.rel (%p1835) target = $region88
        $region87: #{tpu_custom_call.1} parent=63 // pred_region
          %s1838 = smul.u32 16, %s36
          %s1840 = ssub.s32 2048, 2048
          %1841 = vsyncadd %s1821, %s1840
          %s1842 = smul.addr %s1838, 128
          %s1843 = scalar_lea.hbm %s11, %s1842
          %s1844 = sshll.u32 %s1824, 4
          %s1845 = int_to_ptr.vmem [resolvable:$true] %s1844
          %1850 = dma.vmem_to_hbm [thread:$0]  %s1845, 2048, %s1843, %s1821, 128, 128, 8
        $region88: #{tpu_custom_call.1} parent=63 // pred_fallthru
          _
        // Predicated region
        $region89: #{tpu_custom_call.1} parent=63 // pred_check
          %p1851 = pneg %p316
        $region90: #{tpu_custom_call.1} parent=63 // pred_check_branch
          %1853 = sbr.rel (%p1851) target = $region92
        $region91: #{tpu_custom_call.1} parent=63 // pred_region
          %s1854 = smul.u32 16, %s36
          %s1856 = ssub.s32 4096, 4096
          %1857 = vsyncadd %s1826, %s1856
          %s1858 = smul.addr %s1854, 2
          %s1859 = smul.addr %s1858, 128
          %s1860 = scalar_lea.hbm %s12, %s1859
          %s1861 = sshll.u32 %s1829, 4
          %s1862 = int_to_ptr.vmem [resolvable:$true] %s1861
          %1867 = dma.vmem_to_hbm [thread:$0]  %s1862, 4096, %s1860, %s1826, 256, 256, 16
        $region92: #{tpu_custom_call.1} parent=63 // pred_fallthru
          _
        // Predicated region
        $region93: #{tpu_custom_call.1} parent=63 // pred_check
          %p1868 = pneg %p342
        $region94: #{tpu_custom_call.1} parent=63 // pred_check_branch
          %1870 = sbr.rel (%p1868) target = $region96
        $region95: #{tpu_custom_call.1} parent=63 // pred_region
          %s1871 = smul.u32 16, %s36
          %s1873 = ssub.s32 4096, 4096
          %1874 = vsyncadd %s1831, %s1873
          %s1875 = smul.addr %s1871, 2
          %s1876 = smul.addr %s1875, 128
          %s1877 = scalar_lea.hbm %s13, %s1876
          %s1878 = sshll.u32 %s1834, 4
          %s1879 = int_to_ptr.vmem [resolvable:$true] %s1878
          %1884 = dma.vmem_to_hbm [thread:$0]  %s1879, 4096, %s1877, %s1831, 256, 256, 16
        $region96: #{tpu_custom_call.1} parent=63 // pred_fallthru
          _
      $region64: #{tpu_custom_call.1} parent=5 // pred_fallthru
        _
      %p1885 = scmp.le.s32.totalorder 2, %s31
      // Predicated region
      $region97: #{tpu_custom_call.1} parent=5 // pred_check
        %p1886 = pneg %p1885
      $region98: #{tpu_custom_call.1} parent=5 // pred_check_branch
        %1888 = sbr.rel (%p1886) target = $region100
      $region99: #{tpu_custom_call.1} parent=5 // pred_region
        %s1889 = ssub.s32 %s31, 2
        // Predicated region
        $region101: #{tpu_custom_call.1} parent=99 // pred_check
          %p1890 = pneg %p296
        $region102: #{tpu_custom_call.1} parent=99 // pred_check_branch
          %1892 = sbr.rel (%p1890) target = $region104
        $region103: #{tpu_custom_call.1} parent=99 // pred_region
          %s1893 = sand.u32 %s281, 1
          %s1894 = scalar_lea.sflag [#allocation4], %s1893
          %s1895 = sand.u32 %s281, 1
          %s1896 = smul.addr %s1895, 128
          %s1897 = scalar_lea.vmem [#allocation11], %s1896
          %1898 = dma.done %s1894, 2048
        $region104: #{tpu_custom_call.1} parent=99 // pred_fallthru
          _
        // Predicated region
        $region105: #{tpu_custom_call.1} parent=99 // pred_check
          %p1899 = pneg %p322
        $region106: #{tpu_custom_call.1} parent=99 // pred_check_branch
          %1901 = sbr.rel (%p1899) target = $region108
        $region107: #{tpu_custom_call.1} parent=99 // pred_region
          %s1902 = sand.u32 %s37, 1
          %s1903 = scalar_lea.sflag [#allocation13], %s1902
          %s1904 = sand.u32 %s307, 1
          %s1905 = smul.addr %s1904, 256
          %s1906 = scalar_lea.vmem [#allocation12], %s1905
          %1907 = dma.done %s1903, 4096
        $region108: #{tpu_custom_call.1} parent=99 // pred_fallthru
          _
        // Predicated region
        $region109: #{tpu_custom_call.1} parent=99 // pred_check
          %p1908 = pneg %p348
        $region110: #{tpu_custom_call.1} parent=99 // pred_check_branch
          %1910 = sbr.rel (%p1908) target = $region112
        $region111: #{tpu_custom_call.1} parent=99 // pred_region
          %s1911 = sand.u32 %s37, 1
          %s1912 = scalar_lea.sflag [#allocation13], %s1911
          %s1913 = sand.u32 %s333, 1
          %s1914 = smul.addr %s1913, 256
          %s1915 = scalar_lea.vmem [#allocation14], %s1914
          %1916 = dma.done %s1912, 4096
        $region112: #{tpu_custom_call.1} parent=99 // pred_fallthru
          _
      $region100: #{tpu_custom_call.1} parent=5 // pred_fallthru
        _
    $region6: #{tpu_custom_call.1} parent=1 // loop_footer
      %s35 = sadd.s32 1, %s31
    $region7: #{tpu_custom_call.1} parent=1 // loop_footer_branch
      %30 = sbr.rel target = $region3
    $region8: #{tpu_custom_call.1} parent=1 // loop_exit
      _
    %1917 = vsyncpa [#allocation3], 1
    %s1918 = scalar_lea.sflag [#allocation3], 1
    %1919 = vsyncpa %s1918, 1
    %1920 = vsyncpa [#allocation6], 1
    %1921 = vsyncpa [#allocation9], 1
    %1922 = vsyncpa [#allocation4], 1
    %s1923 = scalar_lea.sflag [#allocation4], 1
    %1924 = vsyncpa %s1923, 1
    %1925 = vsyncpa [#allocation13], 1
    %s1926 = scalar_lea.sflag [#allocation13], 1
    %1927 = vsyncpa %s1926, 1

</llo_original>
